<compile_context>
chip_gen: v5e
topology: v5e:2x2
jax: 0.10.0
libtpu: 0.0.40
codegen_flags: <defaults>
</compile_context>

<pallas_src>
import jax
import jax.numpy as jnp
from jax.experimental import pallas as pl
from jax.experimental.pallas import tpu as pltpu

# ---- hyper-parameters matching NetTGCN.__init__ (small synthetic graph) ----
B = 2                               # batch size
N0 = 64                             # vertices of L[0]
T = 15                              # time samples; onesided=False DFT keeps all T bins
F1, G1, K1, H1 = 1, 32, 10, 15      # tgcn1: fin, fout, Chebyshev order, harmonics (H1 == T)
G2, K2 = 64, 10                     # gcn2: fout, Chebyshev order
N2 = N0 // 4                        # vertices of L[2] (after first gcn_pool_4)
C_FC = 200                          # fc1 width / BatchNorm1d(200)
D_OUT = 6                           # classes
D_IN = (N2 // 4) * G2               # fc1 input size == int(n2 * g2 / 4)
BN_EPS = 1e-5


# ------------------------------ kernel helpers -------------------------------
def _cheb_accumulate(L, x0, w_ref, K):
    """sum_k T_k(L) @ x0 @ W[k]  (Chebyshev recursion, per-k MXU accumulation)."""
    f32 = jnp.float32
    t_prev = x0
    acc = jnp.dot(t_prev, w_ref[0], preferred_element_type=f32)
    t_cur = jnp.dot(L, t_prev, preferred_element_type=f32)
    acc = acc + jnp.dot(t_cur, w_ref[1], preferred_element_type=f32)
    for k in range(2, K):
        t_next = 2.0 * jnp.dot(L, t_cur, preferred_element_type=f32) - t_prev
        acc = acc + jnp.dot(t_next, w_ref[k], preferred_element_type=f32)
        t_prev, t_cur = t_cur, t_next
    return acc


def _pool4(scratch_ref, n, y):
    """gcn_pool_4 (max over consecutive groups of 4 vertices), vectorized:
    one full-tile VMEM store + 4 strided sublane loads + a 3-op max tree."""
    scratch_ref[...] = y
    q = n // 4
    a = scratch_ref[pl.ds(0, q, stride=4), :]
    b = scratch_ref[pl.ds(1, q, stride=4), :]
    c = scratch_ref[pl.ds(2, q, stride=4), :]
    d = scratch_ref[pl.ds(3, q, stride=4), :]
    return jnp.maximum(jnp.maximum(a, b), jnp.maximum(c, d))


# ------------------------------ fused kernel ---------------------------------
def nettgcn_kernel(x_ref, L0_ref, w1_ref, b1_ref, L2_ref, w2_ref, b2_ref,
                   wfc1_ref, bfc1_ref, bns_ref, bnb_ref, wfc2_ref, bfc2_ref,
                   o_ref, y1s_ref, y2s_ref):
    f32 = jnp.float32

    # ---- tgcn1 (DFT already folded into w1) + ReLU + pool4 ------------------
    x = x_ref[0]                                               # [N0, T]
    y1 = _cheb_accumulate(L0_ref[...], x, w1_ref, K1) + b1_ref[...]
    y1 = jnp.maximum(y1, 0.0)                                  # drop1: identity (eval)
    p1 = _pool4(y1s_ref, N0, y1)                               # [N0//4, G1]

    # ---- gcn2 + ReLU + pool4 -------------------------------------------------
    y2 = _cheb_accumulate(L2_ref[...], p1, w2_ref, K2) + b2_ref[...]
    y2 = jnp.maximum(y2, 0.0)
    p2 = _pool4(y2s_ref, N2, y2)                               # [N2//4, G2]

    # ---- head: fc1 + BatchNorm(eval, pre-folded) + ReLU + fc2 + log_softmax --
    h = bfc1_ref[...]                                          # [1, C_FC]
    for v in range(N2 // 4):                                   # flatten folded into fc1
        h = h + jnp.dot(p2[v:v + 1, :], wfc1_ref[v], preferred_element_type=f32)
    h = h * bns_ref[...] + bnb_ref[...]                        # BN eval: scale/shift
    h = jnp.maximum(h, 0.0)                                    # drop2: identity (eval)
    z = jnp.dot(h, wfc2_ref[...], preferred_element_type=f32) + bfc2_ref[...]
    z = z - jnp.max(z, axis=1, keepdims=True)
    o_ref[0] = z - jnp.log(jnp.sum(jnp.exp(z), axis=1, keepdims=True))


# ------------------------------ pallas_call glue ------------------------------
def _const_spec(shape):
    zeros = (0,) * len(shape)
    return pl.BlockSpec(shape, lambda b: zeros)


@jax.jit
def net_tgcn_forward(x, dft, L0, w1, b1, L2, w2, b2,
                     wfc1, bfc1, gamma, beta, mean, var, wfc2, bfc2):
    # --- one-time parameter preparation (wrapper side, outside the kernel) ---
    w1f = jnp.einsum('th,khg->ktg', dft, w1)          # fold real-DFT into W1
    wfc1_r = wfc1.reshape(N2 // 4, G2, C_FC)          # x.view(B,-1) folded into fc1
    bn_scale = gamma * jax.lax.rsqrt(var + BN_EPS)    # eval-mode BN as scale/shift
    bn_shift = beta - mean * bn_scale

    out = pl.pallas_call(
        nettgcn_kernel,
        out_shape=jax.ShapeDtypeStruct((B, 1, D_OUT), jnp.float32),
        grid=(B,),
        in_specs=[
            pl.BlockSpec((1, N0, T), lambda b: (b, 0, 0)),    # x (one batch / step)
            _const_spec((N0, N0)),                            # L0
            _const_spec((K1, H1, G1)),                        # W1 (DFT-folded)
            _const_spec((1, G1)),                             # b1
            _const_spec((N2, N2)),                            # L2
            _const_spec((K2, G1, G2)),                        # W2
            _const_spec((1, G2)),                             # b2
            _const_spec((N2 // 4, G2, C_FC)),                 # fc1 weight [4,64,200]
            _const_spec((1, C_FC)),                           # fc1 bias
            _const_spec((1, C_FC)),                           # BN scale
            _const_spec((1, C_FC)),                           # BN shift
            _const_spec((C_FC, D_OUT)),                       # fc2 weight
            _const_spec((1, D_OUT)),                          # fc2 bias
        ],
        out_specs=pl.BlockSpec((1, 1, D_OUT), lambda b: (b, 0, 0)),
        scratch_shapes=[pltpu.VMEM((N0, G1), jnp.float32),    # pool scratch, layer 1
                        pltpu.VMEM((N2, G2), jnp.float32)],   # pool scratch, layer 2
        compiler_params=pltpu.CompilerParams(dimension_semantics=("parallel",)),
    )(x, L0, w1f, b1, L2, w2, b2, wfc1_r, bfc1, bn_scale, bn_shift, wfc2, bfc2)
    return out.reshape(B, D_OUT)


# ------------------------------ pure-JAX reference ----------------------------
def reference_forward(x, dft, L0, w1, b1, L2, w2, b2,
                      wfc1, bfc1, gamma, beta, mean, var, wfc2, bfc2):
    hi = jax.lax.Precision.HIGHEST    # exact-f32 ground truth

    def cheb(L, xin, w):
        K = w.shape[0]
        t_prev = xin
        acc = jnp.einsum('bnh,hg->bng', t_prev, w[0], precision=hi)
        t_cur = jnp.einsum('nm,bmh->bnh', L, t_prev, precision=hi)
        acc = acc + jnp.einsum('bnh,hg->bng', t_cur, w[1], precision=hi)
        for k in range(2, K):
            t_next = 2.0 * jnp.einsum('nm,bmh->bnh', L, t_cur, precision=hi) - t_prev
            acc = acc + jnp.einsum('bnh,hg->bng', t_next, w[k], precision=hi)
            t_prev, t_cur = t_cur, t_next
        return acc

    xf = jnp.einsum('bnt,tk->bnk', x, dft, precision=hi)       # Re(full FFT)
    y = jnp.maximum(cheb(L0, xf, w1) + b1, 0.0)
    y = y.reshape(B, N0 // 4, 4, G1).max(axis=2)
    y = jnp.maximum(cheb(L2, y, w2) + b2, 0.0)
    y = y.reshape(B, N2 // 4, 4, G2).max(axis=2)
    h = jnp.dot(y.reshape(B, -1), wfc1, precision=hi) + bfc1
    h = (h - mean) * jax.lax.rsqrt(var + BN_EPS) * gamma + beta
    h = jnp.maximum(h, 0.0)
    z = jnp.dot(h, wfc2, precision=hi) + bfc2
    return jax.nn.log_softmax(z, axis=1)


# ------------------------------------ main ------------------------------------
if __name__ == "__main__":
    key = jax.random.PRNGKey(0)
    ks = jax.random.split(key, 12)

    x = jax.random.normal(ks[0], (B, N0, T), dtype=jnp.float32)

    def rescaled_laplacian(k, n):
        a = jax.random.normal(k, (n, n), dtype=jnp.float32) / jnp.sqrt(n)
        s = 0.5 * (a + a.T)
        lam = jnp.max(jnp.abs(jnp.linalg.eigvalsh(s)))
        return (s / lam).astype(jnp.float32)        # spectrum in [-1, 1]

    L0 = rescaled_laplacian(ks[1], N0)              # L[0]
    L2 = rescaled_laplacian(ks[2], N2)              # L[2]

    w1 = 0.1 * jax.random.normal(ks[3], (K1, H1, G1), dtype=jnp.float32)
    b1 = 0.1 * jax.random.normal(ks[4], (1, G1), dtype=jnp.float32)
    w2 = 0.1 * jax.random.normal(ks[5], (K2, G1, G2), dtype=jnp.float32)
    b2 = 0.1 * jax.random.normal(ks[6], (1, G2), dtype=jnp.float32)
    wfc1 = 0.02 * jax.random.normal(ks[7], (D_IN, C_FC), dtype=jnp.float32)
    bfc1 = 0.02 * jax.random.normal(ks[8], (1, C_FC), dtype=jnp.float32)
    gamma = 1.0 + 0.1 * jax.random.normal(ks[9], (1, C_FC), dtype=jnp.float32)
    beta = 0.1 * jax.random.normal(ks[10], (1, C_FC), dtype=jnp.float32)
    bn_mean = jnp.zeros((1, C_FC), jnp.float32)
    bn_var = jnp.ones((1, C_FC), jnp.float32)
    wfc2 = 0.05 * jax.random.normal(ks[11], (C_FC, D_OUT), dtype=jnp.float32)
    bfc2 = jnp.zeros((1, D_OUT), jnp.float32)

    # symmetric cosine DFT matrix: dft[t, k] = cos(2*pi*t*k/T) == Re(full DFT)
    idx = jnp.arange(T, dtype=jnp.float32)
    dft = jnp.cos(2.0 * jnp.pi * jnp.outer(idx, idx) / T).astype(jnp.float32)

    params = (dft, L0, w1, b1, L2, w2, b2,
              wfc1, bfc1, gamma, beta, bn_mean, bn_var, wfc2, bfc2)

    out = net_tgcn_forward(x, *params)
    out = jax.block_until_ready(out)
    assert out.shape == (B, D_OUT)

    # Reference is exact-precision f32.  Tolerance covers MXU default-precision
    # (bf16-pass) f32 matmul differences through the 2x10-term Chebyshev chains;
    # any structural bug shows up as O(1) errors.
    ref = reference_forward(x, *params)
    err = float(jnp.max(jnp.abs(out - ref)))
    assert err < 5e-2, f"kernel/reference mismatch: {err}"

    print("KERNEL_OK")
</pallas_src>

<mosaic_0001>
module attributes {stable_mosaic.version = 11 : i64} {
  func.func @nettgcn_kernel(%arg0: i32, %arg1: memref<1x64x15xf32, #tpu.memory_space<vmem>>, %arg2: memref<64x64xf32, #tpu.memory_space<vmem>>, %arg3: memref<10x15x32xf32, #tpu.memory_space<vmem>>, %arg4: memref<1x32xf32, #tpu.memory_space<vmem>>, %arg5: memref<16x16xf32, #tpu.memory_space<vmem>>, %arg6: memref<10x32x64xf32, #tpu.memory_space<vmem>>, %arg7: memref<1x64xf32, #tpu.memory_space<vmem>>, %arg8: memref<4x64x200xf32, #tpu.memory_space<vmem>>, %arg9: memref<1x200xf32, #tpu.memory_space<vmem>>, %arg10: memref<1x200xf32, #tpu.memory_space<vmem>>, %arg11: memref<1x200xf32, #tpu.memory_space<vmem>>, %arg12: memref<200x6xf32, #tpu.memory_space<vmem>>, %arg13: memref<1x6xf32, #tpu.memory_space<vmem>>, %arg14: memref<1x1x6xf32, #tpu.memory_space<vmem>>, %arg15: memref<64x32xf32, #tpu.memory_space<vmem>>, %arg16: memref<16x64xf32, #tpu.memory_space<vmem>>) attributes {dimension_semantics = [#tpu.dimension_semantics<parallel>], iteration_bounds = array<i64: 2>, scalar_prefetch = 0 : i64, scratch_operands = 2 : i64, tpu.core_type = #tpu.core_type<tc>, window_params = [{transform_indices = @transform_0, window_bounds = array<i64: 1, 64, 15>}, {pipeline_mode = #tpu.pipeline_mode<synchronous>, transform_indices = @transform_1, window_bounds = array<i64: 64, 64>}, {pipeline_mode = #tpu.pipeline_mode<synchronous>, transform_indices = @transform_2, window_bounds = array<i64: 10, 15, 32>}, {pipeline_mode = #tpu.pipeline_mode<synchronous>, transform_indices = @transform_3, window_bounds = array<i64: 1, 32>}, {pipeline_mode = #tpu.pipeline_mode<synchronous>, transform_indices = @transform_4, window_bounds = array<i64: 16, 16>}, {pipeline_mode = #tpu.pipeline_mode<synchronous>, transform_indices = @transform_5, window_bounds = array<i64: 10, 32, 64>}, {pipeline_mode = #tpu.pipeline_mode<synchronous>, transform_indices = @transform_6, window_bounds = array<i64: 1, 64>}, {pipeline_mode = #tpu.pipeline_mode<synchronous>, transform_indices = @transform_7, window_bounds = array<i64: 4, 64, 200>}, {pipeline_mode = #tpu.pipeline_mode<synchronous>, transform_indices = @transform_8, window_bounds = array<i64: 1, 200>}, {pipeline_mode = #tpu.pipeline_mode<synchronous>, transform_indices = @transform_9, window_bounds = array<i64: 1, 200>}, {pipeline_mode = #tpu.pipeline_mode<synchronous>, transform_indices = @transform_10, window_bounds = array<i64: 1, 200>}, {pipeline_mode = #tpu.pipeline_mode<synchronous>, transform_indices = @transform_11, window_bounds = array<i64: 200, 6>}, {pipeline_mode = #tpu.pipeline_mode<synchronous>, transform_indices = @transform_12, window_bounds = array<i64: 1, 6>}, {transform_indices = @transform_13, window_bounds = array<i64: 1, 1, 6>}]} {
    %c0 = arith.constant 0 : index
    %c0_0 = arith.constant 0 : index
    %c0_1 = arith.constant 0 : index
    %0 = vector.load %arg1[%c0, %c0_0, %c0_1] : memref<1x64x15xf32, #tpu.memory_space<vmem>>, vector<1x64x15xf32>
    %1 = vector.shape_cast %0 : vector<1x64x15xf32> to vector<64x15xf32>
    %c0_2 = arith.constant 0 : index
    %c0_3 = arith.constant 0 : index
    %2 = vector.load %arg2[%c0_2, %c0_3] : memref<64x64xf32, #tpu.memory_space<vmem>>, vector<64x64xf32>
    %c0_4 = arith.constant 0 : index
    %c0_5 = arith.constant 0 : index
    %c0_6 = arith.constant 0 : index
    %3 = vector.load %arg3[%c0_4, %c0_5, %c0_6] : memref<10x15x32xf32, #tpu.memory_space<vmem>>, vector<1x15x32xf32>
    %4 = vector.shape_cast %3 : vector<1x15x32xf32> to vector<15x32xf32>
    %cst = arith.constant dense<0.000000e+00> : vector<64x32xf32>
    %5 = tpu.matmul %1, %4, %cst {dimension_numbers = #tpu.dot_dimension_numbers<[1], [0], [0], [1], [0, 0, 1, 1], [], []>} : vector<64x15xf32>, vector<15x32xf32>, vector<64x32xf32> -> vector<64x32xf32>
    %cst_7 = arith.constant dense<0.000000e+00> : vector<64x15xf32>
    %6 = tpu.matmul %2, %1, %cst_7 {dimension_numbers = #tpu.dot_dimension_numbers<[1], [0], [0], [1], [0, 0, 1, 1], [], []>} : vector<64x64xf32>, vector<64x15xf32>, vector<64x15xf32> -> vector<64x15xf32>
    %c1 = arith.constant 1 : index
    %c0_8 = arith.constant 0 : index
    %c0_9 = arith.constant 0 : index
    %7 = vector.load %arg3[%c1, %c0_8, %c0_9] : memref<10x15x32xf32, #tpu.memory_space<vmem>>, vector<1x15x32xf32>
    %8 = vector.shape_cast %7 : vector<1x15x32xf32> to vector<15x32xf32>
    %cst_10 = arith.constant dense<0.000000e+00> : vector<64x32xf32>
    %9 = tpu.matmul %6, %8, %cst_10 {dimension_numbers = #tpu.dot_dimension_numbers<[1], [0], [0], [1], [0, 0, 1, 1], [], []>} : vector<64x15xf32>, vector<15x32xf32>, vector<64x32xf32> -> vector<64x32xf32>
    %10 = arith.addf %5, %9 : vector<64x32xf32>
    %cst_11 = arith.constant dense<0.000000e+00> : vector<64x15xf32>
    %11 = tpu.matmul %2, %6, %cst_11 {dimension_numbers = #tpu.dot_dimension_numbers<[1], [0], [0], [1], [0, 0, 1, 1], [], []>} : vector<64x64xf32>, vector<64x15xf32>, vector<64x15xf32> -> vector<64x15xf32>
    %cst_12 = arith.constant 2.000000e+00 : f32
    %12 = vector.broadcast %cst_12 : f32 to vector<64x15xf32>
    %13 = arith.mulf %12, %11 : vector<64x15xf32>
    %14 = arith.subf %13, %1 : vector<64x15xf32>
    %c2 = arith.constant 2 : index
    %c0_13 = arith.constant 0 : index
    %c0_14 = arith.constant 0 : index
    %15 = vector.load %arg3[%c2, %c0_13, %c0_14] : memref<10x15x32xf32, #tpu.memory_space<vmem>>, vector<1x15x32xf32>
    %16 = vector.shape_cast %15 : vector<1x15x32xf32> to vector<15x32xf32>
    %cst_15 = arith.constant dense<0.000000e+00> : vector<64x32xf32>
    %17 = tpu.matmul %14, %16, %cst_15 {dimension_numbers = #tpu.dot_dimension_numbers<[1], [0], [0], [1], [0, 0, 1, 1], [], []>} : vector<64x15xf32>, vector<15x32xf32>, vector<64x32xf32> -> vector<64x32xf32>
    %18 = arith.addf %10, %17 : vector<64x32xf32>
    %cst_16 = arith.constant dense<0.000000e+00> : vector<64x15xf32>
    %19 = tpu.matmul %2, %14, %cst_16 {dimension_numbers = #tpu.dot_dimension_numbers<[1], [0], [0], [1], [0, 0, 1, 1], [], []>} : vector<64x64xf32>, vector<64x15xf32>, vector<64x15xf32> -> vector<64x15xf32>
    %cst_17 = arith.constant 2.000000e+00 : f32
    %20 = vector.broadcast %cst_17 : f32 to vector<64x15xf32>
    %21 = arith.mulf %20, %19 : vector<64x15xf32>
    %22 = arith.subf %21, %6 : vector<64x15xf32>
    %c3 = arith.constant 3 : index
    %c0_18 = arith.constant 0 : index
    %c0_19 = arith.constant 0 : index
    %23 = vector.load %arg3[%c3, %c0_18, %c0_19] : memref<10x15x32xf32, #tpu.memory_space<vmem>>, vector<1x15x32xf32>
    %24 = vector.shape_cast %23 : vector<1x15x32xf32> to vector<15x32xf32>
    %cst_20 = arith.constant dense<0.000000e+00> : vector<64x32xf32>
    %25 = tpu.matmul %22, %24, %cst_20 {dimension_numbers = #tpu.dot_dimension_numbers<[1], [0], [0], [1], [0, 0, 1, 1], [], []>} : vector<64x15xf32>, vector<15x32xf32>, vector<64x32xf32> -> vector<64x32xf32>
    %26 = arith.addf %18, %25 : vector<64x32xf32>
    %cst_21 = arith.constant dense<0.000000e+00> : vector<64x15xf32>
    %27 = tpu.matmul %2, %22, %cst_21 {dimension_numbers = #tpu.dot_dimension_numbers<[1], [0], [0], [1], [0, 0, 1, 1], [], []>} : vector<64x64xf32>, vector<64x15xf32>, vector<64x15xf32> -> vector<64x15xf32>
    %cst_22 = arith.constant 2.000000e+00 : f32
    %28 = vector.broadcast %cst_22 : f32 to vector<64x15xf32>
    %29 = arith.mulf %28, %27 : vector<64x15xf32>
    %30 = arith.subf %29, %14 : vector<64x15xf32>
    %c4 = arith.constant 4 : index
    %c0_23 = arith.constant 0 : index
    %c0_24 = arith.constant 0 : index
    %31 = vector.load %arg3[%c4, %c0_23, %c0_24] : memref<10x15x32xf32, #tpu.memory_space<vmem>>, vector<1x15x32xf32>
    %32 = vector.shape_cast %31 : vector<1x15x32xf32> to vector<15x32xf32>
    %cst_25 = arith.constant dense<0.000000e+00> : vector<64x32xf32>
    %33 = tpu.matmul %30, %32, %cst_25 {dimension_numbers = #tpu.dot_dimension_numbers<[1], [0], [0], [1], [0, 0, 1, 1], [], []>} : vector<64x15xf32>, vector<15x32xf32>, vector<64x32xf32> -> vector<64x32xf32>
    %34 = arith.addf %26, %33 : vector<64x32xf32>
    %cst_26 = arith.constant dense<0.000000e+00> : vector<64x15xf32>
    %35 = tpu.matmul %2, %30, %cst_26 {dimension_numbers = #tpu.dot_dimension_numbers<[1], [0], [0], [1], [0, 0, 1, 1], [], []>} : vector<64x64xf32>, vector<64x15xf32>, vector<64x15xf32> -> vector<64x15xf32>
    %cst_27 = arith.constant 2.000000e+00 : f32
    %36 = vector.broadcast %cst_27 : f32 to vector<64x15xf32>
    %37 = arith.mulf %36, %35 : vector<64x15xf32>
    %38 = arith.subf %37, %22 : vector<64x15xf32>
    %c5 = arith.constant 5 : index
    %c0_28 = arith.constant 0 : index
    %c0_29 = arith.constant 0 : index
    %39 = vector.load %arg3[%c5, %c0_28, %c0_29] : memref<10x15x32xf32, #tpu.memory_space<vmem>>, vector<1x15x32xf32>
    %40 = vector.shape_cast %39 : vector<1x15x32xf32> to vector<15x32xf32>
    %cst_30 = arith.constant dense<0.000000e+00> : vector<64x32xf32>
    %41 = tpu.matmul %38, %40, %cst_30 {dimension_numbers = #tpu.dot_dimension_numbers<[1], [0], [0], [1], [0, 0, 1, 1], [], []>} : vector<64x15xf32>, vector<15x32xf32>, vector<64x32xf32> -> vector<64x32xf32>
    %42 = arith.addf %34, %41 : vector<64x32xf32>
    %cst_31 = arith.constant dense<0.000000e+00> : vector<64x15xf32>
    %43 = tpu.matmul %2, %38, %cst_31 {dimension_numbers = #tpu.dot_dimension_numbers<[1], [0], [0], [1], [0, 0, 1, 1], [], []>} : vector<64x64xf32>, vector<64x15xf32>, vector<64x15xf32> -> vector<64x15xf32>
    %cst_32 = arith.constant 2.000000e+00 : f32
    %44 = vector.broadcast %cst_32 : f32 to vector<64x15xf32>
    %45 = arith.mulf %44, %43 : vector<64x15xf32>
    %46 = arith.subf %45, %30 : vector<64x15xf32>
    %c6 = arith.constant 6 : index
    %c0_33 = arith.constant 0 : index
    %c0_34 = arith.constant 0 : index
    %47 = vector.load %arg3[%c6, %c0_33, %c0_34] : memref<10x15x32xf32, #tpu.memory_space<vmem>>, vector<1x15x32xf32>
    %48 = vector.shape_cast %47 : vector<1x15x32xf32> to vector<15x32xf32>
    %cst_35 = arith.constant dense<0.000000e+00> : vector<64x32xf32>
    %49 = tpu.matmul %46, %48, %cst_35 {dimension_numbers = #tpu.dot_dimension_numbers<[1], [0], [0], [1], [0, 0, 1, 1], [], []>} : vector<64x15xf32>, vector<15x32xf32>, vector<64x32xf32> -> vector<64x32xf32>
    %50 = arith.addf %42, %49 : vector<64x32xf32>
    %cst_36 = arith.constant dense<0.000000e+00> : vector<64x15xf32>
    %51 = tpu.matmul %2, %46, %cst_36 {dimension_numbers = #tpu.dot_dimension_numbers<[1], [0], [0], [1], [0, 0, 1, 1], [], []>} : vector<64x64xf32>, vector<64x15xf32>, vector<64x15xf32> -> vector<64x15xf32>
    %cst_37 = arith.constant 2.000000e+00 : f32
    %52 = vector.broadcast %cst_37 : f32 to vector<64x15xf32>
    %53 = arith.mulf %52, %51 : vector<64x15xf32>
    %54 = arith.subf %53, %38 : vector<64x15xf32>
    %c7 = arith.constant 7 : index
    %c0_38 = arith.constant 0 : index
    %c0_39 = arith.constant 0 : index
    %55 = vector.load %arg3[%c7, %c0_38, %c0_39] : memref<10x15x32xf32, #tpu.memory_space<vmem>>, vector<1x15x32xf32>
    %56 = vector.shape_cast %55 : vector<1x15x32xf32> to vector<15x32xf32>
    %cst_40 = arith.constant dense<0.000000e+00> : vector<64x32xf32>
    %57 = tpu.matmul %54, %56, %cst_40 {dimension_numbers = #tpu.dot_dimension_numbers<[1], [0], [0], [1], [0, 0, 1, 1], [], []>} : vector<64x15xf32>, vector<15x32xf32>, vector<64x32xf32> -> vector<64x32xf32>
    %58 = arith.addf %50, %57 : vector<64x32xf32>
    %cst_41 = arith.constant dense<0.000000e+00> : vector<64x15xf32>
    %59 = tpu.matmul %2, %54, %cst_41 {dimension_numbers = #tpu.dot_dimension_numbers<[1], [0], [0], [1], [0, 0, 1, 1], [], []>} : vector<64x64xf32>, vector<64x15xf32>, vector<64x15xf32> -> vector<64x15xf32>
    %cst_42 = arith.constant 2.000000e+00 : f32
    %60 = vector.broadcast %cst_42 : f32 to vector<64x15xf32>
    %61 = arith.mulf %60, %59 : vector<64x15xf32>
    %62 = arith.subf %61, %46 : vector<64x15xf32>
    %c8 = arith.constant 8 : index
    %c0_43 = arith.constant 0 : index
    %c0_44 = arith.constant 0 : index
    %63 = vector.load %arg3[%c8, %c0_43, %c0_44] : memref<10x15x32xf32, #tpu.memory_space<vmem>>, vector<1x15x32xf32>
    %64 = vector.shape_cast %63 : vector<1x15x32xf32> to vector<15x32xf32>
    %cst_45 = arith.constant dense<0.000000e+00> : vector<64x32xf32>
    %65 = tpu.matmul %62, %64, %cst_45 {dimension_numbers = #tpu.dot_dimension_numbers<[1], [0], [0], [1], [0, 0, 1, 1], [], []>} : vector<64x15xf32>, vector<15x32xf32>, vector<64x32xf32> -> vector<64x32xf32>
    %66 = arith.addf %58, %65 : vector<64x32xf32>
    %cst_46 = arith.constant dense<0.000000e+00> : vector<64x15xf32>
    %67 = tpu.matmul %2, %62, %cst_46 {dimension_numbers = #tpu.dot_dimension_numbers<[1], [0], [0], [1], [0, 0, 1, 1], [], []>} : vector<64x64xf32>, vector<64x15xf32>, vector<64x15xf32> -> vector<64x15xf32>
    %cst_47 = arith.constant 2.000000e+00 : f32
    %68 = vector.broadcast %cst_47 : f32 to vector<64x15xf32>
    %69 = arith.mulf %68, %67 : vector<64x15xf32>
    %70 = arith.subf %69, %54 : vector<64x15xf32>
    %c9 = arith.constant 9 : index
    %c0_48 = arith.constant 0 : index
    %c0_49 = arith.constant 0 : index
    %71 = vector.load %arg3[%c9, %c0_48, %c0_49] : memref<10x15x32xf32, #tpu.memory_space<vmem>>, vector<1x15x32xf32>
    %72 = vector.shape_cast %71 : vector<1x15x32xf32> to vector<15x32xf32>
    %cst_50 = arith.constant dense<0.000000e+00> : vector<64x32xf32>
    %73 = tpu.matmul %70, %72, %cst_50 {dimension_numbers = #tpu.dot_dimension_numbers<[1], [0], [0], [1], [0, 0, 1, 1], [], []>} : vector<64x15xf32>, vector<15x32xf32>, vector<64x32xf32> -> vector<64x32xf32>
    %74 = arith.addf %66, %73 : vector<64x32xf32>
    %c0_51 = arith.constant 0 : index
    %c0_52 = arith.constant 0 : index
    %75 = vector.load %arg4[%c0_51, %c0_52] : memref<1x32xf32, #tpu.memory_space<vmem>>, vector<1x32xf32>
    %76 = vector.broadcast %75 : vector<1x32xf32> to vector<64x32xf32>
    %77 = arith.addf %74, %76 : vector<64x32xf32>
    %cst_53 = arith.constant 0.000000e+00 : f32
    %78 = vector.broadcast %cst_53 : f32 to vector<64x32xf32>
    %79 = arith.maximumf %77, %78 : vector<64x32xf32>
    %c0_54 = arith.constant 0 : index
    %c0_55 = arith.constant 0 : index
    %80 = vector.load %arg15[%c0_54, %c0_55] : memref<64x32xf32, #tpu.memory_space<vmem>>, vector<64x32xf32>
    tpu.vector_store %arg15[%c0_54, %c0_55], %79 {strides = array<i32>} : memref<64x32xf32, #tpu.memory_space<vmem>>, vector<64x32xf32>,
    %c0_56 = arith.constant 0 : index
    %c0_57 = arith.constant 0 : index
    %81 = tpu.strided_load %arg15[%c0_56, %c0_57] {strides = array<i32: 4, 1>} : memref<64x32xf32, #tpu.memory_space<vmem>>, vector<16x32xf32>
    %c1_58 = arith.constant 1 : index
    %c0_59 = arith.constant 0 : index
    %82 = tpu.strided_load %arg15[%c1_58, %c0_59] {strides = array<i32: 4, 1>} : memref<64x32xf32, #tpu.memory_space<vmem>>, vector<16x32xf32>
    %c2_60 = arith.constant 2 : index
    %c0_61 = arith.constant 0 : index
    %83 = tpu.strided_load %arg15[%c2_60, %c0_61] {strides = array<i32: 4, 1>} : memref<64x32xf32, #tpu.memory_space<vmem>>, vector<16x32xf32>
    %c3_62 = arith.constant 3 : index
    %c0_63 = arith.constant 0 : index
    %84 = tpu.strided_load %arg15[%c3_62, %c0_63] {strides = array<i32: 4, 1>} : memref<64x32xf32, #tpu.memory_space<vmem>>, vector<16x32xf32>
    %85 = arith.maximumf %81, %82 : vector<16x32xf32>
    %86 = arith.maximumf %83, %84 : vector<16x32xf32>
    %87 = arith.maximumf %85, %86 : vector<16x32xf32>
    %c0_64 = arith.constant 0 : index
    %c0_65 = arith.constant 0 : index
    %88 = vector.load %arg5[%c0_64, %c0_65] : memref<16x16xf32, #tpu.memory_space<vmem>>, vector<16x16xf32>
    %c0_66 = arith.constant 0 : index
    %c0_67 = arith.constant 0 : index
    %c0_68 = arith.constant 0 : index
    %89 = vector.load %arg6[%c0_66, %c0_67, %c0_68] : memref<10x32x64xf32, #tpu.memory_space<vmem>>, vector<1x32x64xf32>
    %90 = vector.shape_cast %89 : vector<1x32x64xf32> to vector<32x64xf32>
    %cst_69 = arith.constant dense<0.000000e+00> : vector<16x64xf32>
    %91 = tpu.matmul %87, %90, %cst_69 {dimension_numbers = #tpu.dot_dimension_numbers<[1], [0], [0], [1], [0, 0, 1, 1], [], []>} : vector<16x32xf32>, vector<32x64xf32>, vector<16x64xf32> -> vector<16x64xf32>
    %cst_70 = arith.constant dense<0.000000e+00> : vector<16x32xf32>
    %92 = tpu.matmul %88, %87, %cst_70 {dimension_numbers = #tpu.dot_dimension_numbers<[1], [0], [0], [1], [0, 0, 1, 1], [], []>} : vector<16x16xf32>, vector<16x32xf32>, vector<16x32xf32> -> vector<16x32xf32>
    %c1_71 = arith.constant 1 : index
    %c0_72 = arith.constant 0 : index
    %c0_73 = arith.constant 0 : index
    %93 = vector.load %arg6[%c1_71, %c0_72, %c0_73] : memref<10x32x64xf32, #tpu.memory_space<vmem>>, vector<1x32x64xf32>
    %94 = vector.shape_cast %93 : vector<1x32x64xf32> to vector<32x64xf32>
    %cst_74 = arith.constant dense<0.000000e+00> : vector<16x64xf32>
    %95 = tpu.matmul %92, %94, %cst_74 {dimension_numbers = #tpu.dot_dimension_numbers<[1], [0], [0], [1], [0, 0, 1, 1], [], []>} : vector<16x32xf32>, vector<32x64xf32>, vector<16x64xf32> -> vector<16x64xf32>
    %96 = arith.addf %91, %95 : vector<16x64xf32>
    %cst_75 = arith.constant dense<0.000000e+00> : vector<16x32xf32>
    %97 = tpu.matmul %88, %92, %cst_75 {dimension_numbers = #tpu.dot_dimension_numbers<[1], [0], [0], [1], [0, 0, 1, 1], [], []>} : vector<16x16xf32>, vector<16x32xf32>, vector<16x32xf32> -> vector<16x32xf32>
    %cst_76 = arith.constant 2.000000e+00 : f32
    %98 = vector.broadcast %cst_76 : f32 to vector<16x32xf32>
    %99 = arith.mulf %98, %97 : vector<16x32xf32>
    %100 = arith.subf %99, %87 : vector<16x32xf32>
    %c2_77 = arith.constant 2 : index
    %c0_78 = arith.constant 0 : index
    %c0_79 = arith.constant 0 : index
    %101 = vector.load %arg6[%c2_77, %c0_78, %c0_79] : memref<10x32x64xf32, #tpu.memory_space<vmem>>, vector<1x32x64xf32>
    %102 = vector.shape_cast %101 : vector<1x32x64xf32> to vector<32x64xf32>
    %cst_80 = arith.constant dense<0.000000e+00> : vector<16x64xf32>
    %103 = tpu.matmul %100, %102, %cst_80 {dimension_numbers = #tpu.dot_dimension_numbers<[1], [0], [0], [1], [0, 0, 1, 1], [], []>} : vector<16x32xf32>, vector<32x64xf32>, vector<16x64xf32> -> vector<16x64xf32>
    %104 = arith.addf %96, %103 : vector<16x64xf32>
    %cst_81 = arith.constant dense<0.000000e+00> : vector<16x32xf32>
    %105 = tpu.matmul %88, %100, %cst_81 {dimension_numbers = #tpu.dot_dimension_numbers<[1], [0], [0], [1], [0, 0, 1, 1], [], []>} : vector<16x16xf32>, vector<16x32xf32>, vector<16x32xf32> -> vector<16x32xf32>
    %cst_82 = arith.constant 2.000000e+00 : f32
    %106 = vector.broadcast %cst_82 : f32 to vector<16x32xf32>
    %107 = arith.mulf %106, %105 : vector<16x32xf32>
    %108 = arith.subf %107, %92 : vector<16x32xf32>
    %c3_83 = arith.constant 3 : index
    %c0_84 = arith.constant 0 : index
    %c0_85 = arith.constant 0 : index
    %109 = vector.load %arg6[%c3_83, %c0_84, %c0_85] : memref<10x32x64xf32, #tpu.memory_space<vmem>>, vector<1x32x64xf32>
    %110 = vector.shape_cast %109 : vector<1x32x64xf32> to vector<32x64xf32>
    %cst_86 = arith.constant dense<0.000000e+00> : vector<16x64xf32>
    %111 = tpu.matmul %108, %110, %cst_86 {dimension_numbers = #tpu.dot_dimension_numbers<[1], [0], [0], [1], [0, 0, 1, 1], [], []>} : vector<16x32xf32>, vector<32x64xf32>, vector<16x64xf32> -> vector<16x64xf32>
    %112 = arith.addf %104, %111 : vector<16x64xf32>
    %cst_87 = arith.constant dense<0.000000e+00> : vector<16x32xf32>
    %113 = tpu.matmul %88, %108, %cst_87 {dimension_numbers = #tpu.dot_dimension_numbers<[1], [0], [0], [1], [0, 0, 1, 1], [], []>} : vector<16x16xf32>, vector<16x32xf32>, vector<16x32xf32> -> vector<16x32xf32>
    %cst_88 = arith.constant 2.000000e+00 : f32
    %114 = vector.broadcast %cst_88 : f32 to vector<16x32xf32>
    %115 = arith.mulf %114, %113 : vector<16x32xf32>
    %116 = arith.subf %115, %100 : vector<16x32xf32>
    %c4_89 = arith.constant 4 : index
    %c0_90 = arith.constant 0 : index
    %c0_91 = arith.constant 0 : index
    %117 = vector.load %arg6[%c4_89, %c0_90, %c0_91] : memref<10x32x64xf32, #tpu.memory_space<vmem>>, vector<1x32x64xf32>
    %118 = vector.shape_cast %117 : vector<1x32x64xf32> to vector<32x64xf32>
    %cst_92 = arith.constant dense<0.000000e+00> : vector<16x64xf32>
    %119 = tpu.matmul %116, %118, %cst_92 {dimension_numbers = #tpu.dot_dimension_numbers<[1], [0], [0], [1], [0, 0, 1, 1], [], []>} : vector<16x32xf32>, vector<32x64xf32>, vector<16x64xf32> -> vector<16x64xf32>
    %120 = arith.addf %112, %119 : vector<16x64xf32>
    %cst_93 = arith.constant dense<0.000000e+00> : vector<16x32xf32>
    %121 = tpu.matmul %88, %116, %cst_93 {dimension_numbers = #tpu.dot_dimension_numbers<[1], [0], [0], [1], [0, 0, 1, 1], [], []>} : vector<16x16xf32>, vector<16x32xf32>, vector<16x32xf32> -> vector<16x32xf32>
    %cst_94 = arith.constant 2.000000e+00 : f32
    %122 = vector.broadcast %cst_94 : f32 to vector<16x32xf32>
    %123 = arith.mulf %122, %121 : vector<16x32xf32>
    %124 = arith.subf %123, %108 : vector<16x32xf32>
    %c5_95 = arith.constant 5 : index
    %c0_96 = arith.constant 0 : index
    %c0_97 = arith.constant 0 : index
    %125 = vector.load %arg6[%c5_95, %c0_96, %c0_97] : memref<10x32x64xf32, #tpu.memory_space<vmem>>, vector<1x32x64xf32>
    %126 = vector.shape_cast %125 : vector<1x32x64xf32> to vector<32x64xf32>
    %cst_98 = arith.constant dense<0.000000e+00> : vector<16x64xf32>
    %127 = tpu.matmul %124, %126, %cst_98 {dimension_numbers = #tpu.dot_dimension_numbers<[1], [0], [0], [1], [0, 0, 1, 1], [], []>} : vector<16x32xf32>, vector<32x64xf32>, vector<16x64xf32> -> vector<16x64xf32>
    %128 = arith.addf %120, %127 : vector<16x64xf32>
    %cst_99 = arith.constant dense<0.000000e+00> : vector<16x32xf32>
    %129 = tpu.matmul %88, %124, %cst_99 {dimension_numbers = #tpu.dot_dimension_numbers<[1], [0], [0], [1], [0, 0, 1, 1], [], []>} : vector<16x16xf32>, vector<16x32xf32>, vector<16x32xf32> -> vector<16x32xf32>
    %cst_100 = arith.constant 2.000000e+00 : f32
    %130 = vector.broadcast %cst_100 : f32 to vector<16x32xf32>
    %131 = arith.mulf %130, %129 : vector<16x32xf32>
    %132 = arith.subf %131, %116 : vector<16x32xf32>
    %c6_101 = arith.constant 6 : index
    %c0_102 = arith.constant 0 : index
    %c0_103 = arith.constant 0 : index
    %133 = vector.load %arg6[%c6_101, %c0_102, %c0_103] : memref<10x32x64xf32, #tpu.memory_space<vmem>>, vector<1x32x64xf32>
    %134 = vector.shape_cast %133 : vector<1x32x64xf32> to vector<32x64xf32>
    %cst_104 = arith.constant dense<0.000000e+00> : vector<16x64xf32>
    %135 = tpu.matmul %132, %134, %cst_104 {dimension_numbers = #tpu.dot_dimension_numbers<[1], [0], [0], [1], [0, 0, 1, 1], [], []>} : vector<16x32xf32>, vector<32x64xf32>, vector<16x64xf32> -> vector<16x64xf32>
    %136 = arith.addf %128, %135 : vector<16x64xf32>
    %cst_105 = arith.constant dense<0.000000e+00> : vector<16x32xf32>
    %137 = tpu.matmul %88, %132, %cst_105 {dimension_numbers = #tpu.dot_dimension_numbers<[1], [0], [0], [1], [0, 0, 1, 1], [], []>} : vector<16x16xf32>, vector<16x32xf32>, vector<16x32xf32> -> vector<16x32xf32>
    %cst_106 = arith.constant 2.000000e+00 : f32
    %138 = vector.broadcast %cst_106 : f32 to vector<16x32xf32>
    %139 = arith.mulf %138, %137 : vector<16x32xf32>
    %140 = arith.subf %139, %124 : vector<16x32xf32>
    %c7_107 = arith.constant 7 : index
    %c0_108 = arith.constant 0 : index
    %c0_109 = arith.constant 0 : index
    %141 = vector.load %arg6[%c7_107, %c0_108, %c0_109] : memref<10x32x64xf32, #tpu.memory_space<vmem>>, vector<1x32x64xf32>
    %142 = vector.shape_cast %141 : vector<1x32x64xf32> to vector<32x64xf32>
    %cst_110 = arith.constant dense<0.000000e+00> : vector<16x64xf32>
    %143 = tpu.matmul %140, %142, %cst_110 {dimension_numbers = #tpu.dot_dimension_numbers<[1], [0], [0], [1], [0, 0, 1, 1], [], []>} : vector<16x32xf32>, vector<32x64xf32>, vector<16x64xf32> -> vector<16x64xf32>
    %144 = arith.addf %136, %143 : vector<16x64xf32>
    %cst_111 = arith.constant dense<0.000000e+00> : vector<16x32xf32>
    %145 = tpu.matmul %88, %140, %cst_111 {dimension_numbers = #tpu.dot_dimension_numbers<[1], [0], [0], [1], [0, 0, 1, 1], [], []>} : vector<16x16xf32>, vector<16x32xf32>, vector<16x32xf32> -> vector<16x32xf32>
    %cst_112 = arith.constant 2.000000e+00 : f32
    %146 = vector.broadcast %cst_112 : f32 to vector<16x32xf32>
    %147 = arith.mulf %146, %145 : vector<16x32xf32>
    %148 = arith.subf %147, %132 : vector<16x32xf32>
    %c8_113 = arith.constant 8 : index
    %c0_114 = arith.constant 0 : index
    %c0_115 = arith.constant 0 : index
    %149 = vector.load %arg6[%c8_113, %c0_114, %c0_115] : memref<10x32x64xf32, #tpu.memory_space<vmem>>, vector<1x32x64xf32>
    %150 = vector.shape_cast %149 : vector<1x32x64xf32> to vector<32x64xf32>
    %cst_116 = arith.constant dense<0.000000e+00> : vector<16x64xf32>
    %151 = tpu.matmul %148, %150, %cst_116 {dimension_numbers = #tpu.dot_dimension_numbers<[1], [0], [0], [1], [0, 0, 1, 1], [], []>} : vector<16x32xf32>, vector<32x64xf32>, vector<16x64xf32> -> vector<16x64xf32>
    %152 = arith.addf %144, %151 : vector<16x64xf32>
    %cst_117 = arith.constant dense<0.000000e+00> : vector<16x32xf32>
    %153 = tpu.matmul %88, %148, %cst_117 {dimension_numbers = #tpu.dot_dimension_numbers<[1], [0], [0], [1], [0, 0, 1, 1], [], []>} : vector<16x16xf32>, vector<16x32xf32>, vector<16x32xf32> -> vector<16x32xf32>
    %cst_118 = arith.constant 2.000000e+00 : f32
    %154 = vector.broadcast %cst_118 : f32 to vector<16x32xf32>
    %155 = arith.mulf %154, %153 : vector<16x32xf32>
    %156 = arith.subf %155, %140 : vector<16x32xf32>
    %c9_119 = arith.constant 9 : index
    %c0_120 = arith.constant 0 : index
    %c0_121 = arith.constant 0 : index
    %157 = vector.load %arg6[%c9_119, %c0_120, %c0_121] : memref<10x32x64xf32, #tpu.memory_space<vmem>>, vector<1x32x64xf32>
    %158 = vector.shape_cast %157 : vector<1x32x64xf32> to vector<32x64xf32>
    %cst_122 = arith.constant dense<0.000000e+00> : vector<16x64xf32>
    %159 = tpu.matmul %156, %158, %cst_122 {dimension_numbers = #tpu.dot_dimension_numbers<[1], [0], [0], [1], [0, 0, 1, 1], [], []>} : vector<16x32xf32>, vector<32x64xf32>, vector<16x64xf32> -> vector<16x64xf32>
    %160 = arith.addf %152, %159 : vector<16x64xf32>
    %c0_123 = arith.constant 0 : index
    %c0_124 = arith.constant 0 : index
    %161 = vector.load %arg7[%c0_123, %c0_124] : memref<1x64xf32, #tpu.memory_space<vmem>>, vector<1x64xf32>
    %162 = vector.broadcast %161 : vector<1x64xf32> to vector<16x64xf32>
    %163 = arith.addf %160, %162 : vector<16x64xf32>
    %cst_125 = arith.constant 0.000000e+00 : f32
    %164 = vector.broadcast %cst_125 : f32 to vector<16x64xf32>
    %165 = arith.maximumf %163, %164 : vector<16x64xf32>
    %c0_126 = arith.constant 0 : index
    %c0_127 = arith.constant 0 : index
    %166 = vector.load %arg16[%c0_126, %c0_127] : memref<16x64xf32, #tpu.memory_space<vmem>>, vector<16x64xf32>
    tpu.vector_store %arg16[%c0_126, %c0_127], %165 {strides = array<i32>} : memref<16x64xf32, #tpu.memory_space<vmem>>, vector<16x64xf32>,
    %c0_128 = arith.constant 0 : index
    %c0_129 = arith.constant 0 : index
    %167 = tpu.strided_load %arg16[%c0_128, %c0_129] {strides = array<i32: 4, 1>} : memref<16x64xf32, #tpu.memory_space<vmem>>, vector<4x64xf32>
    %c1_130 = arith.constant 1 : index
    %c0_131 = arith.constant 0 : index
    %168 = tpu.strided_load %arg16[%c1_130, %c0_131] {strides = array<i32: 4, 1>} : memref<16x64xf32, #tpu.memory_space<vmem>>, vector<4x64xf32>
    %c2_132 = arith.constant 2 : index
    %c0_133 = arith.constant 0 : index
    %169 = tpu.strided_load %arg16[%c2_132, %c0_133] {strides = array<i32: 4, 1>} : memref<16x64xf32, #tpu.memory_space<vmem>>, vector<4x64xf32>
    %c3_134 = arith.constant 3 : index
    %c0_135 = arith.constant 0 : index
    %170 = tpu.strided_load %arg16[%c3_134, %c0_135] {strides = array<i32: 4, 1>} : memref<16x64xf32, #tpu.memory_space<vmem>>, vector<4x64xf32>
    %171 = arith.maximumf %167, %168 : vector<4x64xf32>
    %172 = arith.maximumf %169, %170 : vector<4x64xf32>
    %173 = arith.maximumf %171, %172 : vector<4x64xf32>
    %c0_136 = arith.constant 0 : index
    %c0_137 = arith.constant 0 : index
    %174 = vector.load %arg9[%c0_136, %c0_137] : memref<1x200xf32, #tpu.memory_space<vmem>>, vector<1x200xf32>
    %175 = vector.extract_strided_slice %173 {offsets = [0, 0], sizes = [1, 64], strides = [1, 1]} : vector<4x64xf32> to vector<1x64xf32>
    %c0_138 = arith.constant 0 : index
    %c0_139 = arith.constant 0 : index
    %c0_140 = arith.constant 0 : index
    %176 = vector.load %arg8[%c0_138, %c0_139, %c0_140] : memref<4x64x200xf32, #tpu.memory_space<vmem>>, vector<1x64x200xf32>
    %177 = vector.shape_cast %176 : vector<1x64x200xf32> to vector<64x200xf32>
    %cst_141 = arith.constant dense<0.000000e+00> : vector<1x200xf32>
    %178 = tpu.matmul %175, %177, %cst_141 {dimension_numbers = #tpu.dot_dimension_numbers<[1], [0], [0], [1], [0, 0, 1, 1], [], []>} : vector<1x64xf32>, vector<64x200xf32>, vector<1x200xf32> -> vector<1x200xf32>
    %179 = arith.addf %174, %178 : vector<1x200xf32>
    %180 = vector.extract_strided_slice %173 {offsets = [1, 0], sizes = [1, 64], strides = [1, 1]} : vector<4x64xf32> to vector<1x64xf32>
    %c1_142 = arith.constant 1 : index
    %c0_143 = arith.constant 0 : index
    %c0_144 = arith.constant 0 : index
    %181 = vector.load %arg8[%c1_142, %c0_143, %c0_144] : memref<4x64x200xf32, #tpu.memory_space<vmem>>, vector<1x64x200xf32>
    %182 = vector.shape_cast %181 : vector<1x64x200xf32> to vector<64x200xf32>
    %cst_145 = arith.constant dense<0.000000e+00> : vector<1x200xf32>
    %183 = tpu.matmul %180, %182, %cst_145 {dimension_numbers = #tpu.dot_dimension_numbers<[1], [0], [0], [1], [0, 0, 1, 1], [], []>} : vector<1x64xf32>, vector<64x200xf32>, vector<1x200xf32> -> vector<1x200xf32>
    %184 = arith.addf %179, %183 : vector<1x200xf32>
    %185 = vector.extract_strided_slice %173 {offsets = [2, 0], sizes = [1, 64], strides = [1, 1]} : vector<4x64xf32> to vector<1x64xf32>
    %c2_146 = arith.constant 2 : index
    %c0_147 = arith.constant 0 : index
    %c0_148 = arith.constant 0 : index
    %186 = vector.load %arg8[%c2_146, %c0_147, %c0_148] : memref<4x64x200xf32, #tpu.memory_space<vmem>>, vector<1x64x200xf32>
    %187 = vector.shape_cast %186 : vector<1x64x200xf32> to vector<64x200xf32>
    %cst_149 = arith.constant dense<0.000000e+00> : vector<1x200xf32>
    %188 = tpu.matmul %185, %187, %cst_149 {dimension_numbers = #tpu.dot_dimension_numbers<[1], [0], [0], [1], [0, 0, 1, 1], [], []>} : vector<1x64xf32>, vector<64x200xf32>, vector<1x200xf32> -> vector<1x200xf32>
    %189 = arith.addf %184, %188 : vector<1x200xf32>
    %190 = vector.extract_strided_slice %173 {offsets = [3, 0], sizes = [1, 64], strides = [1, 1]} : vector<4x64xf32> to vector<1x64xf32>
    %c3_150 = arith.constant 3 : index
    %c0_151 = arith.constant 0 : index
    %c0_152 = arith.constant 0 : index
    %191 = vector.load %arg8[%c3_150, %c0_151, %c0_152] : memref<4x64x200xf32, #tpu.memory_space<vmem>>, vector<1x64x200xf32>
    %192 = vector.shape_cast %191 : vector<1x64x200xf32> to vector<64x200xf32>
    %cst_153 = arith.constant dense<0.000000e+00> : vector<1x200xf32>
    %193 = tpu.matmul %190, %192, %cst_153 {dimension_numbers = #tpu.dot_dimension_numbers<[1], [0], [0], [1], [0, 0, 1, 1], [], []>} : vector<1x64xf32>, vector<64x200xf32>, vector<1x200xf32> -> vector<1x200xf32>
    %194 = arith.addf %189, %193 : vector<1x200xf32>
    %c0_154 = arith.constant 0 : index
    %c0_155 = arith.constant 0 : index
    %195 = vector.load %arg10[%c0_154, %c0_155] : memref<1x200xf32, #tpu.memory_space<vmem>>, vector<1x200xf32>
    %196 = arith.mulf %194, %195 : vector<1x200xf32>
    %c0_156 = arith.constant 0 : index
    %c0_157 = arith.constant 0 : index
    %197 = vector.load %arg11[%c0_156, %c0_157] : memref<1x200xf32, #tpu.memory_space<vmem>>, vector<1x200xf32>
    %198 = arith.addf %196, %197 : vector<1x200xf32>
    %cst_158 = arith.constant 0.000000e+00 : f32
    %199 = vector.broadcast %cst_158 : f32 to vector<1x200xf32>
    %200 = arith.maximumf %198, %199 : vector<1x200xf32>
    %c0_159 = arith.constant 0 : index
    %c0_160 = arith.constant 0 : index
    %201 = vector.load %arg12[%c0_159, %c0_160] : memref<200x6xf32, #tpu.memory_space<vmem>>, vector<200x6xf32>
    %cst_161 = arith.constant dense<0.000000e+00> : vector<1x6xf32>
    %202 = tpu.matmul %200, %201, %cst_161 {dimension_numbers = #tpu.dot_dimension_numbers<[1], [0], [0], [1], [0, 0, 1, 1], [], []>} : vector<1x200xf32>, vector<200x6xf32>, vector<1x6xf32> -> vector<1x6xf32>
    %c0_162 = arith.constant 0 : index
    %c0_163 = arith.constant 0 : index
    %203 = vector.load %arg13[%c0_162, %c0_163] : memref<1x6xf32, #tpu.memory_space<vmem>>, vector<1x6xf32>
    %204 = arith.addf %202, %203 : vector<1x6xf32>
    %cst_164 = arith.constant dense<0xFF800000> : vector<1xf32>
    %205 = vector.multi_reduction <maximumf>, %204, %cst_164 [1] : vector<1x6xf32> to vector<1xf32>
    %206 = vector.shape_cast %205 : vector<1xf32> to vector<1x1xf32>
    %207 = vector.broadcast %206 : vector<1x1xf32> to vector<1x6xf32>
    %208 = arith.subf %204, %207 : vector<1x6xf32>
    %209 = math.exp %208 : vector<1x6xf32>
    %cst_165 = arith.constant dense<0.000000e+00> : vector<1xf32>
    %210 = vector.multi_reduction <add>, %209, %cst_165 [1] : vector<1x6xf32> to vector<1xf32>
    %211 = vector.shape_cast %210 : vector<1xf32> to vector<1x1xf32>
    %212 = math.log %211 : vector<1x1xf32>
    %213 = vector.broadcast %212 : vector<1x1xf32> to vector<1x6xf32>
    %214 = arith.subf %208, %213 : vector<1x6xf32>
    %c0_166 = arith.constant 0 : index
    %c0_167 = arith.constant 0 : index
    %c0_168 = arith.constant 0 : index
    %215 = vector.load %arg14[%c0_166, %c0_167, %c0_168] : memref<1x1x6xf32, #tpu.memory_space<vmem>>, vector<1x1x6xf32>
    %216 = vector.shape_cast %215 : vector<1x1x6xf32> to vector<1x6xf32>
    %217 = vector.shape_cast %214 : vector<1x6xf32> to vector<1x1x6xf32>
    tpu.vector_store %arg14[%c0_166, %c0_167, %c0_168], %217 {strides = array<i32>} : memref<1x1x6xf32, #tpu.memory_space<vmem>>, vector<1x1x6xf32>,
    return
  }
  func.func @transform_0(%arg0: i32) -> (i32, i32, i32) {
    %c0_i32 = arith.constant 0 : i32
    %c0_i32_0 = arith.constant 0 : i32
    %c0_i32_1 = arith.constant 0 : i32
    return %arg0, %c0_i32, %c0_i32_0 : i32, i32, i32
  }
  func.func @transform_1(%arg0: i32) -> (i32, i32) {
    %c0_i32 = arith.constant 0 : i32
    %c0_i32_0 = arith.constant 0 : i32
    %c0_i32_1 = arith.constant 0 : i32
    return %c0_i32, %c0_i32_0 : i32, i32
  }
  func.func @transform_2(%arg0: i32) -> (i32, i32, i32) {
    %c0_i32 = arith.constant 0 : i32
    %c0_i32_0 = arith.constant 0 : i32
    %c0_i32_1 = arith.constant 0 : i32
    %c0_i32_2 = arith.constant 0 : i32
    return %c0_i32, %c0_i32_0, %c0_i32_1 : i32, i32, i32
  }
  func.func @transform_3(%arg0: i32) -> (i32, i32) {
    %c0_i32 = arith.constant 0 : i32
    %c0_i32_0 = arith.constant 0 : i32
    %c0_i32_1 = arith.constant 0 : i32
    return %c0_i32, %c0_i32_0 : i32, i32
  }
  func.func @transform_4(%arg0: i32) -> (i32, i32) {
    %c0_i32 = arith.constant 0 : i32
    %c0_i32_0 = arith.constant 0 : i32
    %c0_i32_1 = arith.constant 0 : i32
    return %c0_i32, %c0_i32_0 : i32, i32
  }
  func.func @transform_5(%arg0: i32) -> (i32, i32, i32) {
    %c0_i32 = arith.constant 0 : i32
    %c0_i32_0 = arith.constant 0 : i32
    %c0_i32_1 = arith.constant 0 : i32
    %c0_i32_2 = arith.constant 0 : i32
    return %c0_i32, %c0_i32_0, %c0_i32_1 : i32, i32, i32
  }
  func.func @transform_6(%arg0: i32) -> (i32, i32) {
    %c0_i32 = arith.constant 0 : i32
    %c0_i32_0 = arith.constant 0 : i32
    %c0_i32_1 = arith.constant 0 : i32
    return %c0_i32, %c0_i32_0 : i32, i32
  }
  func.func @transform_7(%arg0: i32) -> (i32, i32, i32) {
    %c0_i32 = arith.constant 0 : i32
    %c0_i32_0 = arith.constant 0 : i32
    %c0_i32_1 = arith.constant 0 : i32
    %c0_i32_2 = arith.constant 0 : i32
    return %c0_i32, %c0_i32_0, %c0_i32_1 : i32, i32, i32
  }
  func.func @transform_8(%arg0: i32) -> (i32, i32) {
    %c0_i32 = arith.constant 0 : i32
    %c0_i32_0 = arith.constant 0 : i32
    %c0_i32_1 = arith.constant 0 : i32
    return %c0_i32, %c0_i32_0 : i32, i32
  }
  func.func @transform_9(%arg0: i32) -> (i32, i32) {
    %c0_i32 = arith.constant 0 : i32
    %c0_i32_0 = arith.constant 0 : i32
    %c0_i32_1 = arith.constant 0 : i32
    return %c0_i32, %c0_i32_0 : i32, i32
  }
  func.func @transform_10(%arg0: i32) -> (i32, i32) {
    %c0_i32 = arith.constant 0 : i32
    %c0_i32_0 = arith.constant 0 : i32
    %c0_i32_1 = arith.constant 0 : i32
    return %c0_i32, %c0_i32_0 : i32, i32
  }
  func.func @transform_11(%arg0: i32) -> (i32, i32) {
    %c0_i32 = arith.constant 0 : i32
    %c0_i32_0 = arith.constant 0 : i32
    %c0_i32_1 = arith.constant 0 : i32
    return %c0_i32, %c0_i32_0 : i32, i32
  }
  func.func @transform_12(%arg0: i32) -> (i32, i32) {
    %c0_i32 = arith.constant 0 : i32
    %c0_i32_0 = arith.constant 0 : i32
    %c0_i32_1 = arith.constant 0 : i32
    return %c0_i32, %c0_i32_0 : i32, i32
  }
  func.func @transform_13(%arg0: i32) -> (i32, i32, i32) {
    %c0_i32 = arith.constant 0 : i32
    %c0_i32_0 = arith.constant 0 : i32
    %c0_i32_1 = arith.constant 0 : i32
    return %arg0, %c0_i32, %c0_i32_0 : i32, i32, i32
  }
}

</mosaic_0001>

<llo_original>
// kernel: net_tgcn_forward.1
$region0: #{net_tgcn_forward.1}
  #allocation0 [shape = 'u32[]', space=smem, size = 0x4, offset = 0x4, fixed_abs, tag = 'smem constant byte address 0x4 - core index']
  #allocation1 [shape = 'u32[72,128]{1,0:T(1,128)}', space=vmem, size = 0x9000, scoped, tag = 'internal scratch']
  #allocation2 [shape = 'f32[64,32]{1,0:T(8,128)}', space=vmem, size = 0x8000, scoped, tag = 'scratch operand']
  #allocation3 [shape = 'f32[16,64]{1,0:T(8,128)}', space=vmem, size = 0x2000, scoped, tag = 'scratch operand']
  %s0 = inlined_call_operand.vmem [shape: f32[2,64,15], index: 0, kind: input, shape index: {}]
  %s1 = inlined_call_operand.vmem [shape: f32[64,64], index: 1, kind: input, shape index: {}]
  %s2 = inlined_call_operand.vmem [shape: f32[10,15,32], index: 2, kind: input, shape index: {}]
  %s3 = inlined_call_operand.vmem [shape: f32[1,32], index: 3, kind: input, shape index: {}]
  %s4 = inlined_call_operand.vmem [shape: f32[16,16], index: 4, kind: input, shape index: {}]
  %s5 = inlined_call_operand.vmem [shape: f32[10,32,64], index: 5, kind: input, shape index: {}]
  %s6 = inlined_call_operand.vmem [shape: f32[1,64], index: 6, kind: input, shape index: {}]
  %s7 = inlined_call_operand.vmem [shape: f32[4,64,200], index: 7, kind: input, shape index: {}]
  %s8 = inlined_call_operand.vmem [shape: f32[1,200], index: 8, kind: input, shape index: {}]
  %s9 = inlined_call_operand.vmem [shape: f32[1,200], index: 9, kind: input, shape index: {}]
  %s10 = inlined_call_operand.vmem [shape: f32[1,200], index: 10, kind: input, shape index: {}]
  %s11 = inlined_call_operand.vmem [shape: f32[200,6], index: 11, kind: input, shape index: {}]
  %s12 = inlined_call_operand.vmem [shape: f32[1,6], index: 12, kind: input, shape index: {}]
  %s13 = inlined_call_operand.hbm [shape: f32[2,1,6], index: 13, kind: output, shape index: {}]
  %s14 = sld [smem:[#allocation0]]
  $region85: #{net_tgcn_forward.1} parent=0
    _
  %s16 = ssub.s32 1, %s14
  %s17 = scalar_select 0, %s16, %s14
  $region1: #{net_tgcn_forward.1} parent=0
    #allocation4 [shape = 'u8[1024]{0}', space=vmem, size = 0x400, scoped, tag = 'output window, operand 0']
    #allocation5 [shape = 's32[2]{0}', space=sflag, size = 0x8, scoped, tag = 'scoped memory for net_tgcn_forward.1']
    %18 = vsyncpa [#allocation5], 0
    %s19 = scalar_lea.sflag [#allocation5], 1
    %20 = vsyncpa %s19, 0
    loop: start=0, step=1, limit=4
    $region2: #{net_tgcn_forward.1} parent=1 // loop_pre_header
      _
    $region3: #{net_tgcn_forward.1} parent=1 // loop_header
      %s22 = sphi 0, %s26
      %p23 = scmp.ge.s32.totalorder %s22, 4
      %s32 = sphi 0, %s34
      %s35 = sphi 0, %s32
      %s36 = sphi 0, %s35
      %s52 = sphi 0, %s36
      %s56 = sphi 0, %s56
      %s58 = sphi 0, %s56
      %s59 = sphi 0, %s58
      %s73 = sphi 0, %s59
      %s77 = sphi 0, %s77
      %s79 = sphi 0, %s77
      %s80 = sphi 0, %s79
      %s94 = sphi 0, %s80
      %s98 = sphi 0, %s98
      %s100 = sphi 0, %s98
      %s101 = sphi 0, %s100
      %s115 = sphi 0, %s101
      %s119 = sphi 0, %s119
      %s121 = sphi 0, %s119
      %s122 = sphi 0, %s121
      %s136 = sphi 0, %s122
      %s140 = sphi 0, %s140
      %s142 = sphi 0, %s140
      %s143 = sphi 0, %s142
      %s157 = sphi 0, %s143
      %s161 = sphi 0, %s161
      %s163 = sphi 0, %s161
      %s164 = sphi 0, %s163
      %s178 = sphi 0, %s164
      %s182 = sphi 0, %s182
      %s184 = sphi 0, %s182
      %s185 = sphi 0, %s184
      %s199 = sphi 0, %s185
      %s203 = sphi 0, %s203
      %s205 = sphi 0, %s203
      %s206 = sphi 0, %s205
      %s220 = sphi 0, %s206
      %s224 = sphi 0, %s224
      %s226 = sphi 0, %s224
      %s227 = sphi 0, %s226
      %s241 = sphi 0, %s227
      %s245 = sphi 0, %s245
      %s247 = sphi 0, %s245
      %s248 = sphi 0, %s247
      %s262 = sphi 0, %s248
      %s266 = sphi 0, %s266
      %s268 = sphi 0, %s266
      %s269 = sphi 0, %s268
      %s283 = sphi 0, %s269
      %s287 = sphi 0, %s287
      %s289 = sphi 0, %s287
      %s290 = sphi 0, %s289
      %s304 = sphi 0, %s290
      %s310 = sphi 0, %s312
      %s313 = sphi 0, %s310
      %s314 = sphi 0, %s313
      %s330 = sphi 0, %s314
    $region4: #{net_tgcn_forward.1} parent=1 // loop_header_branch
      %25 = sbr.rel (%p23) target = $region8
    $region5: #{net_tgcn_forward.1} parent=1 // loop_body
      %s27 = ssub.s32 %s22, 1
      %s28 = ssub.s32 %s22, 2
      %s29 = sadd.s32 %s22, 1
      %s30 = ssub.s32 %s22, %s29
      %p31 = scmp.eq.s32.totalorder %s30, 0
      %s33 = sadd.s32 %s32, 1
      %s34 = scalar_select %p31, %s32, %s33
      %p37 = pneg %p31
      %p38 = scmp.eq.s32.totalorder %s22, 1
      %p39 = por %p37, %p38
      %p40 = scmp.ne.s32.totalorder %s32, %s35
      %p41 = scmp.eq.s32.totalorder %s22, 0
      %p42 = por %p40, %p41
      %p43 = scmp.ne.s32.totalorder %s32, %s35
      %p44 = scmp.eq.s32.totalorder %s27, 1
      %p45 = por %p43, %p44
      %p46 = scmp.ne.s32.totalorder %s35, %s36
      %p47 = scmp.eq.s32.totalorder %s27, 0
      %p48 = por %p46, %p47
      %p49 = scmp.ne.s32.totalorder %s35, %s36
      %p50 = scmp.eq.s32.totalorder %s28, 1
      %p51 = por %p49, %p50
      %p53 = scmp.ne.s32.totalorder %s36, %s52
      %p54 = scmp.eq.s32.totalorder %s28, 0
      %p55 = por %p53, %p54
      %s57 = sadd.s32 %s56, 1
      %p60 = scmp.eq.s32.totalorder %s22, 1
      %p61 = scmp.ne.s32.totalorder %s56, %s58
      %p62 = scmp.eq.s32.totalorder %s22, 0
      %p63 = por %p61, %p62
      %p64 = scmp.ne.s32.totalorder %s56, %s58
      %p65 = scmp.eq.s32.totalorder %s27, 1
      %p66 = por %p64, %p65
      %p67 = scmp.ne.s32.totalorder %s58, %s59
      %p68 = scmp.eq.s32.totalorder %s27, 0
      %p69 = por %p67, %p68
      %p70 = scmp.ne.s32.totalorder %s58, %s59
      %p71 = scmp.eq.s32.totalorder %s28, 1
      %p72 = por %p70, %p71
      %p74 = scmp.ne.s32.totalorder %s59, %s73
      %p75 = scmp.eq.s32.totalorder %s28, 0
      %p76 = por %p74, %p75
      %s78 = sadd.s32 %s77, 1
      %p81 = scmp.eq.s32.totalorder %s22, 1
      %p82 = scmp.ne.s32.totalorder %s77, %s79
      %p83 = scmp.eq.s32.totalorder %s22, 0
      %p84 = por %p82, %p83
      %p85 = scmp.ne.s32.totalorder %s77, %s79
      %p86 = scmp.eq.s32.totalorder %s27, 1
      %p87 = por %p85, %p86
      %p88 = scmp.ne.s32.totalorder %s79, %s80
      %p89 = scmp.eq.s32.totalorder %s27, 0
      %p90 = por %p88, %p89
      %p91 = scmp.ne.s32.totalorder %s79, %s80
      %p92 = scmp.eq.s32.totalorder %s28, 1
      %p93 = por %p91, %p92
      %p95 = scmp.ne.s32.totalorder %s80, %s94
      %p96 = scmp.eq.s32.totalorder %s28, 0
      %p97 = por %p95, %p96
      %s99 = sadd.s32 %s98, 1
      %p102 = scmp.eq.s32.totalorder %s22, 1
      %p103 = scmp.ne.s32.totalorder %s98, %s100
      %p104 = scmp.eq.s32.totalorder %s22, 0
      %p105 = por %p103, %p104
      %p106 = scmp.ne.s32.totalorder %s98, %s100
      %p107 = scmp.eq.s32.totalorder %s27, 1
      %p108 = por %p106, %p107
      %p109 = scmp.ne.s32.totalorder %s100, %s101
      %p110 = scmp.eq.s32.totalorder %s27, 0
      %p111 = por %p109, %p110
      %p112 = scmp.ne.s32.totalorder %s100, %s101
      %p113 = scmp.eq.s32.totalorder %s28, 1
      %p114 = por %p112, %p113
      %p116 = scmp.ne.s32.totalorder %s101, %s115
      %p117 = scmp.eq.s32.totalorder %s28, 0
      %p118 = por %p116, %p117
      %s120 = sadd.s32 %s119, 1
      %p123 = scmp.eq.s32.totalorder %s22, 1
      %p124 = scmp.ne.s32.totalorder %s119, %s121
      %p125 = scmp.eq.s32.totalorder %s22, 0
      %p126 = por %p124, %p125
      %p127 = scmp.ne.s32.totalorder %s119, %s121
      %p128 = scmp.eq.s32.totalorder %s27, 1
      %p129 = por %p127, %p128
      %p130 = scmp.ne.s32.totalorder %s121, %s122
      %p131 = scmp.eq.s32.totalorder %s27, 0
      %p132 = por %p130, %p131
      %p133 = scmp.ne.s32.totalorder %s121, %s122
      %p134 = scmp.eq.s32.totalorder %s28, 1
      %p135 = por %p133, %p134
      %p137 = scmp.ne.s32.totalorder %s122, %s136
      %p138 = scmp.eq.s32.totalorder %s28, 0
      %p139 = por %p137, %p138
      %s141 = sadd.s32 %s140, 1
      %p144 = scmp.eq.s32.totalorder %s22, 1
      %p145 = scmp.ne.s32.totalorder %s140, %s142
      %p146 = scmp.eq.s32.totalorder %s22, 0
      %p147 = por %p145, %p146
      %p148 = scmp.ne.s32.totalorder %s140, %s142
      %p149 = scmp.eq.s32.totalorder %s27, 1
      %p150 = por %p148, %p149
      %p151 = scmp.ne.s32.totalorder %s142, %s143
      %p152 = scmp.eq.s32.totalorder %s27, 0
      %p153 = por %p151, %p152
      %p154 = scmp.ne.s32.totalorder %s142, %s143
      %p155 = scmp.eq.s32.totalorder %s28, 1
      %p156 = por %p154, %p155
      %p158 = scmp.ne.s32.totalorder %s143, %s157
      %p159 = scmp.eq.s32.totalorder %s28, 0
      %p160 = por %p158, %p159
      %s162 = sadd.s32 %s161, 1
      %p165 = scmp.eq.s32.totalorder %s22, 1
      %p166 = scmp.ne.s32.totalorder %s161, %s163
      %p167 = scmp.eq.s32.totalorder %s22, 0
      %p168 = por %p166, %p167
      %p169 = scmp.ne.s32.totalorder %s161, %s163
      %p170 = scmp.eq.s32.totalorder %s27, 1
      %p171 = por %p169, %p170
      %p172 = scmp.ne.s32.totalorder %s163, %s164
      %p173 = scmp.eq.s32.totalorder %s27, 0
      %p174 = por %p172, %p173
      %p175 = scmp.ne.s32.totalorder %s163, %s164
      %p176 = scmp.eq.s32.totalorder %s28, 1
      %p177 = por %p175, %p176
      %p179 = scmp.ne.s32.totalorder %s164, %s178
      %p180 = scmp.eq.s32.totalorder %s28, 0
      %p181 = por %p179, %p180
      %s183 = sadd.s32 %s182, 1
      %p186 = scmp.eq.s32.totalorder %s22, 1
      %p187 = scmp.ne.s32.totalorder %s182, %s184
      %p188 = scmp.eq.s32.totalorder %s22, 0
      %p189 = por %p187, %p188
      %p190 = scmp.ne.s32.totalorder %s182, %s184
      %p191 = scmp.eq.s32.totalorder %s27, 1
      %p192 = por %p190, %p191
      %p193 = scmp.ne.s32.totalorder %s184, %s185
      %p194 = scmp.eq.s32.totalorder %s27, 0
      %p195 = por %p193, %p194
      %p196 = scmp.ne.s32.totalorder %s184, %s185
      %p197 = scmp.eq.s32.totalorder %s28, 1
      %p198 = por %p196, %p197
      %p200 = scmp.ne.s32.totalorder %s185, %s199
      %p201 = scmp.eq.s32.totalorder %s28, 0
      %p202 = por %p200, %p201
      %s204 = sadd.s32 %s203, 1
      %p207 = scmp.eq.s32.totalorder %s22, 1
      %p208 = scmp.ne.s32.totalorder %s203, %s205
      %p209 = scmp.eq.s32.totalorder %s22, 0
      %p210 = por %p208, %p209
      %p211 = scmp.ne.s32.totalorder %s203, %s205
      %p212 = scmp.eq.s32.totalorder %s27, 1
      %p213 = por %p211, %p212
      %p214 = scmp.ne.s32.totalorder %s205, %s206
      %p215 = scmp.eq.s32.totalorder %s27, 0
      %p216 = por %p214, %p215
      %p217 = scmp.ne.s32.totalorder %s205, %s206
      %p218 = scmp.eq.s32.totalorder %s28, 1
      %p219 = por %p217, %p218
      %p221 = scmp.ne.s32.totalorder %s206, %s220
      %p222 = scmp.eq.s32.totalorder %s28, 0
      %p223 = por %p221, %p222
      %s225 = sadd.s32 %s224, 1
      %p228 = scmp.eq.s32.totalorder %s22, 1
      %p229 = scmp.ne.s32.totalorder %s224, %s226
      %p230 = scmp.eq.s32.totalorder %s22, 0
      %p231 = por %p229, %p230
      %p232 = scmp.ne.s32.totalorder %s224, %s226
      %p233 = scmp.eq.s32.totalorder %s27, 1
      %p234 = por %p232, %p233
      %p235 = scmp.ne.s32.totalorder %s226, %s227
      %p236 = scmp.eq.s32.totalorder %s27, 0
      %p237 = por %p235, %p236
      %p238 = scmp.ne.s32.totalorder %s226, %s227
      %p239 = scmp.eq.s32.totalorder %s28, 1
      %p240 = por %p238, %p239
      %p242 = scmp.ne.s32.totalorder %s227, %s241
      %p243 = scmp.eq.s32.totalorder %s28, 0
      %p244 = por %p242, %p243
      %s246 = sadd.s32 %s245, 1
      %p249 = scmp.eq.s32.totalorder %s22, 1
      %p250 = scmp.ne.s32.totalorder %s245, %s247
      %p251 = scmp.eq.s32.totalorder %s22, 0
      %p252 = por %p250, %p251
      %p253 = scmp.ne.s32.totalorder %s245, %s247
      %p254 = scmp.eq.s32.totalorder %s27, 1
      %p255 = por %p253, %p254
      %p256 = scmp.ne.s32.totalorder %s247, %s248
      %p257 = scmp.eq.s32.totalorder %s27, 0
      %p258 = por %p256, %p257
      %p259 = scmp.ne.s32.totalorder %s247, %s248
      %p260 = scmp.eq.s32.totalorder %s28, 1
      %p261 = por %p259, %p260
      %p263 = scmp.ne.s32.totalorder %s248, %s262
      %p264 = scmp.eq.s32.totalorder %s28, 0
      %p265 = por %p263, %p264
      %s267 = sadd.s32 %s266, 1
      %p270 = scmp.eq.s32.totalorder %s22, 1
      %p271 = scmp.ne.s32.totalorder %s266, %s268
      %p272 = scmp.eq.s32.totalorder %s22, 0
      %p273 = por %p271, %p272
      %p274 = scmp.ne.s32.totalorder %s266, %s268
      %p275 = scmp.eq.s32.totalorder %s27, 1
      %p276 = por %p274, %p275
      %p277 = scmp.ne.s32.totalorder %s268, %s269
      %p278 = scmp.eq.s32.totalorder %s27, 0
      %p279 = por %p277, %p278
      %p280 = scmp.ne.s32.totalorder %s268, %s269
      %p281 = scmp.eq.s32.totalorder %s28, 1
      %p282 = por %p280, %p281
      %p284 = scmp.ne.s32.totalorder %s269, %s283
      %p285 = scmp.eq.s32.totalorder %s28, 0
      %p286 = por %p284, %p285
      %s288 = sadd.s32 %s287, 1
      %p291 = scmp.eq.s32.totalorder %s22, 1
      %p292 = scmp.ne.s32.totalorder %s287, %s289
      %p293 = scmp.eq.s32.totalorder %s22, 0
      %p294 = por %p292, %p293
      %p295 = scmp.ne.s32.totalorder %s287, %s289
      %p296 = scmp.eq.s32.totalorder %s27, 1
      %p297 = por %p295, %p296
      %p298 = scmp.ne.s32.totalorder %s289, %s290
      %p299 = scmp.eq.s32.totalorder %s27, 0
      %p300 = por %p298, %p299
      %p301 = scmp.ne.s32.totalorder %s289, %s290
      %p302 = scmp.eq.s32.totalorder %s28, 1
      %p303 = por %p301, %p302
      %p305 = scmp.ne.s32.totalorder %s290, %s304
      %p306 = scmp.eq.s32.totalorder %s28, 0
      %p307 = por %p305, %p306
      %s308 = ssub.s32 %s22, %s29
      %p309 = scmp.eq.s32.totalorder %s308, 0
      %s311 = sadd.s32 %s310, 1
      %s312 = scalar_select %p309, %s310, %s311
      %p315 = pneg %p309
      %p316 = scmp.eq.s32.totalorder %s22, 1
      %p317 = por %p315, %p316
      %p318 = scmp.ne.s32.totalorder %s310, %s313
      %p319 = scmp.eq.s32.totalorder %s22, 0
      %p320 = por %p318, %p319
      %p321 = scmp.ne.s32.totalorder %s310, %s313
      %p322 = scmp.eq.s32.totalorder %s27, 1
      %p323 = por %p321, %p322
      %p324 = scmp.ne.s32.totalorder %s313, %s314
      %p325 = scmp.eq.s32.totalorder %s27, 0
      %p326 = por %p324, %p325
      %p327 = scmp.ne.s32.totalorder %s313, %s314
      %p328 = scmp.eq.s32.totalorder %s28, 1
      %p329 = por %p327, %p328
      %p331 = scmp.ne.s32.totalorder %s314, %s330
      %p332 = scmp.eq.s32.totalorder %s28, 0
      %p333 = por %p331, %p332
      %p334 = scmp.le.s32.totalorder 1, %s22
      %p335 = scmp.lt.s32.totalorder %s22, 3
      %p336 = pnand %p334, %p335
      %p337 = pneg %p336
      // Predicated region
      $region9: #{net_tgcn_forward.1} parent=5 // pred_check
        _
      $region10: #{net_tgcn_forward.1} parent=5 // pred_check_branch
        %339 = sbr.rel (%p336) target = $region12
      $region11: #{net_tgcn_forward.1} parent=5 // pred_region
        %s340 = ssub.s32 %s22, 1
        // Predicated region
        $region13: #{net_tgcn_forward.1} parent=11 // pred_check
          %p341 = pneg %p69
        $region14: #{net_tgcn_forward.1} parent=11 // pred_check_branch
          %343 = sbr.rel (%p341) target = $region16
        $region15: #{net_tgcn_forward.1} parent=11 // pred_region
          _
        $region16: #{net_tgcn_forward.1} parent=11 // pred_fallthru
          _
        // Predicated region
        $region17: #{net_tgcn_forward.1} parent=11 // pred_check
          %p344 = pneg %p90
        $region18: #{net_tgcn_forward.1} parent=11 // pred_check_branch
          %346 = sbr.rel (%p344) target = $region20
        $region19: #{net_tgcn_forward.1} parent=11 // pred_region
          _
        $region20: #{net_tgcn_forward.1} parent=11 // pred_fallthru
          _
        // Predicated region
        $region21: #{net_tgcn_forward.1} parent=11 // pred_check
          %p347 = pneg %p111
        $region22: #{net_tgcn_forward.1} parent=11 // pred_check_branch
          %349 = sbr.rel (%p347) target = $region24
        $region23: #{net_tgcn_forward.1} parent=11 // pred_region
          _
        $region24: #{net_tgcn_forward.1} parent=11 // pred_fallthru
          _
        // Predicated region
        $region25: #{net_tgcn_forward.1} parent=11 // pred_check
          %p350 = pneg %p132
        $region26: #{net_tgcn_forward.1} parent=11 // pred_check_branch
          %352 = sbr.rel (%p350) target = $region28
        $region27: #{net_tgcn_forward.1} parent=11 // pred_region
          _
        $region28: #{net_tgcn_forward.1} parent=11 // pred_fallthru
          _
        // Predicated region
        $region29: #{net_tgcn_forward.1} parent=11 // pred_check
          %p353 = pneg %p153
        $region30: #{net_tgcn_forward.1} parent=11 // pred_check_branch
          %355 = sbr.rel (%p353) target = $region32
        $region31: #{net_tgcn_forward.1} parent=11 // pred_region
          _
        $region32: #{net_tgcn_forward.1} parent=11 // pred_fallthru
          _
        // Predicated region
        $region33: #{net_tgcn_forward.1} parent=11 // pred_check
          %p356 = pneg %p174
        $region34: #{net_tgcn_forward.1} parent=11 // pred_check_branch
          %358 = sbr.rel (%p356) target = $region36
        $region35: #{net_tgcn_forward.1} parent=11 // pred_region
          _
        $region36: #{net_tgcn_forward.1} parent=11 // pred_fallthru
          _
        // Predicated region
        $region37: #{net_tgcn_forward.1} parent=11 // pred_check
          %p359 = pneg %p195
        $region38: #{net_tgcn_forward.1} parent=11 // pred_check_branch
          %361 = sbr.rel (%p359) target = $region40
        $region39: #{net_tgcn_forward.1} parent=11 // pred_region
          _
        $region40: #{net_tgcn_forward.1} parent=11 // pred_fallthru
          _
        // Predicated region
        $region41: #{net_tgcn_forward.1} parent=11 // pred_check
          %p362 = pneg %p216
        $region42: #{net_tgcn_forward.1} parent=11 // pred_check_branch
          %364 = sbr.rel (%p362) target = $region44
        $region43: #{net_tgcn_forward.1} parent=11 // pred_region
          _
        $region44: #{net_tgcn_forward.1} parent=11 // pred_fallthru
          _
        // Predicated region
        $region45: #{net_tgcn_forward.1} parent=11 // pred_check
          %p365 = pneg %p237
        $region46: #{net_tgcn_forward.1} parent=11 // pred_check_branch
          %367 = sbr.rel (%p365) target = $region48
        $region47: #{net_tgcn_forward.1} parent=11 // pred_region
          _
        $region48: #{net_tgcn_forward.1} parent=11 // pred_fallthru
          _
        // Predicated region
        $region49: #{net_tgcn_forward.1} parent=11 // pred_check
          %p368 = pneg %p258
        $region50: #{net_tgcn_forward.1} parent=11 // pred_check_branch
          %370 = sbr.rel (%p368) target = $region52
        $region51: #{net_tgcn_forward.1} parent=11 // pred_region
          _
        $region52: #{net_tgcn_forward.1} parent=11 // pred_fallthru
          _
        // Predicated region
        $region53: #{net_tgcn_forward.1} parent=11 // pred_check
          %p371 = pneg %p279
        $region54: #{net_tgcn_forward.1} parent=11 // pred_check_branch
          %373 = sbr.rel (%p371) target = $region56
        $region55: #{net_tgcn_forward.1} parent=11 // pred_region
          _
        $region56: #{net_tgcn_forward.1} parent=11 // pred_fallthru
          _
        // Predicated region
        $region57: #{net_tgcn_forward.1} parent=11 // pred_check
          %p374 = pneg %p300
        $region58: #{net_tgcn_forward.1} parent=11 // pred_check_branch
          %376 = sbr.rel (%p374) target = $region60
        $region59: #{net_tgcn_forward.1} parent=11 // pred_region
          _
        $region60: #{net_tgcn_forward.1} parent=11 // pred_fallthru
          _
      $region12: #{net_tgcn_forward.1} parent=5 // pred_fallthru
        _
      %p377 = scmp.lt.s32.totalorder %s22, 2
      // Predicated region
      $region61: #{net_tgcn_forward.1} parent=5 // pred_check
        %p378 = pneg %p377
      $region62: #{net_tgcn_forward.1} parent=5 // pred_check_branch
        %380 = sbr.rel (%p378) target = $region64
      $region63: #{net_tgcn_forward.1} parent=5 // pred_region
        // Predicated region
        $region65: #{net_tgcn_forward.1} parent=63 // pred_check
          %p381 = pneg %p42
        $region66: #{net_tgcn_forward.1} parent=63 // pred_check_branch
          %383 = sbr.rel (%p381) target = $region68
        $region67: #{net_tgcn_forward.1} parent=63 // pred_region
          %p384 = scmp.lt.s32.totalorder %s22, 1
          %s385 = scalar_select %p384, %s22, 1
          %s386 = smul.addr %s385, 8
          %s387 = smul.addr %s386, 8
          %s388 = scalar_lea.vmem %s0, %s387
        $region68: #{net_tgcn_forward.1} parent=63 // pred_fallthru
          _
      $region64: #{net_tgcn_forward.1} parent=5 // pred_fallthru
        _
      %p389 = scmp.le.s32.totalorder 1, %s22
      %p390 = scmp.lt.s32.totalorder %s22, 3
      %p391 = pnand %p389, %p390
      %p392 = pneg %p391
      // Predicated region
      $region69: #{net_tgcn_forward.1} parent=5 // pred_check
        _
      $region70: #{net_tgcn_forward.1} parent=5 // pred_check_branch
        %394 = sbr.rel (%p391) target = $region72
      $region71: #{net_tgcn_forward.1} parent=5 // pred_region
        %s395 = ssub.s32 %s22, 1
        %p396 = scmp.lt.s32.totalorder %s27, 1
        %s397 = scalar_select %p396, %s27, 1
        %s398 = smul.addr %s397, 8
        %s399 = smul.addr %s398, 8
        %s400 = scalar_lea.vmem %s0, %s399
        %p401 = pneg %p48
        %p402 = pneg %p45
        %p403 = pneg %p69
        %p404 = pneg %p66
        %p405 = pneg %p90
        %p406 = pneg %p87
        %p407 = pneg %p111
        %p408 = pneg %p108
        %p409 = pneg %p132
        %p410 = pneg %p129
        %p411 = pneg %p153
        %p412 = pneg %p150
        %p413 = pneg %p174
        %p414 = pneg %p171
        %p415 = pneg %p195
        %p416 = pneg %p192
        %p417 = pneg %p216
        %p418 = pneg %p213
        %p419 = pneg %p237
        %p420 = pneg %p234
        %p421 = pneg %p258
        %p422 = pneg %p255
        %p423 = pneg %p279
        %p424 = pneg %p276
        %p425 = pneg %p300
        %p426 = pneg %p297
        %p427 = pneg %p326
        %p428 = pneg %p323
        %s429 = sand.u32 %s313, 1
        %s430 = scalar_lea.sflag [#allocation5], %s429
        %s431 = sand.u32 %s313, 1
        %s432 = scalar_lea.vmem [#allocation4], %s431
        %p433 = scmp.lt.s32.totalorder %s27, 1
        %s434 = scalar_select %p433, %s27, 1
        %s435 = smul.addr %s434, 8
        %s436 = smul.addr %s435, 8
        %s437 = scalar_lea.vmem %s0, %s436
        %v438 = vld [vmem:[%s437] sm:$0xff]
        %v439 = vld [vmem:[%s437 + $0x8] sm:$0xff]
        %v440 = vld [vmem:[%s437 + $0x10] sm:$0xff]
        %v441 = vld [vmem:[%s437 + $0x18] sm:$0xff]
        %v442 = vld [vmem:[%s437 + $0x20] sm:$0xff]
        %v443 = vld [vmem:[%s437 + $0x28] sm:$0xff]
        %v444 = vld [vmem:[%s437 + $0x30] sm:$0xff]
        %v445 = vld [vmem:[%s437 + $0x38] sm:$0xff]
        %v446 = vld [vmem:[%s1] sm:$0xff]
        %v447 = vld [vmem:[%s1 + $0x8] sm:$0xff]
        %v448 = vld [vmem:[%s1 + $0x10] sm:$0xff]
        %v449 = vld [vmem:[%s1 + $0x18] sm:$0xff]
        %v450 = vld [vmem:[%s1 + $0x20] sm:$0xff]
        %v451 = vld [vmem:[%s1 + $0x28] sm:$0xff]
        %v452 = vld [vmem:[%s1 + $0x30] sm:$0xff]
        %v453 = vld [vmem:[%s1 + $0x38] sm:$0xff]
        %v454 = vld [vmem:[%s2] sm:$0xff]
        %v455 = vld [vmem:[%s2 + $0x8] sm:$0x7f]
        %vm456 = vcmask 523264
        %v458 = vsel %vm456, %v446, 0
        %v461 = vsel %vm456, %v447, 0
        %v464 = vsel %vm456, %v448, 0
        %v467 = vsel %vm456, %v449, 0
        %v470 = vsel %vm456, %v450, 0
        %v473 = vsel %vm456, %v451, 0
        %v476 = vsel %vm456, %v452, 0
        %v479 = vsel %vm456, %v453, 0
        %481 = vmatpush.msra.mxu0 0.0
        %482 = vmatpush.msra.mxu0 0.0
        %483 = vmatpush.msra.mxu0 0.0
        %484 = vmatpush.msra.mxu0 0.0
        %485 = vmatpush.msra.mxu0 0.0
        %486 = vmatpush.msra.mxu0 0.0
        %487 = vmatpush.msra.mxu0 0.0
        %488 = vmatpush.msra.mxu0 0.0
        %489 = vmatpush.msra.mxu0 %v445
        %490 = vmatpush.msra.mxu0 %v444
        %491 = vmatpush.msra.mxu0 %v443
        %492 = vmatpush.msra.mxu0 %v442
        %493 = vmatpush.msra.mxu0 %v441
        %494 = vmatpush.msra.mxu0 %v440
        %495 = vmatpush.msra.mxu0 %v439
        %496 = vmatpush.msra.mxu0 %v438
        %497 = vmatmul.f32.gmra.mxu0 %v458
        %v498 = vpop.f32.mrf.mxu0
        %v499 = vadd.f32 0.0, %v498
        %500 = vmatmul.f32.gmra.mxu0 %v461
        %v501 = vpop.f32.mrf.mxu0
        %v502 = vadd.f32 0.0, %v501
        %503 = vmatmul.f32.gmra.mxu0 %v464
        %v504 = vpop.f32.mrf.mxu0
        %v505 = vadd.f32 0.0, %v504
        %506 = vmatmul.f32.gmra.mxu0 %v467
        %v507 = vpop.f32.mrf.mxu0
        %v508 = vadd.f32 0.0, %v507
        %509 = vmatmul.f32.gmra.mxu0 %v470
        %v510 = vpop.f32.mrf.mxu0
        %v511 = vadd.f32 0.0, %v510
        %512 = vmatmul.f32.gmra.mxu0 %v473
        %v513 = vpop.f32.mrf.mxu0
        %v514 = vadd.f32 0.0, %v513
        %515 = vmatmul.f32.gmra.mxu0 %v476
        %v516 = vpop.f32.mrf.mxu0
        %v517 = vadd.f32 0.0, %v516
        %518 = vmatmul.f32.gmra.mxu0 %v479
        %v519 = vpop.f32.mrf.mxu0
        %v520 = vadd.f32 0.0, %v519
        %521 = vdwg.mxu0
        %s522 = scalar_lea.vmem %s2, 16
        %v523 = vld [vmem:[%s522] sm:$0xff]
        %v524 = vld [vmem:[%s522 + $0x8] sm:$0x7f]
        %vm525 = vcmask 121856
        %v527 = vsel %vm525, %v499, 0
        %v530 = vsel %vm525, %v502, 0
        %v533 = vsel %vm525, %v505, 0
        %v536 = vsel %vm525, %v508, 0
        %v539 = vsel %vm525, %v511, 0
        %v542 = vsel %vm525, %v514, 0
        %v545 = vsel %vm525, %v517, 0
        %v548 = vsel %vm525, %v520, 0
        %vm550 = vcmask 1046528
        %v552 = vsel %vm550, %v524, 0
        %554 = vmatpush.msra.mxu0 0.0
        %555 = vmatpush.msra.mxu0 0.0
        %556 = vmatpush.msra.mxu0 0.0
        %557 = vmatpush.msra.mxu0 0.0
        %558 = vmatpush.msra.mxu0 0.0
        %559 = vmatpush.msra.mxu0 0.0
        %560 = vmatpush.msra.mxu0 0.0
        %561 = vmatpush.msra.mxu0 0.0
        %562 = vmatpush.msra.mxu0 0.0
        %563 = vmatpush.msra.mxu0 0.0
        %564 = vmatpush.msra.mxu0 0.0
        %565 = vmatpush.msra.mxu0 0.0
        %566 = vmatpush.msra.mxu0 0.0
        %567 = vmatpush.msra.mxu0 0.0
        %568 = vmatpush.msra.mxu0 %v552
        %569 = vmatpush.msra.mxu0 %v523
        %570 = vmatmul.f32.gmra.mxu0 %v527
        %v571 = vpop.f32.mrf.mxu0
        %v572 = vadd.f32 0.0, %v571
        %573 = vmatmul.f32.gmra.mxu0 %v530
        %v574 = vpop.f32.mrf.mxu0
        %v575 = vadd.f32 0.0, %v574
        %576 = vmatmul.f32.gmra.mxu0 %v533
        %v577 = vpop.f32.mrf.mxu0
        %v578 = vadd.f32 0.0, %v577
        %579 = vmatmul.f32.gmra.mxu0 %v536
        %v580 = vpop.f32.mrf.mxu0
        %v581 = vadd.f32 0.0, %v580
        %582 = vmatmul.f32.gmra.mxu0 %v539
        %v583 = vpop.f32.mrf.mxu0
        %v584 = vadd.f32 0.0, %v583
        %585 = vmatmul.f32.gmra.mxu0 %v542
        %v586 = vpop.f32.mrf.mxu0
        %v587 = vadd.f32 0.0, %v586
        %588 = vmatmul.f32.gmra.mxu0 %v545
        %v589 = vpop.f32.mrf.mxu0
        %v590 = vadd.f32 0.0, %v589
        %591 = vmatmul.f32.gmra.mxu0 %v548
        %v592 = vpop.f32.mrf.mxu0
        %v593 = vadd.f32 0.0, %v592
        %594 = vdwg.mxu0
        %v596 = vsel %vm525, %v438, 0
        %v599 = vsel %vm525, %v439, 0
        %v602 = vsel %vm525, %v440, 0
        %v605 = vsel %vm525, %v441, 0
        %v608 = vsel %vm525, %v442, 0
        %v611 = vsel %vm525, %v443, 0
        %v614 = vsel %vm525, %v444, 0
        %v617 = vsel %vm525, %v445, 0
        %v620 = vsel %vm550, %v455, 0
        %622 = vmatpush.msra.mxu0 0.0
        %623 = vmatpush.msra.mxu0 0.0
        %624 = vmatpush.msra.mxu0 0.0
        %625 = vmatpush.msra.mxu0 0.0
        %626 = vmatpush.msra.mxu0 0.0
        %627 = vmatpush.msra.mxu0 0.0
        %628 = vmatpush.msra.mxu0 0.0
        %629 = vmatpush.msra.mxu0 0.0
        %630 = vmatpush.msra.mxu0 0.0
        %631 = vmatpush.msra.mxu0 0.0
        %632 = vmatpush.msra.mxu0 0.0
        %633 = vmatpush.msra.mxu0 0.0
        %634 = vmatpush.msra.mxu0 0.0
        %635 = vmatpush.msra.mxu0 0.0
        %636 = vmatpush.msra.mxu0 %v620
        %637 = vmatpush.msra.mxu0 %v454
        %638 = vmatmul.f32.gmra.mxu0 %v596
        %v639 = vpop.f32.mrf.mxu0
        %v640 = vadd.f32 %v572, %v639
        %641 = vmatmul.f32.gmra.mxu0 %v599
        %v642 = vpop.f32.mrf.mxu0
        %v643 = vadd.f32 %v575, %v642
        %644 = vmatmul.f32.gmra.mxu0 %v602
        %v645 = vpop.f32.mrf.mxu0
        %v646 = vadd.f32 %v578, %v645
        %647 = vmatmul.f32.gmra.mxu0 %v605
        %v648 = vpop.f32.mrf.mxu0
        %v649 = vadd.f32 %v581, %v648
        %650 = vmatmul.f32.gmra.mxu0 %v608
        %v651 = vpop.f32.mrf.mxu0
        %v652 = vadd.f32 %v584, %v651
        %653 = vmatmul.f32.gmra.mxu0 %v611
        %v654 = vpop.f32.mrf.mxu0
        %v655 = vadd.f32 %v587, %v654
        %656 = vmatmul.f32.gmra.mxu0 %v614
        %v657 = vpop.f32.mrf.mxu0
        %v658 = vadd.f32 %v590, %v657
        %659 = vmatmul.f32.gmra.mxu0 %v617
        %v660 = vpop.f32.mrf.mxu0
        %v661 = vadd.f32 %v593, %v660
        %662 = vdwg.mxu0
        %663 = vmatpush.msra.mxu0 0.0
        %664 = vmatpush.msra.mxu0 0.0
        %665 = vmatpush.msra.mxu0 0.0
        %666 = vmatpush.msra.mxu0 0.0
        %667 = vmatpush.msra.mxu0 0.0
        %668 = vmatpush.msra.mxu0 0.0
        %669 = vmatpush.msra.mxu0 0.0
        %670 = vmatpush.msra.mxu0 0.0
        %671 = vmatpush.msra.mxu0 %v520
        %672 = vmatpush.msra.mxu0 %v517
        %673 = vmatpush.msra.mxu0 %v514
        %674 = vmatpush.msra.mxu0 %v511
        %675 = vmatpush.msra.mxu0 %v508
        %676 = vmatpush.msra.mxu0 %v505
        %677 = vmatpush.msra.mxu0 %v502
        %678 = vmatpush.msra.mxu0 %v499
        %679 = vmatmul.f32.gmra.mxu0 %v458
        %v680 = vpop.f32.mrf.mxu0
        %v681 = vadd.f32 0.0, %v680
        %682 = vmatmul.f32.gmra.mxu0 %v461
        %v683 = vpop.f32.mrf.mxu0
        %v684 = vadd.f32 0.0, %v683
        %685 = vmatmul.f32.gmra.mxu0 %v464
        %v686 = vpop.f32.mrf.mxu0
        %v687 = vadd.f32 0.0, %v686
        %688 = vmatmul.f32.gmra.mxu0 %v467
        %v689 = vpop.f32.mrf.mxu0
        %v690 = vadd.f32 0.0, %v689
        %691 = vmatmul.f32.gmra.mxu0 %v470
        %v692 = vpop.f32.mrf.mxu0
        %v693 = vadd.f32 0.0, %v692
        %694 = vmatmul.f32.gmra.mxu0 %v473
        %v695 = vpop.f32.mrf.mxu0
        %v696 = vadd.f32 0.0, %v695
        %697 = vmatmul.f32.gmra.mxu0 %v476
        %v698 = vpop.f32.mrf.mxu0
        %v699 = vadd.f32 0.0, %v698
        %700 = vmatmul.f32.gmra.mxu0 %v479
        %v701 = vpop.f32.mrf.mxu0
        %v702 = vadd.f32 0.0, %v701
        %703 = vdwg.mxu0
        %v704 = vmul.f32 %v681, 2.0
        %v705 = vmul.f32 %v684, 2.0
        %v706 = vmul.f32 %v687, 2.0
        %v707 = vmul.f32 %v690, 2.0
        %v708 = vmul.f32 %v693, 2.0
        %v709 = vmul.f32 %v696, 2.0
        %v710 = vmul.f32 %v699, 2.0
        %v711 = vmul.f32 %v702, 2.0
        %v712 = vsub.f32 %v704, %v438
        %v713 = vsub.f32 %v705, %v439
        %v714 = vsub.f32 %v706, %v440
        %v715 = vsub.f32 %v707, %v441
        %v716 = vsub.f32 %v708, %v442
        %v717 = vsub.f32 %v709, %v443
        %v718 = vsub.f32 %v710, %v444
        %v719 = vsub.f32 %v711, %v445
        %s720 = scalar_lea.vmem %s2, 32
        %v721 = vld [vmem:[%s720] sm:$0xff]
        %v722 = vld [vmem:[%s720 + $0x8] sm:$0x7f]
        %v724 = vsel %vm525, %v712, 0
        %v727 = vsel %vm525, %v713, 0
        %v730 = vsel %vm525, %v714, 0
        %v733 = vsel %vm525, %v715, 0
        %v736 = vsel %vm525, %v716, 0
        %v739 = vsel %vm525, %v717, 0
        %v742 = vsel %vm525, %v718, 0
        %v745 = vsel %vm525, %v719, 0
        %v748 = vsel %vm550, %v722, 0
        %750 = vmatpush.msra.mxu0 0.0
        %751 = vmatpush.msra.mxu0 0.0
        %752 = vmatpush.msra.mxu0 0.0
        %753 = vmatpush.msra.mxu0 0.0
        %754 = vmatpush.msra.mxu0 0.0
        %755 = vmatpush.msra.mxu0 0.0
        %756 = vmatpush.msra.mxu0 0.0
        %757 = vmatpush.msra.mxu0 0.0
        %758 = vmatpush.msra.mxu0 0.0
        %759 = vmatpush.msra.mxu0 0.0
        %760 = vmatpush.msra.mxu0 0.0
        %761 = vmatpush.msra.mxu0 0.0
        %762 = vmatpush.msra.mxu0 0.0
        %763 = vmatpush.msra.mxu0 0.0
        %764 = vmatpush.msra.mxu0 %v748
        %765 = vmatpush.msra.mxu0 %v721
        %766 = vmatmul.f32.gmra.mxu0 %v724
        %v767 = vpop.f32.mrf.mxu0
        %v768 = vadd.f32 0.0, %v767
        %769 = vmatmul.f32.gmra.mxu0 %v727
        %v770 = vpop.f32.mrf.mxu0
        %v771 = vadd.f32 0.0, %v770
        %772 = vmatmul.f32.gmra.mxu0 %v730
        %v773 = vpop.f32.mrf.mxu0
        %v774 = vadd.f32 0.0, %v773
        %775 = vmatmul.f32.gmra.mxu0 %v733
        %v776 = vpop.f32.mrf.mxu0
        %v777 = vadd.f32 0.0, %v776
        %778 = vmatmul.f32.gmra.mxu0 %v736
        %v779 = vpop.f32.mrf.mxu0
        %v780 = vadd.f32 0.0, %v779
        %781 = vmatmul.f32.gmra.mxu0 %v739
        %v782 = vpop.f32.mrf.mxu0
        %v783 = vadd.f32 0.0, %v782
        %784 = vmatmul.f32.gmra.mxu0 %v742
        %v785 = vpop.f32.mrf.mxu0
        %v786 = vadd.f32 0.0, %v785
        %787 = vmatmul.f32.gmra.mxu0 %v745
        %v788 = vpop.f32.mrf.mxu0
        %v789 = vadd.f32 0.0, %v788
        %790 = vdwg.mxu0
        %v791 = vadd.f32 %v640, %v768
        %v792 = vadd.f32 %v643, %v771
        %v793 = vadd.f32 %v646, %v774
        %v794 = vadd.f32 %v649, %v777
        %v795 = vadd.f32 %v652, %v780
        %v796 = vadd.f32 %v655, %v783
        %v797 = vadd.f32 %v658, %v786
        %v798 = vadd.f32 %v661, %v789
        %799 = vmatpush.msra.mxu0 0.0
        %800 = vmatpush.msra.mxu0 0.0
        %801 = vmatpush.msra.mxu0 0.0
        %802 = vmatpush.msra.mxu0 0.0
        %803 = vmatpush.msra.mxu0 0.0
        %804 = vmatpush.msra.mxu0 0.0
        %805 = vmatpush.msra.mxu0 0.0
        %806 = vmatpush.msra.mxu0 0.0
        %807 = vmatpush.msra.mxu0 %v719
        %808 = vmatpush.msra.mxu0 %v718
        %809 = vmatpush.msra.mxu0 %v717
        %810 = vmatpush.msra.mxu0 %v716
        %811 = vmatpush.msra.mxu0 %v715
        %812 = vmatpush.msra.mxu0 %v714
        %813 = vmatpush.msra.mxu0 %v713
        %814 = vmatpush.msra.mxu0 %v712
        %815 = vmatmul.f32.gmra.mxu0 %v458
        %v816 = vpop.f32.mrf.mxu0
        %v817 = vadd.f32 0.0, %v816
        %818 = vmatmul.f32.gmra.mxu0 %v461
        %v819 = vpop.f32.mrf.mxu0
        %v820 = vadd.f32 0.0, %v819
        %821 = vmatmul.f32.gmra.mxu0 %v464
        %v822 = vpop.f32.mrf.mxu0
        %v823 = vadd.f32 0.0, %v822
        %824 = vmatmul.f32.gmra.mxu0 %v467
        %v825 = vpop.f32.mrf.mxu0
        %v826 = vadd.f32 0.0, %v825
        %827 = vmatmul.f32.gmra.mxu0 %v470
        %v828 = vpop.f32.mrf.mxu0
        %v829 = vadd.f32 0.0, %v828
        %830 = vmatmul.f32.gmra.mxu0 %v473
        %v831 = vpop.f32.mrf.mxu0
        %v832 = vadd.f32 0.0, %v831
        %833 = vmatmul.f32.gmra.mxu0 %v476
        %v834 = vpop.f32.mrf.mxu0
        %v835 = vadd.f32 0.0, %v834
        %836 = vmatmul.f32.gmra.mxu0 %v479
        %v837 = vpop.f32.mrf.mxu0
        %v838 = vadd.f32 0.0, %v837
        %839 = vdwg.mxu0
        %v840 = vmul.f32 %v817, 2.0
        %v841 = vmul.f32 %v820, 2.0
        %v842 = vmul.f32 %v823, 2.0
        %v843 = vmul.f32 %v826, 2.0
        %v844 = vmul.f32 %v829, 2.0
        %v845 = vmul.f32 %v832, 2.0
        %v846 = vmul.f32 %v835, 2.0
        %v847 = vmul.f32 %v838, 2.0
        %v848 = vsub.f32 %v840, %v499
        %v849 = vsub.f32 %v841, %v502
        %v850 = vsub.f32 %v842, %v505
        %v851 = vsub.f32 %v843, %v508
        %v852 = vsub.f32 %v844, %v511
        %v853 = vsub.f32 %v845, %v514
        %v854 = vsub.f32 %v846, %v517
        %v855 = vsub.f32 %v847, %v520
        %s856 = scalar_lea.vmem %s2, 48
        %v857 = vld [vmem:[%s856] sm:$0xff]
        %v858 = vld [vmem:[%s856 + $0x8] sm:$0x7f]
        %v860 = vsel %vm525, %v848, 0
        %v863 = vsel %vm525, %v849, 0
        %v866 = vsel %vm525, %v850, 0
        %v869 = vsel %vm525, %v851, 0
        %v872 = vsel %vm525, %v852, 0
        %v875 = vsel %vm525, %v853, 0
        %v878 = vsel %vm525, %v854, 0
        %v881 = vsel %vm525, %v855, 0
        %v884 = vsel %vm550, %v858, 0
        %886 = vmatpush.msra.mxu0 0.0
        %887 = vmatpush.msra.mxu0 0.0
        %888 = vmatpush.msra.mxu0 0.0
        %889 = vmatpush.msra.mxu0 0.0
        %890 = vmatpush.msra.mxu0 0.0
        %891 = vmatpush.msra.mxu0 0.0
        %892 = vmatpush.msra.mxu0 0.0
        %893 = vmatpush.msra.mxu0 0.0
        %894 = vmatpush.msra.mxu0 0.0
        %895 = vmatpush.msra.mxu0 0.0
        %896 = vmatpush.msra.mxu0 0.0
        %897 = vmatpush.msra.mxu0 0.0
        %898 = vmatpush.msra.mxu0 0.0
        %899 = vmatpush.msra.mxu0 0.0
        %900 = vmatpush.msra.mxu0 %v884
        %901 = vmatpush.msra.mxu0 %v857
        %902 = vmatmul.f32.gmra.mxu0 %v860
        %v903 = vpop.f32.mrf.mxu0
        %v904 = vadd.f32 0.0, %v903
        %905 = vmatmul.f32.gmra.mxu0 %v863
        %v906 = vpop.f32.mrf.mxu0
        %v907 = vadd.f32 0.0, %v906
        %908 = vmatmul.f32.gmra.mxu0 %v866
        %v909 = vpop.f32.mrf.mxu0
        %v910 = vadd.f32 0.0, %v909
        %911 = vmatmul.f32.gmra.mxu0 %v869
        %v912 = vpop.f32.mrf.mxu0
        %v913 = vadd.f32 0.0, %v912
        %914 = vmatmul.f32.gmra.mxu0 %v872
        %v915 = vpop.f32.mrf.mxu0
        %v916 = vadd.f32 0.0, %v915
        %917 = vmatmul.f32.gmra.mxu0 %v875
        %v918 = vpop.f32.mrf.mxu0
        %v919 = vadd.f32 0.0, %v918
        %920 = vmatmul.f32.gmra.mxu0 %v878
        %v921 = vpop.f32.mrf.mxu0
        %v922 = vadd.f32 0.0, %v921
        %923 = vmatmul.f32.gmra.mxu0 %v881
        %v924 = vpop.f32.mrf.mxu0
        %v925 = vadd.f32 0.0, %v924
        %926 = vdwg.mxu0
        %v927 = vadd.f32 %v791, %v904
        %v928 = vadd.f32 %v792, %v907
        %v929 = vadd.f32 %v793, %v910
        %v930 = vadd.f32 %v794, %v913
        %v931 = vadd.f32 %v795, %v916
        %v932 = vadd.f32 %v796, %v919
        %v933 = vadd.f32 %v797, %v922
        %v934 = vadd.f32 %v798, %v925
        %935 = vmatpush.msra.mxu0 0.0
        %936 = vmatpush.msra.mxu0 0.0
        %937 = vmatpush.msra.mxu0 0.0
        %938 = vmatpush.msra.mxu0 0.0
        %939 = vmatpush.msra.mxu0 0.0
        %940 = vmatpush.msra.mxu0 0.0
        %941 = vmatpush.msra.mxu0 0.0
        %942 = vmatpush.msra.mxu0 0.0
        %943 = vmatpush.msra.mxu0 %v855
        %944 = vmatpush.msra.mxu0 %v854
        %945 = vmatpush.msra.mxu0 %v853
        %946 = vmatpush.msra.mxu0 %v852
        %947 = vmatpush.msra.mxu0 %v851
        %948 = vmatpush.msra.mxu0 %v850
        %949 = vmatpush.msra.mxu0 %v849
        %950 = vmatpush.msra.mxu0 %v848
        %951 = vmatmul.f32.gmra.mxu0 %v458
        %v952 = vpop.f32.mrf.mxu0
        %v953 = vadd.f32 0.0, %v952
        %954 = vmatmul.f32.gmra.mxu0 %v461
        %v955 = vpop.f32.mrf.mxu0
        %v956 = vadd.f32 0.0, %v955
        %957 = vmatmul.f32.gmra.mxu0 %v464
        %v958 = vpop.f32.mrf.mxu0
        %v959 = vadd.f32 0.0, %v958
        %960 = vmatmul.f32.gmra.mxu0 %v467
        %v961 = vpop.f32.mrf.mxu0
        %v962 = vadd.f32 0.0, %v961
        %963 = vmatmul.f32.gmra.mxu0 %v470
        %v964 = vpop.f32.mrf.mxu0
        %v965 = vadd.f32 0.0, %v964
        %966 = vmatmul.f32.gmra.mxu0 %v473
        %v967 = vpop.f32.mrf.mxu0
        %v968 = vadd.f32 0.0, %v967
        %969 = vmatmul.f32.gmra.mxu0 %v476
        %v970 = vpop.f32.mrf.mxu0
        %v971 = vadd.f32 0.0, %v970
        %972 = vmatmul.f32.gmra.mxu0 %v479
        %v973 = vpop.f32.mrf.mxu0
        %v974 = vadd.f32 0.0, %v973
        %975 = vdwg.mxu0
        %v976 = vmul.f32 %v953, 2.0
        %v977 = vmul.f32 %v956, 2.0
        %v978 = vmul.f32 %v959, 2.0
        %v979 = vmul.f32 %v962, 2.0
        %v980 = vmul.f32 %v965, 2.0
        %v981 = vmul.f32 %v968, 2.0
        %v982 = vmul.f32 %v971, 2.0
        %v983 = vmul.f32 %v974, 2.0
        %v984 = vsub.f32 %v976, %v712
        %v985 = vsub.f32 %v977, %v713
        %v986 = vsub.f32 %v978, %v714
        %v987 = vsub.f32 %v979, %v715
        %v988 = vsub.f32 %v980, %v716
        %v989 = vsub.f32 %v981, %v717
        %v990 = vsub.f32 %v982, %v718
        %v991 = vsub.f32 %v983, %v719
        %s992 = scalar_lea.vmem %s2, 64
        %v993 = vld [vmem:[%s992] sm:$0xff]
        %v994 = vld [vmem:[%s992 + $0x8] sm:$0x7f]
        %v996 = vsel %vm525, %v984, 0
        %v999 = vsel %vm525, %v985, 0
        %v1002 = vsel %vm525, %v986, 0
        %v1005 = vsel %vm525, %v987, 0
        %v1008 = vsel %vm525, %v988, 0
        %v1011 = vsel %vm525, %v989, 0
        %v1014 = vsel %vm525, %v990, 0
        %v1017 = vsel %vm525, %v991, 0
        %v1020 = vsel %vm550, %v994, 0
        %1022 = vmatpush.msra.mxu0 0.0
        %1023 = vmatpush.msra.mxu0 0.0
        %1024 = vmatpush.msra.mxu0 0.0
        %1025 = vmatpush.msra.mxu0 0.0
        %1026 = vmatpush.msra.mxu0 0.0
        %1027 = vmatpush.msra.mxu0 0.0
        %1028 = vmatpush.msra.mxu0 0.0
        %1029 = vmatpush.msra.mxu0 0.0
        %1030 = vmatpush.msra.mxu0 0.0
        %1031 = vmatpush.msra.mxu0 0.0
        %1032 = vmatpush.msra.mxu0 0.0
        %1033 = vmatpush.msra.mxu0 0.0
        %1034 = vmatpush.msra.mxu0 0.0
        %1035 = vmatpush.msra.mxu0 0.0
        %1036 = vmatpush.msra.mxu0 %v1020
        %1037 = vmatpush.msra.mxu0 %v993
        %1038 = vmatmul.f32.gmra.mxu0 %v996
        %v1039 = vpop.f32.mrf.mxu0
        %v1040 = vadd.f32 0.0, %v1039
        %1041 = vmatmul.f32.gmra.mxu0 %v999
        %v1042 = vpop.f32.mrf.mxu0
        %v1043 = vadd.f32 0.0, %v1042
        %1044 = vmatmul.f32.gmra.mxu0 %v1002
        %v1045 = vpop.f32.mrf.mxu0
        %v1046 = vadd.f32 0.0, %v1045
        %1047 = vmatmul.f32.gmra.mxu0 %v1005
        %v1048 = vpop.f32.mrf.mxu0
        %v1049 = vadd.f32 0.0, %v1048
        %1050 = vmatmul.f32.gmra.mxu0 %v1008
        %v1051 = vpop.f32.mrf.mxu0
        %v1052 = vadd.f32 0.0, %v1051
        %1053 = vmatmul.f32.gmra.mxu0 %v1011
        %v1054 = vpop.f32.mrf.mxu0
        %v1055 = vadd.f32 0.0, %v1054
        %1056 = vmatmul.f32.gmra.mxu0 %v1014
        %v1057 = vpop.f32.mrf.mxu0
        %v1058 = vadd.f32 0.0, %v1057
        %1059 = vmatmul.f32.gmra.mxu0 %v1017
        %v1060 = vpop.f32.mrf.mxu0
        %v1061 = vadd.f32 0.0, %v1060
        %1062 = vdwg.mxu0
        %v1063 = vadd.f32 %v927, %v1040
        %v1064 = vadd.f32 %v928, %v1043
        %v1065 = vadd.f32 %v929, %v1046
        %v1066 = vadd.f32 %v930, %v1049
        %v1067 = vadd.f32 %v931, %v1052
        %v1068 = vadd.f32 %v932, %v1055
        %v1069 = vadd.f32 %v933, %v1058
        %v1070 = vadd.f32 %v934, %v1061
        %1071 = vmatpush.msra.mxu0 0.0
        %1072 = vmatpush.msra.mxu0 0.0
        %1073 = vmatpush.msra.mxu0 0.0
        %1074 = vmatpush.msra.mxu0 0.0
        %1075 = vmatpush.msra.mxu0 0.0
        %1076 = vmatpush.msra.mxu0 0.0
        %1077 = vmatpush.msra.mxu0 0.0
        %1078 = vmatpush.msra.mxu0 0.0
        %1079 = vmatpush.msra.mxu0 %v991
        %1080 = vmatpush.msra.mxu0 %v990
        %1081 = vmatpush.msra.mxu0 %v989
        %1082 = vmatpush.msra.mxu0 %v988
        %1083 = vmatpush.msra.mxu0 %v987
        %1084 = vmatpush.msra.mxu0 %v986
        %1085 = vmatpush.msra.mxu0 %v985
        %1086 = vmatpush.msra.mxu0 %v984
        %1087 = vmatmul.f32.gmra.mxu0 %v458
        %v1088 = vpop.f32.mrf.mxu0
        %v1089 = vadd.f32 0.0, %v1088
        %1090 = vmatmul.f32.gmra.mxu0 %v461
        %v1091 = vpop.f32.mrf.mxu0
        %v1092 = vadd.f32 0.0, %v1091
        %1093 = vmatmul.f32.gmra.mxu0 %v464
        %v1094 = vpop.f32.mrf.mxu0
        %v1095 = vadd.f32 0.0, %v1094
        %1096 = vmatmul.f32.gmra.mxu0 %v467
        %v1097 = vpop.f32.mrf.mxu0
        %v1098 = vadd.f32 0.0, %v1097
        %1099 = vmatmul.f32.gmra.mxu0 %v470
        %v1100 = vpop.f32.mrf.mxu0
        %v1101 = vadd.f32 0.0, %v1100
        %1102 = vmatmul.f32.gmra.mxu0 %v473
        %v1103 = vpop.f32.mrf.mxu0
        %v1104 = vadd.f32 0.0, %v1103
        %1105 = vmatmul.f32.gmra.mxu0 %v476
        %v1106 = vpop.f32.mrf.mxu0
        %v1107 = vadd.f32 0.0, %v1106
        %1108 = vmatmul.f32.gmra.mxu0 %v479
        %v1109 = vpop.f32.mrf.mxu0
        %v1110 = vadd.f32 0.0, %v1109
        %1111 = vdwg.mxu0
        %v1112 = vmul.f32 %v1089, 2.0
        %v1113 = vmul.f32 %v1092, 2.0
        %v1114 = vmul.f32 %v1095, 2.0
        %v1115 = vmul.f32 %v1098, 2.0
        %v1116 = vmul.f32 %v1101, 2.0
        %v1117 = vmul.f32 %v1104, 2.0
        %v1118 = vmul.f32 %v1107, 2.0
        %v1119 = vmul.f32 %v1110, 2.0
        %v1120 = vsub.f32 %v1112, %v848
        %v1121 = vsub.f32 %v1113, %v849
        %v1122 = vsub.f32 %v1114, %v850
        %v1123 = vsub.f32 %v1115, %v851
        %v1124 = vsub.f32 %v1116, %v852
        %v1125 = vsub.f32 %v1117, %v853
        %v1126 = vsub.f32 %v1118, %v854
        %v1127 = vsub.f32 %v1119, %v855
        %s1128 = scalar_lea.vmem %s2, 80
        %v1129 = vld [vmem:[%s1128] sm:$0xff]
        %v1130 = vld [vmem:[%s1128 + $0x8] sm:$0x7f]
        %v1132 = vsel %vm525, %v1120, 0
        %v1135 = vsel %vm525, %v1121, 0
        %v1138 = vsel %vm525, %v1122, 0
        %v1141 = vsel %vm525, %v1123, 0
        %v1144 = vsel %vm525, %v1124, 0
        %v1147 = vsel %vm525, %v1125, 0
        %v1150 = vsel %vm525, %v1126, 0
        %v1153 = vsel %vm525, %v1127, 0
        %v1156 = vsel %vm550, %v1130, 0
        %1158 = vmatpush.msra.mxu0 0.0
        %1159 = vmatpush.msra.mxu0 0.0
        %1160 = vmatpush.msra.mxu0 0.0
        %1161 = vmatpush.msra.mxu0 0.0
        %1162 = vmatpush.msra.mxu0 0.0
        %1163 = vmatpush.msra.mxu0 0.0
        %1164 = vmatpush.msra.mxu0 0.0
        %1165 = vmatpush.msra.mxu0 0.0
        %1166 = vmatpush.msra.mxu0 0.0
        %1167 = vmatpush.msra.mxu0 0.0
        %1168 = vmatpush.msra.mxu0 0.0
        %1169 = vmatpush.msra.mxu0 0.0
        %1170 = vmatpush.msra.mxu0 0.0
        %1171 = vmatpush.msra.mxu0 0.0
        %1172 = vmatpush.msra.mxu0 %v1156
        %1173 = vmatpush.msra.mxu0 %v1129
        %1174 = vmatmul.f32.gmra.mxu0 %v1132
        %v1175 = vpop.f32.mrf.mxu0
        %v1176 = vadd.f32 0.0, %v1175
        %1177 = vmatmul.f32.gmra.mxu0 %v1135
        %v1178 = vpop.f32.mrf.mxu0
        %v1179 = vadd.f32 0.0, %v1178
        %1180 = vmatmul.f32.gmra.mxu0 %v1138
        %v1181 = vpop.f32.mrf.mxu0
        %v1182 = vadd.f32 0.0, %v1181
        %1183 = vmatmul.f32.gmra.mxu0 %v1141
        %v1184 = vpop.f32.mrf.mxu0
        %v1185 = vadd.f32 0.0, %v1184
        %1186 = vmatmul.f32.gmra.mxu0 %v1144
        %v1187 = vpop.f32.mrf.mxu0
        %v1188 = vadd.f32 0.0, %v1187
        %1189 = vmatmul.f32.gmra.mxu0 %v1147
        %v1190 = vpop.f32.mrf.mxu0
        %v1191 = vadd.f32 0.0, %v1190
        %1192 = vmatmul.f32.gmra.mxu0 %v1150
        %v1193 = vpop.f32.mrf.mxu0
        %v1194 = vadd.f32 0.0, %v1193
        %1195 = vmatmul.f32.gmra.mxu0 %v1153
        %v1196 = vpop.f32.mrf.mxu0
        %v1197 = vadd.f32 0.0, %v1196
        %1198 = vdwg.mxu0
        %v1199 = vadd.f32 %v1063, %v1176
        %v1200 = vadd.f32 %v1064, %v1179
        %v1201 = vadd.f32 %v1065, %v1182
        %v1202 = vadd.f32 %v1066, %v1185
        %v1203 = vadd.f32 %v1067, %v1188
        %v1204 = vadd.f32 %v1068, %v1191
        %v1205 = vadd.f32 %v1069, %v1194
        %v1206 = vadd.f32 %v1070, %v1197
        %1207 = vmatpush.msra.mxu0 0.0
        %1208 = vmatpush.msra.mxu0 0.0
        %1209 = vmatpush.msra.mxu0 0.0
        %1210 = vmatpush.msra.mxu0 0.0
        %1211 = vmatpush.msra.mxu0 0.0
        %1212 = vmatpush.msra.mxu0 0.0
        %1213 = vmatpush.msra.mxu0 0.0
        %1214 = vmatpush.msra.mxu0 0.0
        %1215 = vmatpush.msra.mxu0 %v1127
        %1216 = vmatpush.msra.mxu0 %v1126
        %1217 = vmatpush.msra.mxu0 %v1125
        %1218 = vmatpush.msra.mxu0 %v1124
        %1219 = vmatpush.msra.mxu0 %v1123
        %1220 = vmatpush.msra.mxu0 %v1122
        %1221 = vmatpush.msra.mxu0 %v1121
        %1222 = vmatpush.msra.mxu0 %v1120
        %1223 = vmatmul.f32.gmra.mxu0 %v458
        %v1224 = vpop.f32.mrf.mxu0
        %v1225 = vadd.f32 0.0, %v1224
        %1226 = vmatmul.f32.gmra.mxu0 %v461
        %v1227 = vpop.f32.mrf.mxu0
        %v1228 = vadd.f32 0.0, %v1227
        %1229 = vmatmul.f32.gmra.mxu0 %v464
        %v1230 = vpop.f32.mrf.mxu0
        %v1231 = vadd.f32 0.0, %v1230
        %1232 = vmatmul.f32.gmra.mxu0 %v467
        %v1233 = vpop.f32.mrf.mxu0
        %v1234 = vadd.f32 0.0, %v1233
        %1235 = vmatmul.f32.gmra.mxu0 %v470
        %v1236 = vpop.f32.mrf.mxu0
        %v1237 = vadd.f32 0.0, %v1236
        %1238 = vmatmul.f32.gmra.mxu0 %v473
        %v1239 = vpop.f32.mrf.mxu0
        %v1240 = vadd.f32 0.0, %v1239
        %1241 = vmatmul.f32.gmra.mxu0 %v476
        %v1242 = vpop.f32.mrf.mxu0
        %v1243 = vadd.f32 0.0, %v1242
        %1244 = vmatmul.f32.gmra.mxu0 %v479
        %v1245 = vpop.f32.mrf.mxu0
        %v1246 = vadd.f32 0.0, %v1245
        %1247 = vdwg.mxu0
        %v1248 = vmul.f32 %v1225, 2.0
        %v1249 = vmul.f32 %v1228, 2.0
        %v1250 = vmul.f32 %v1231, 2.0
        %v1251 = vmul.f32 %v1234, 2.0
        %v1252 = vmul.f32 %v1237, 2.0
        %v1253 = vmul.f32 %v1240, 2.0
        %v1254 = vmul.f32 %v1243, 2.0
        %v1255 = vmul.f32 %v1246, 2.0
        %v1256 = vsub.f32 %v1248, %v984
        %v1257 = vsub.f32 %v1249, %v985
        %v1258 = vsub.f32 %v1250, %v986
        %v1259 = vsub.f32 %v1251, %v987
        %v1260 = vsub.f32 %v1252, %v988
        %v1261 = vsub.f32 %v1253, %v989
        %v1262 = vsub.f32 %v1254, %v990
        %v1263 = vsub.f32 %v1255, %v991
        %s1264 = scalar_lea.vmem %s2, 96
        %v1265 = vld [vmem:[%s1264] sm:$0xff]
        %v1266 = vld [vmem:[%s1264 + $0x8] sm:$0x7f]
        %v1268 = vsel %vm525, %v1256, 0
        %v1271 = vsel %vm525, %v1257, 0
        %v1274 = vsel %vm525, %v1258, 0
        %v1277 = vsel %vm525, %v1259, 0
        %v1280 = vsel %vm525, %v1260, 0
        %v1283 = vsel %vm525, %v1261, 0
        %v1286 = vsel %vm525, %v1262, 0
        %v1289 = vsel %vm525, %v1263, 0
        %v1292 = vsel %vm550, %v1266, 0
        %1294 = vmatpush.msra.mxu0 0.0
        %1295 = vmatpush.msra.mxu0 0.0
        %1296 = vmatpush.msra.mxu0 0.0
        %1297 = vmatpush.msra.mxu0 0.0
        %1298 = vmatpush.msra.mxu0 0.0
        %1299 = vmatpush.msra.mxu0 0.0
        %1300 = vmatpush.msra.mxu0 0.0
        %1301 = vmatpush.msra.mxu0 0.0
        %1302 = vmatpush.msra.mxu0 0.0
        %1303 = vmatpush.msra.mxu0 0.0
        %1304 = vmatpush.msra.mxu0 0.0
        %1305 = vmatpush.msra.mxu0 0.0
        %1306 = vmatpush.msra.mxu0 0.0
        %1307 = vmatpush.msra.mxu0 0.0
        %1308 = vmatpush.msra.mxu0 %v1292
        %1309 = vmatpush.msra.mxu0 %v1265
        %1310 = vmatmul.f32.gmra.mxu0 %v1268
        %v1311 = vpop.f32.mrf.mxu0
        %v1312 = vadd.f32 0.0, %v1311
        %1313 = vmatmul.f32.gmra.mxu0 %v1271
        %v1314 = vpop.f32.mrf.mxu0
        %v1315 = vadd.f32 0.0, %v1314
        %1316 = vmatmul.f32.gmra.mxu0 %v1274
        %v1317 = vpop.f32.mrf.mxu0
        %v1318 = vadd.f32 0.0, %v1317
        %1319 = vmatmul.f32.gmra.mxu0 %v1277
        %v1320 = vpop.f32.mrf.mxu0
        %v1321 = vadd.f32 0.0, %v1320
        %1322 = vmatmul.f32.gmra.mxu0 %v1280
        %v1323 = vpop.f32.mrf.mxu0
        %v1324 = vadd.f32 0.0, %v1323
        %1325 = vmatmul.f32.gmra.mxu0 %v1283
        %v1326 = vpop.f32.mrf.mxu0
        %v1327 = vadd.f32 0.0, %v1326
        %1328 = vmatmul.f32.gmra.mxu0 %v1286
        %v1329 = vpop.f32.mrf.mxu0
        %v1330 = vadd.f32 0.0, %v1329
        %1331 = vmatmul.f32.gmra.mxu0 %v1289
        %v1332 = vpop.f32.mrf.mxu0
        %v1333 = vadd.f32 0.0, %v1332
        %1334 = vdwg.mxu0
        %v1335 = vadd.f32 %v1199, %v1312
        %v1336 = vadd.f32 %v1200, %v1315
        %v1337 = vadd.f32 %v1201, %v1318
        %v1338 = vadd.f32 %v1202, %v1321
        %v1339 = vadd.f32 %v1203, %v1324
        %v1340 = vadd.f32 %v1204, %v1327
        %v1341 = vadd.f32 %v1205, %v1330
        %v1342 = vadd.f32 %v1206, %v1333
        %1343 = vmatpush.msra.mxu0 0.0
        %1344 = vmatpush.msra.mxu0 0.0
        %1345 = vmatpush.msra.mxu0 0.0
        %1346 = vmatpush.msra.mxu0 0.0
        %1347 = vmatpush.msra.mxu0 0.0
        %1348 = vmatpush.msra.mxu0 0.0
        %1349 = vmatpush.msra.mxu0 0.0
        %1350 = vmatpush.msra.mxu0 0.0
        %1351 = vmatpush.msra.mxu0 %v1263
        %1352 = vmatpush.msra.mxu0 %v1262
        %1353 = vmatpush.msra.mxu0 %v1261
        %1354 = vmatpush.msra.mxu0 %v1260
        %1355 = vmatpush.msra.mxu0 %v1259
        %1356 = vmatpush.msra.mxu0 %v1258
        %1357 = vmatpush.msra.mxu0 %v1257
        %1358 = vmatpush.msra.mxu0 %v1256
        %1359 = vmatmul.f32.gmra.mxu0 %v458
        %v1360 = vpop.f32.mrf.mxu0
        %v1361 = vadd.f32 0.0, %v1360
        %1362 = vmatmul.f32.gmra.mxu0 %v461
        %v1363 = vpop.f32.mrf.mxu0
        %v1364 = vadd.f32 0.0, %v1363
        %1365 = vmatmul.f32.gmra.mxu0 %v464
        %v1366 = vpop.f32.mrf.mxu0
        %v1367 = vadd.f32 0.0, %v1366
        %1368 = vmatmul.f32.gmra.mxu0 %v467
        %v1369 = vpop.f32.mrf.mxu0
        %v1370 = vadd.f32 0.0, %v1369
        %1371 = vmatmul.f32.gmra.mxu0 %v470
        %v1372 = vpop.f32.mrf.mxu0
        %v1373 = vadd.f32 0.0, %v1372
        %1374 = vmatmul.f32.gmra.mxu0 %v473
        %v1375 = vpop.f32.mrf.mxu0
        %v1376 = vadd.f32 0.0, %v1375
        %1377 = vmatmul.f32.gmra.mxu0 %v476
        %v1378 = vpop.f32.mrf.mxu0
        %v1379 = vadd.f32 0.0, %v1378
        %1380 = vmatmul.f32.gmra.mxu0 %v479
        %v1381 = vpop.f32.mrf.mxu0
        %v1382 = vadd.f32 0.0, %v1381
        %1383 = vdwg.mxu0
        %v1384 = vmul.f32 %v1361, 2.0
        %v1385 = vmul.f32 %v1364, 2.0
        %v1386 = vmul.f32 %v1367, 2.0
        %v1387 = vmul.f32 %v1370, 2.0
        %v1388 = vmul.f32 %v1373, 2.0
        %v1389 = vmul.f32 %v1376, 2.0
        %v1390 = vmul.f32 %v1379, 2.0
        %v1391 = vmul.f32 %v1382, 2.0
        %v1392 = vsub.f32 %v1384, %v1120
        %v1393 = vsub.f32 %v1385, %v1121
        %v1394 = vsub.f32 %v1386, %v1122
        %v1395 = vsub.f32 %v1387, %v1123
        %v1396 = vsub.f32 %v1388, %v1124
        %v1397 = vsub.f32 %v1389, %v1125
        %v1398 = vsub.f32 %v1390, %v1126
        %v1399 = vsub.f32 %v1391, %v1127
        %s1400 = scalar_lea.vmem %s2, 112
        %v1401 = vld [vmem:[%s1400] sm:$0xff]
        %v1402 = vld [vmem:[%s1400 + $0x8] sm:$0x7f]
        %v1404 = vsel %vm525, %v1392, 0
        %v1407 = vsel %vm525, %v1393, 0
        %v1410 = vsel %vm525, %v1394, 0
        %v1413 = vsel %vm525, %v1395, 0
        %v1416 = vsel %vm525, %v1396, 0
        %v1419 = vsel %vm525, %v1397, 0
        %v1422 = vsel %vm525, %v1398, 0
        %v1425 = vsel %vm525, %v1399, 0
        %v1428 = vsel %vm550, %v1402, 0
        %1430 = vmatpush.msra.mxu0 0.0
        %1431 = vmatpush.msra.mxu0 0.0
        %1432 = vmatpush.msra.mxu0 0.0
        %1433 = vmatpush.msra.mxu0 0.0
        %1434 = vmatpush.msra.mxu0 0.0
        %1435 = vmatpush.msra.mxu0 0.0
        %1436 = vmatpush.msra.mxu0 0.0
        %1437 = vmatpush.msra.mxu0 0.0
        %1438 = vmatpush.msra.mxu0 0.0
        %1439 = vmatpush.msra.mxu0 0.0
        %1440 = vmatpush.msra.mxu0 0.0
        %1441 = vmatpush.msra.mxu0 0.0
        %1442 = vmatpush.msra.mxu0 0.0
        %1443 = vmatpush.msra.mxu0 0.0
        %1444 = vmatpush.msra.mxu0 %v1428
        %1445 = vmatpush.msra.mxu0 %v1401
        %1446 = vmatmul.f32.gmra.mxu0 %v1404
        %v1447 = vpop.f32.mrf.mxu0
        %v1448 = vadd.f32 0.0, %v1447
        %1449 = vmatmul.f32.gmra.mxu0 %v1407
        %v1450 = vpop.f32.mrf.mxu0
        %v1451 = vadd.f32 0.0, %v1450
        %1452 = vmatmul.f32.gmra.mxu0 %v1410
        %v1453 = vpop.f32.mrf.mxu0
        %v1454 = vadd.f32 0.0, %v1453
        %1455 = vmatmul.f32.gmra.mxu0 %v1413
        %v1456 = vpop.f32.mrf.mxu0
        %v1457 = vadd.f32 0.0, %v1456
        %1458 = vmatmul.f32.gmra.mxu0 %v1416
        %v1459 = vpop.f32.mrf.mxu0
        %v1460 = vadd.f32 0.0, %v1459
        %1461 = vmatmul.f32.gmra.mxu0 %v1419
        %v1462 = vpop.f32.mrf.mxu0
        %v1463 = vadd.f32 0.0, %v1462
        %1464 = vmatmul.f32.gmra.mxu0 %v1422
        %v1465 = vpop.f32.mrf.mxu0
        %v1466 = vadd.f32 0.0, %v1465
        %1467 = vmatmul.f32.gmra.mxu0 %v1425
        %v1468 = vpop.f32.mrf.mxu0
        %v1469 = vadd.f32 0.0, %v1468
        %1470 = vdwg.mxu0
        %v1471 = vadd.f32 %v1335, %v1448
        %v1472 = vadd.f32 %v1336, %v1451
        %v1473 = vadd.f32 %v1337, %v1454
        %v1474 = vadd.f32 %v1338, %v1457
        %v1475 = vadd.f32 %v1339, %v1460
        %v1476 = vadd.f32 %v1340, %v1463
        %v1477 = vadd.f32 %v1341, %v1466
        %v1478 = vadd.f32 %v1342, %v1469
        %1479 = vmatpush.msra.mxu0 0.0
        %1480 = vmatpush.msra.mxu0 0.0
        %1481 = vmatpush.msra.mxu0 0.0
        %1482 = vmatpush.msra.mxu0 0.0
        %1483 = vmatpush.msra.mxu0 0.0
        %1484 = vmatpush.msra.mxu0 0.0
        %1485 = vmatpush.msra.mxu0 0.0
        %1486 = vmatpush.msra.mxu0 0.0
        %1487 = vmatpush.msra.mxu0 %v1399
        %1488 = vmatpush.msra.mxu0 %v1398
        %1489 = vmatpush.msra.mxu0 %v1397
        %1490 = vmatpush.msra.mxu0 %v1396
        %1491 = vmatpush.msra.mxu0 %v1395
        %1492 = vmatpush.msra.mxu0 %v1394
        %1493 = vmatpush.msra.mxu0 %v1393
        %1494 = vmatpush.msra.mxu0 %v1392
        %1495 = vmatmul.f32.gmra.mxu0 %v458
        %v1496 = vpop.f32.mrf.mxu0
        %v1497 = vadd.f32 0.0, %v1496
        %1498 = vmatmul.f32.gmra.mxu0 %v461
        %v1499 = vpop.f32.mrf.mxu0
        %v1500 = vadd.f32 0.0, %v1499
        %1501 = vmatmul.f32.gmra.mxu0 %v464
        %v1502 = vpop.f32.mrf.mxu0
        %v1503 = vadd.f32 0.0, %v1502
        %1504 = vmatmul.f32.gmra.mxu0 %v467
        %v1505 = vpop.f32.mrf.mxu0
        %v1506 = vadd.f32 0.0, %v1505
        %1507 = vmatmul.f32.gmra.mxu0 %v470
        %v1508 = vpop.f32.mrf.mxu0
        %v1509 = vadd.f32 0.0, %v1508
        %1510 = vmatmul.f32.gmra.mxu0 %v473
        %v1511 = vpop.f32.mrf.mxu0
        %v1512 = vadd.f32 0.0, %v1511
        %1513 = vmatmul.f32.gmra.mxu0 %v476
        %v1514 = vpop.f32.mrf.mxu0
        %v1515 = vadd.f32 0.0, %v1514
        %1516 = vmatmul.f32.gmra.mxu0 %v479
        %v1517 = vpop.f32.mrf.mxu0
        %v1518 = vadd.f32 0.0, %v1517
        %1519 = vdwg.mxu0
        %v1520 = vmul.f32 %v1497, 2.0
        %v1521 = vmul.f32 %v1500, 2.0
        %v1522 = vmul.f32 %v1503, 2.0
        %v1523 = vmul.f32 %v1506, 2.0
        %v1524 = vmul.f32 %v1509, 2.0
        %v1525 = vmul.f32 %v1512, 2.0
        %v1526 = vmul.f32 %v1515, 2.0
        %v1527 = vmul.f32 %v1518, 2.0
        %v1528 = vsub.f32 %v1520, %v1256
        %v1529 = vsub.f32 %v1521, %v1257
        %v1530 = vsub.f32 %v1522, %v1258
        %v1531 = vsub.f32 %v1523, %v1259
        %v1532 = vsub.f32 %v1524, %v1260
        %v1533 = vsub.f32 %v1525, %v1261
        %v1534 = vsub.f32 %v1526, %v1262
        %v1535 = vsub.f32 %v1527, %v1263
        %s1536 = scalar_lea.vmem %s2, 128
        %v1537 = vld [vmem:[%s1536] sm:$0xff]
        %v1538 = vld [vmem:[%s1536 + $0x8] sm:$0x7f]
        %v1540 = vsel %vm525, %v1528, 0
        %v1543 = vsel %vm525, %v1529, 0
        %v1546 = vsel %vm525, %v1530, 0
        %v1549 = vsel %vm525, %v1531, 0
        %v1552 = vsel %vm525, %v1532, 0
        %v1555 = vsel %vm525, %v1533, 0
        %v1558 = vsel %vm525, %v1534, 0
        %v1561 = vsel %vm525, %v1535, 0
        %v1564 = vsel %vm550, %v1538, 0
        %1566 = vmatpush.msra.mxu0 0.0
        %1567 = vmatpush.msra.mxu0 0.0
        %1568 = vmatpush.msra.mxu0 0.0
        %1569 = vmatpush.msra.mxu0 0.0
        %1570 = vmatpush.msra.mxu0 0.0
        %1571 = vmatpush.msra.mxu0 0.0
        %1572 = vmatpush.msra.mxu0 0.0
        %1573 = vmatpush.msra.mxu0 0.0
        %1574 = vmatpush.msra.mxu0 0.0
        %1575 = vmatpush.msra.mxu0 0.0
        %1576 = vmatpush.msra.mxu0 0.0
        %1577 = vmatpush.msra.mxu0 0.0
        %1578 = vmatpush.msra.mxu0 0.0
        %1579 = vmatpush.msra.mxu0 0.0
        %1580 = vmatpush.msra.mxu0 %v1564
        %1581 = vmatpush.msra.mxu0 %v1537
        %1582 = vmatmul.f32.gmra.mxu0 %v1540
        %v1583 = vpop.f32.mrf.mxu0
        %v1584 = vadd.f32 0.0, %v1583
        %1585 = vmatmul.f32.gmra.mxu0 %v1543
        %v1586 = vpop.f32.mrf.mxu0
        %v1587 = vadd.f32 0.0, %v1586
        %1588 = vmatmul.f32.gmra.mxu0 %v1546
        %v1589 = vpop.f32.mrf.mxu0
        %v1590 = vadd.f32 0.0, %v1589
        %1591 = vmatmul.f32.gmra.mxu0 %v1549
        %v1592 = vpop.f32.mrf.mxu0
        %v1593 = vadd.f32 0.0, %v1592
        %1594 = vmatmul.f32.gmra.mxu0 %v1552
        %v1595 = vpop.f32.mrf.mxu0
        %v1596 = vadd.f32 0.0, %v1595
        %1597 = vmatmul.f32.gmra.mxu0 %v1555
        %v1598 = vpop.f32.mrf.mxu0
        %v1599 = vadd.f32 0.0, %v1598
        %1600 = vmatmul.f32.gmra.mxu0 %v1558
        %v1601 = vpop.f32.mrf.mxu0
        %v1602 = vadd.f32 0.0, %v1601
        %1603 = vmatmul.f32.gmra.mxu0 %v1561
        %v1604 = vpop.f32.mrf.mxu0
        %v1605 = vadd.f32 0.0, %v1604
        %1606 = vdwg.mxu0
        %v1607 = vadd.f32 %v1471, %v1584
        %v1608 = vadd.f32 %v1472, %v1587
        %v1609 = vadd.f32 %v1473, %v1590
        %v1610 = vadd.f32 %v1474, %v1593
        %v1611 = vadd.f32 %v1475, %v1596
        %v1612 = vadd.f32 %v1476, %v1599
        %v1613 = vadd.f32 %v1477, %v1602
        %v1614 = vadd.f32 %v1478, %v1605
        %1615 = vmatpush.msra.mxu0 0.0
        %1616 = vmatpush.msra.mxu0 0.0
        %1617 = vmatpush.msra.mxu0 0.0
        %1618 = vmatpush.msra.mxu0 0.0
        %1619 = vmatpush.msra.mxu0 0.0
        %1620 = vmatpush.msra.mxu0 0.0
        %1621 = vmatpush.msra.mxu0 0.0
        %1622 = vmatpush.msra.mxu0 0.0
        %1623 = vmatpush.msra.mxu0 %v1535
        %1624 = vmatpush.msra.mxu0 %v1534
        %1625 = vmatpush.msra.mxu0 %v1533
        %1626 = vmatpush.msra.mxu0 %v1532
        %1627 = vmatpush.msra.mxu0 %v1531
        %1628 = vmatpush.msra.mxu0 %v1530
        %1629 = vmatpush.msra.mxu0 %v1529
        %1630 = vmatpush.msra.mxu0 %v1528
        %1631 = vmatmul.f32.gmra.mxu0 %v458
        %v1632 = vpop.f32.mrf.mxu0
        %v1633 = vadd.f32 0.0, %v1632
        %1634 = vmatmul.f32.gmra.mxu0 %v461
        %v1635 = vpop.f32.mrf.mxu0
        %v1636 = vadd.f32 0.0, %v1635
        %1637 = vmatmul.f32.gmra.mxu0 %v464
        %v1638 = vpop.f32.mrf.mxu0
        %v1639 = vadd.f32 0.0, %v1638
        %1640 = vmatmul.f32.gmra.mxu0 %v467
        %v1641 = vpop.f32.mrf.mxu0
        %v1642 = vadd.f32 0.0, %v1641
        %1643 = vmatmul.f32.gmra.mxu0 %v470
        %v1644 = vpop.f32.mrf.mxu0
        %v1645 = vadd.f32 0.0, %v1644
        %1646 = vmatmul.f32.gmra.mxu0 %v473
        %v1647 = vpop.f32.mrf.mxu0
        %v1648 = vadd.f32 0.0, %v1647
        %1649 = vmatmul.f32.gmra.mxu0 %v476
        %v1650 = vpop.f32.mrf.mxu0
        %v1651 = vadd.f32 0.0, %v1650
        %1652 = vmatmul.f32.gmra.mxu0 %v479
        %v1653 = vpop.f32.mrf.mxu0
        %v1654 = vadd.f32 0.0, %v1653
        %1655 = vdwg.mxu0
        %v1656 = vmul.f32 %v1633, 2.0
        %v1657 = vmul.f32 %v1636, 2.0
        %v1658 = vmul.f32 %v1639, 2.0
        %v1659 = vmul.f32 %v1642, 2.0
        %v1660 = vmul.f32 %v1645, 2.0
        %v1661 = vmul.f32 %v1648, 2.0
        %v1662 = vmul.f32 %v1651, 2.0
        %v1663 = vmul.f32 %v1654, 2.0
        %v1664 = vsub.f32 %v1656, %v1392
        %v1665 = vsub.f32 %v1657, %v1393
        %v1666 = vsub.f32 %v1658, %v1394
        %v1667 = vsub.f32 %v1659, %v1395
        %v1668 = vsub.f32 %v1660, %v1396
        %v1669 = vsub.f32 %v1661, %v1397
        %v1670 = vsub.f32 %v1662, %v1398
        %v1671 = vsub.f32 %v1663, %v1399
        %s1672 = scalar_lea.vmem %s2, 144
        %v1673 = vld [vmem:[%s1672] sm:$0xff]
        %v1674 = vld [vmem:[%s1672 + $0x8] sm:$0x7f]
        %v1676 = vsel %vm525, %v1664, 0
        %v1679 = vsel %vm525, %v1665, 0
        %v1682 = vsel %vm525, %v1666, 0
        %v1685 = vsel %vm525, %v1667, 0
        %v1688 = vsel %vm525, %v1668, 0
        %v1691 = vsel %vm525, %v1669, 0
        %v1694 = vsel %vm525, %v1670, 0
        %v1697 = vsel %vm525, %v1671, 0
        %v1700 = vsel %vm550, %v1674, 0
        %1702 = vmatpush.msra.mxu0 0.0
        %1703 = vmatpush.msra.mxu0 0.0
        %1704 = vmatpush.msra.mxu0 0.0
        %1705 = vmatpush.msra.mxu0 0.0
        %1706 = vmatpush.msra.mxu0 0.0
        %1707 = vmatpush.msra.mxu0 0.0
        %1708 = vmatpush.msra.mxu0 0.0
        %1709 = vmatpush.msra.mxu0 0.0
        %1710 = vmatpush.msra.mxu0 0.0
        %1711 = vmatpush.msra.mxu0 0.0
        %1712 = vmatpush.msra.mxu0 0.0
        %1713 = vmatpush.msra.mxu0 0.0
        %1714 = vmatpush.msra.mxu0 0.0
        %1715 = vmatpush.msra.mxu0 0.0
        %1716 = vmatpush.msra.mxu0 %v1700
        %1717 = vmatpush.msra.mxu0 %v1673
        %1718 = vmatmul.f32.gmra.mxu0 %v1676
        %v1719 = vpop.f32.mrf.mxu0
        %v1720 = vadd.f32 0.0, %v1719
        %1721 = vmatmul.f32.gmra.mxu0 %v1679
        %v1722 = vpop.f32.mrf.mxu0
        %v1723 = vadd.f32 0.0, %v1722
        %1724 = vmatmul.f32.gmra.mxu0 %v1682
        %v1725 = vpop.f32.mrf.mxu0
        %v1726 = vadd.f32 0.0, %v1725
        %1727 = vmatmul.f32.gmra.mxu0 %v1685
        %v1728 = vpop.f32.mrf.mxu0
        %v1729 = vadd.f32 0.0, %v1728
        %1730 = vmatmul.f32.gmra.mxu0 %v1688
        %v1731 = vpop.f32.mrf.mxu0
        %v1732 = vadd.f32 0.0, %v1731
        %1733 = vmatmul.f32.gmra.mxu0 %v1691
        %v1734 = vpop.f32.mrf.mxu0
        %v1735 = vadd.f32 0.0, %v1734
        %1736 = vmatmul.f32.gmra.mxu0 %v1694
        %v1737 = vpop.f32.mrf.mxu0
        %v1738 = vadd.f32 0.0, %v1737
        %1739 = vmatmul.f32.gmra.mxu0 %v1697
        %v1740 = vpop.f32.mrf.mxu0
        %v1741 = vadd.f32 0.0, %v1740
        %1742 = vdwg.mxu0
        %v1743 = vadd.f32 %v1607, %v1720
        %v1744 = vadd.f32 %v1608, %v1723
        %v1745 = vadd.f32 %v1609, %v1726
        %v1746 = vadd.f32 %v1610, %v1729
        %v1747 = vadd.f32 %v1611, %v1732
        %v1748 = vadd.f32 %v1612, %v1735
        %v1749 = vadd.f32 %v1613, %v1738
        %v1750 = vadd.f32 %v1614, %v1741
        %v1751 = vld [vmem:[%s3] sm:$0x1]
        %v1753 = vperm.slane %v1751, 0
        %v1755 = vadd.f32 %v1743, %v1753
        %v1756 = vadd.f32 %v1744, %v1753
        %v1757 = vadd.f32 %v1745, %v1753
        %v1758 = vadd.f32 %v1746, %v1753
        %v1759 = vadd.f32 %v1747, %v1753
        %v1760 = vadd.f32 %v1748, %v1753
        %v1761 = vadd.f32 %v1749, %v1753
        %v1762 = vadd.f32 %v1750, %v1753
        %v1763 = vmax.f32 %v1755, 0.0
        %v1764 = vmax.f32 %v1756, 0.0
        %v1765 = vmax.f32 %v1757, 0.0
        %v1766 = vmax.f32 %v1758, 0.0
        %v1767 = vmax.f32 %v1759, 0.0
        %v1768 = vmax.f32 %v1760, 0.0
        %v1769 = vmax.f32 %v1761, 0.0
        %v1770 = vmax.f32 %v1762, 0.0
        %vm1771 = vcmask 261120
        %1772 = vst.msk [vmem:[#allocation2] sm:$0xff] %vm1771, %v1763
        %1773 = vst.msk [vmem:[#allocation2 + $0x8] sm:$0xff] %vm1771, %v1764
        %1774 = vst.msk [vmem:[#allocation2 + $0x10] sm:$0xff] %vm1771, %v1765
        %1775 = vst.msk [vmem:[#allocation2 + $0x18] sm:$0xff] %vm1771, %v1766
        %1776 = vst.msk [vmem:[#allocation2 + $0x20] sm:$0xff] %vm1771, %v1767
        %1777 = vst.msk [vmem:[#allocation2 + $0x28] sm:$0xff] %vm1771, %v1768
        %1778 = vst.msk [vmem:[#allocation2 + $0x30] sm:$0xff] %vm1771, %v1769
        %1779 = vst.msk [vmem:[#allocation2 + $0x38] sm:$0xff] %vm1771, %v1770
        %v1780 = vld [vmem:[#allocation2] ss:$4 sm:$0xff]
        %s1781 = scalar_lea.vmem [#allocation2], 32
        %v1782 = vld [vmem:[%s1781] ss:$4 sm:$0xff]
        %s1783 = scalar_lea.vmem [#allocation2], 1
        %v1784 = vld [vmem:[%s1783] ss:$4 sm:$0xff]
        %s1785 = scalar_lea.vmem [#allocation2], 33
        %v1786 = vld [vmem:[%s1785] ss:$4 sm:$0xff]
        %s1787 = scalar_lea.vmem [#allocation2], 2
        %v1788 = vld [vmem:[%s1787] ss:$4 sm:$0xff]
        %s1789 = scalar_lea.vmem [#allocation2], 34
        %v1790 = vld [vmem:[%s1789] ss:$4 sm:$0xff]
        %s1791 = scalar_lea.vmem [#allocation2], 3
        %v1792 = vld [vmem:[%s1791] ss:$4 sm:$0xff]
        %s1793 = scalar_lea.vmem [#allocation2], 35
        %v1794 = vld [vmem:[%s1793] ss:$4 sm:$0xff]
        %v1795 = vmax.f32 %v1780, %v1784
        %v1796 = vmax.f32 %v1782, %v1786
        %v1797 = vmax.f32 %v1788, %v1792
        %v1798 = vmax.f32 %v1790, %v1794
        %v1799 = vmax.f32 %v1795, %v1797
        %v1800 = vmax.f32 %v1796, %v1798
        %v1801 = vld [vmem:[%s4] sm:$0xff]
        %v1802 = vld [vmem:[%s4 + $0x8] sm:$0xff]
        %v1803 = vld [vmem:[%s5] sm:$0xff]
        %v1804 = vld [vmem:[%s5 + $0x8] sm:$0xff]
        %v1805 = vld [vmem:[%s5 + $0x10] sm:$0xff]
        %v1806 = vld [vmem:[%s5 + $0x18] sm:$0xff]
        %vm1807 = vcmask 130048
        %v1809 = vsel %vm1807, %v1801, 0
        %v1812 = vsel %vm1807, %v1802, 0
        %1814 = vmatpush.msra.mxu0 0.0
        %1815 = vmatpush.msra.mxu0 0.0
        %1816 = vmatpush.msra.mxu0 0.0
        %1817 = vmatpush.msra.mxu0 0.0
        %1818 = vmatpush.msra.mxu0 0.0
        %1819 = vmatpush.msra.mxu0 0.0
        %1820 = vmatpush.msra.mxu0 0.0
        %1821 = vmatpush.msra.mxu0 0.0
        %1822 = vmatpush.msra.mxu0 0.0
        %1823 = vmatpush.msra.mxu0 0.0
        %1824 = vmatpush.msra.mxu0 0.0
        %1825 = vmatpush.msra.mxu0 0.0
        %1826 = vmatpush.msra.mxu0 0.0
        %1827 = vmatpush.msra.mxu0 0.0
        %1828 = vmatpush.msra.mxu0 %v1800
        %1829 = vmatpush.msra.mxu0 %v1799
        %1830 = vmatmul.f32.gmra.mxu0 %v1809
        %v1831 = vpop.f32.mrf.mxu0
        %v1832 = vadd.f32 0.0, %v1831
        %1833 = vmatmul.f32.gmra.mxu0 %v1812
        %v1834 = vpop.f32.mrf.mxu0
        %v1835 = vadd.f32 0.0, %v1834
        %1836 = vdwg.mxu0
        %s1837 = scalar_lea.vmem %s5, 32
        %v1838 = vld [vmem:[%s1837] sm:$0xff]
        %v1839 = vld [vmem:[%s1837 + $0x8] sm:$0xff]
        %v1840 = vld [vmem:[%s1837 + $0x10] sm:$0xff]
        %v1841 = vld [vmem:[%s1837 + $0x18] sm:$0xff]
        %v1843 = vsel %vm1771, %v1832, 0
        %v1846 = vsel %vm1771, %v1835, 0
        %1848 = vmatpush.msra.mxu0 0.0
        %1849 = vmatpush.msra.mxu0 0.0
        %1850 = vmatpush.msra.mxu0 0.0
        %1851 = vmatpush.msra.mxu0 0.0
        %1852 = vmatpush.msra.mxu0 0.0
        %1853 = vmatpush.msra.mxu0 0.0
        %1854 = vmatpush.msra.mxu0 0.0
        %1855 = vmatpush.msra.mxu0 0.0
        %1856 = vmatpush.msra.mxu0 0.0
        %1857 = vmatpush.msra.mxu0 0.0
        %1858 = vmatpush.msra.mxu0 0.0
        %1859 = vmatpush.msra.mxu0 0.0
        %1860 = vmatpush.msra.mxu0 %v1841
        %1861 = vmatpush.msra.mxu0 %v1840
        %1862 = vmatpush.msra.mxu0 %v1839
        %1863 = vmatpush.msra.mxu0 %v1838
        %1864 = vmatmul.f32.gmra.mxu0 %v1843
        %v1865 = vpop.f32.mrf.mxu0
        %v1866 = vadd.f32 0.0, %v1865
        %1867 = vmatmul.f32.gmra.mxu0 %v1846
        %v1868 = vpop.f32.mrf.mxu0
        %v1869 = vadd.f32 0.0, %v1868
        %1870 = vdwg.mxu0
        %v1872 = vsel %vm1771, %v1799, 0
        %v1875 = vsel %vm1771, %v1800, 0
        %1877 = vmatpush.msra.mxu0 0.0
        %1878 = vmatpush.msra.mxu0 0.0
        %1879 = vmatpush.msra.mxu0 0.0
        %1880 = vmatpush.msra.mxu0 0.0
        %1881 = vmatpush.msra.mxu0 0.0
        %1882 = vmatpush.msra.mxu0 0.0
        %1883 = vmatpush.msra.mxu0 0.0
        %1884 = vmatpush.msra.mxu0 0.0
        %1885 = vmatpush.msra.mxu0 0.0
        %1886 = vmatpush.msra.mxu0 0.0
        %1887 = vmatpush.msra.mxu0 0.0
        %1888 = vmatpush.msra.mxu0 0.0
        %1889 = vmatpush.msra.mxu0 %v1806
        %1890 = vmatpush.msra.mxu0 %v1805
        %1891 = vmatpush.msra.mxu0 %v1804
        %1892 = vmatpush.msra.mxu0 %v1803
        %1893 = vmatmul.f32.gmra.mxu0 %v1872
        %v1894 = vpop.f32.mrf.mxu0
        %v1895 = vadd.f32 %v1866, %v1894
        %1896 = vmatmul.f32.gmra.mxu0 %v1875
        %v1897 = vpop.f32.mrf.mxu0
        %v1898 = vadd.f32 %v1869, %v1897
        %1899 = vdwg.mxu0
        %1900 = vmatpush.msra.mxu0 0.0
        %1901 = vmatpush.msra.mxu0 0.0
        %1902 = vmatpush.msra.mxu0 0.0
        %1903 = vmatpush.msra.mxu0 0.0
        %1904 = vmatpush.msra.mxu0 0.0
        %1905 = vmatpush.msra.mxu0 0.0
        %1906 = vmatpush.msra.mxu0 0.0
        %1907 = vmatpush.msra.mxu0 0.0
        %1908 = vmatpush.msra.mxu0 0.0
        %1909 = vmatpush.msra.mxu0 0.0
        %1910 = vmatpush.msra.mxu0 0.0
        %1911 = vmatpush.msra.mxu0 0.0
        %1912 = vmatpush.msra.mxu0 0.0
        %1913 = vmatpush.msra.mxu0 0.0
        %1914 = vmatpush.msra.mxu0 %v1835
        %1915 = vmatpush.msra.mxu0 %v1832
        %1916 = vmatmul.f32.gmra.mxu0 %v1809
        %v1917 = vpop.f32.mrf.mxu0
        %v1918 = vadd.f32 0.0, %v1917
        %1919 = vmatmul.f32.gmra.mxu0 %v1812
        %v1920 = vpop.f32.mrf.mxu0
        %v1921 = vadd.f32 0.0, %v1920
        %1922 = vdwg.mxu0
        %v1923 = vmul.f32 %v1918, 2.0
        %v1924 = vmul.f32 %v1921, 2.0
        %v1925 = vsub.f32 %v1923, %v1799
        %v1926 = vsub.f32 %v1924, %v1800
        %s1927 = scalar_lea.vmem %s5, 64
        %v1928 = vld [vmem:[%s1927] sm:$0xff]
        %v1929 = vld [vmem:[%s1927 + $0x8] sm:$0xff]
        %v1930 = vld [vmem:[%s1927 + $0x10] sm:$0xff]
        %v1931 = vld [vmem:[%s1927 + $0x18] sm:$0xff]
        %v1933 = vsel %vm1771, %v1925, 0
        %v1936 = vsel %vm1771, %v1926, 0
        %1938 = vmatpush.msra.mxu0 0.0
        %1939 = vmatpush.msra.mxu0 0.0
        %1940 = vmatpush.msra.mxu0 0.0
        %1941 = vmatpush.msra.mxu0 0.0
        %1942 = vmatpush.msra.mxu0 0.0
        %1943 = vmatpush.msra.mxu0 0.0
        %1944 = vmatpush.msra.mxu0 0.0
        %1945 = vmatpush.msra.mxu0 0.0
        %1946 = vmatpush.msra.mxu0 0.0
        %1947 = vmatpush.msra.mxu0 0.0
        %1948 = vmatpush.msra.mxu0 0.0
        %1949 = vmatpush.msra.mxu0 0.0
        %1950 = vmatpush.msra.mxu0 %v1931
        %1951 = vmatpush.msra.mxu0 %v1930
        %1952 = vmatpush.msra.mxu0 %v1929
        %1953 = vmatpush.msra.mxu0 %v1928
        %1954 = vmatmul.f32.gmra.mxu0 %v1933
        %v1955 = vpop.f32.mrf.mxu0
        %v1956 = vadd.f32 0.0, %v1955
        %1957 = vmatmul.f32.gmra.mxu0 %v1936
        %v1958 = vpop.f32.mrf.mxu0
        %v1959 = vadd.f32 0.0, %v1958
        %1960 = vdwg.mxu0
        %v1961 = vadd.f32 %v1895, %v1956
        %v1962 = vadd.f32 %v1898, %v1959
        %1963 = vmatpush.msra.mxu0 0.0
        %1964 = vmatpush.msra.mxu0 0.0
        %1965 = vmatpush.msra.mxu0 0.0
        %1966 = vmatpush.msra.mxu0 0.0
        %1967 = vmatpush.msra.mxu0 0.0
        %1968 = vmatpush.msra.mxu0 0.0
        %1969 = vmatpush.msra.mxu0 0.0
        %1970 = vmatpush.msra.mxu0 0.0
        %1971 = vmatpush.msra.mxu0 0.0
        %1972 = vmatpush.msra.mxu0 0.0
        %1973 = vmatpush.msra.mxu0 0.0
        %1974 = vmatpush.msra.mxu0 0.0
        %1975 = vmatpush.msra.mxu0 0.0
        %1976 = vmatpush.msra.mxu0 0.0
        %1977 = vmatpush.msra.mxu0 %v1926
        %1978 = vmatpush.msra.mxu0 %v1925
        %1979 = vmatmul.f32.gmra.mxu0 %v1809
        %v1980 = vpop.f32.mrf.mxu0
        %v1981 = vadd.f32 0.0, %v1980
        %1982 = vmatmul.f32.gmra.mxu0 %v1812
        %v1983 = vpop.f32.mrf.mxu0
        %v1984 = vadd.f32 0.0, %v1983
        %1985 = vdwg.mxu0
        %v1986 = vmul.f32 %v1981, 2.0
        %v1987 = vmul.f32 %v1984, 2.0
        %v1988 = vsub.f32 %v1986, %v1832
        %v1989 = vsub.f32 %v1987, %v1835
        %s1990 = scalar_lea.vmem %s5, 96
        %v1991 = vld [vmem:[%s1990] sm:$0xff]
        %v1992 = vld [vmem:[%s1990 + $0x8] sm:$0xff]
        %v1993 = vld [vmem:[%s1990 + $0x10] sm:$0xff]
        %v1994 = vld [vmem:[%s1990 + $0x18] sm:$0xff]
        %v1996 = vsel %vm1771, %v1988, 0
        %v1999 = vsel %vm1771, %v1989, 0
        %2001 = vmatpush.msra.mxu0 0.0
        %2002 = vmatpush.msra.mxu0 0.0
        %2003 = vmatpush.msra.mxu0 0.0
        %2004 = vmatpush.msra.mxu0 0.0
        %2005 = vmatpush.msra.mxu0 0.0
        %2006 = vmatpush.msra.mxu0 0.0
        %2007 = vmatpush.msra.mxu0 0.0
        %2008 = vmatpush.msra.mxu0 0.0
        %2009 = vmatpush.msra.mxu0 0.0
        %2010 = vmatpush.msra.mxu0 0.0
        %2011 = vmatpush.msra.mxu0 0.0
        %2012 = vmatpush.msra.mxu0 0.0
        %2013 = vmatpush.msra.mxu0 %v1994
        %2014 = vmatpush.msra.mxu0 %v1993
        %2015 = vmatpush.msra.mxu0 %v1992
        %2016 = vmatpush.msra.mxu0 %v1991
        %2017 = vmatmul.f32.gmra.mxu0 %v1996
        %v2018 = vpop.f32.mrf.mxu0
        %v2019 = vadd.f32 0.0, %v2018
        %2020 = vmatmul.f32.gmra.mxu0 %v1999
        %v2021 = vpop.f32.mrf.mxu0
        %v2022 = vadd.f32 0.0, %v2021
        %2023 = vdwg.mxu0
        %v2024 = vadd.f32 %v1961, %v2019
        %v2025 = vadd.f32 %v1962, %v2022
        %2026 = vmatpush.msra.mxu0 0.0
        %2027 = vmatpush.msra.mxu0 0.0
        %2028 = vmatpush.msra.mxu0 0.0
        %2029 = vmatpush.msra.mxu0 0.0
        %2030 = vmatpush.msra.mxu0 0.0
        %2031 = vmatpush.msra.mxu0 0.0
        %2032 = vmatpush.msra.mxu0 0.0
        %2033 = vmatpush.msra.mxu0 0.0
        %2034 = vmatpush.msra.mxu0 0.0
        %2035 = vmatpush.msra.mxu0 0.0
        %2036 = vmatpush.msra.mxu0 0.0
        %2037 = vmatpush.msra.mxu0 0.0
        %2038 = vmatpush.msra.mxu0 0.0
        %2039 = vmatpush.msra.mxu0 0.0
        %2040 = vmatpush.msra.mxu0 %v1989
        %2041 = vmatpush.msra.mxu0 %v1988
        %2042 = vmatmul.f32.gmra.mxu0 %v1809
        %v2043 = vpop.f32.mrf.mxu0
        %v2044 = vadd.f32 0.0, %v2043
        %2045 = vmatmul.f32.gmra.mxu0 %v1812
        %v2046 = vpop.f32.mrf.mxu0
        %v2047 = vadd.f32 0.0, %v2046
        %2048 = vdwg.mxu0
        %v2049 = vmul.f32 %v2044, 2.0
        %v2050 = vmul.f32 %v2047, 2.0
        %v2051 = vsub.f32 %v2049, %v1925
        %v2052 = vsub.f32 %v2050, %v1926
        %s2053 = scalar_lea.vmem %s5, 128
        %v2054 = vld [vmem:[%s2053] sm:$0xff]
        %v2055 = vld [vmem:[%s2053 + $0x8] sm:$0xff]
        %v2056 = vld [vmem:[%s2053 + $0x10] sm:$0xff]
        %v2057 = vld [vmem:[%s2053 + $0x18] sm:$0xff]
        %v2059 = vsel %vm1771, %v2051, 0
        %v2062 = vsel %vm1771, %v2052, 0
        %2064 = vmatpush.msra.mxu0 0.0
        %2065 = vmatpush.msra.mxu0 0.0
        %2066 = vmatpush.msra.mxu0 0.0
        %2067 = vmatpush.msra.mxu0 0.0
        %2068 = vmatpush.msra.mxu0 0.0
        %2069 = vmatpush.msra.mxu0 0.0
        %2070 = vmatpush.msra.mxu0 0.0
        %2071 = vmatpush.msra.mxu0 0.0
        %2072 = vmatpush.msra.mxu0 0.0
        %2073 = vmatpush.msra.mxu0 0.0
        %2074 = vmatpush.msra.mxu0 0.0
        %2075 = vmatpush.msra.mxu0 0.0
        %2076 = vmatpush.msra.mxu0 %v2057
        %2077 = vmatpush.msra.mxu0 %v2056
        %2078 = vmatpush.msra.mxu0 %v2055
        %2079 = vmatpush.msra.mxu0 %v2054
        %2080 = vmatmul.f32.gmra.mxu0 %v2059
        %v2081 = vpop.f32.mrf.mxu0
        %v2082 = vadd.f32 0.0, %v2081
        %2083 = vmatmul.f32.gmra.mxu0 %v2062
        %v2084 = vpop.f32.mrf.mxu0
        %v2085 = vadd.f32 0.0, %v2084
        %2086 = vdwg.mxu0
        %v2087 = vadd.f32 %v2024, %v2082
        %v2088 = vadd.f32 %v2025, %v2085
        %2089 = vmatpush.msra.mxu0 0.0
        %2090 = vmatpush.msra.mxu0 0.0
        %2091 = vmatpush.msra.mxu0 0.0
        %2092 = vmatpush.msra.mxu0 0.0
        %2093 = vmatpush.msra.mxu0 0.0
        %2094 = vmatpush.msra.mxu0 0.0
        %2095 = vmatpush.msra.mxu0 0.0
        %2096 = vmatpush.msra.mxu0 0.0
        %2097 = vmatpush.msra.mxu0 0.0
        %2098 = vmatpush.msra.mxu0 0.0
        %2099 = vmatpush.msra.mxu0 0.0
        %2100 = vmatpush.msra.mxu0 0.0
        %2101 = vmatpush.msra.mxu0 0.0
        %2102 = vmatpush.msra.mxu0 0.0
        %2103 = vmatpush.msra.mxu0 %v2052
        %2104 = vmatpush.msra.mxu0 %v2051
        %2105 = vmatmul.f32.gmra.mxu0 %v1809
        %v2106 = vpop.f32.mrf.mxu0
        %v2107 = vadd.f32 0.0, %v2106
        %2108 = vmatmul.f32.gmra.mxu0 %v1812
        %v2109 = vpop.f32.mrf.mxu0
        %v2110 = vadd.f32 0.0, %v2109
        %2111 = vdwg.mxu0
        %v2112 = vmul.f32 %v2107, 2.0
        %v2113 = vmul.f32 %v2110, 2.0
        %v2114 = vsub.f32 %v2112, %v1988
        %v2115 = vsub.f32 %v2113, %v1989
        %s2116 = scalar_lea.vmem %s5, 160
        %v2117 = vld [vmem:[%s2116] sm:$0xff]
        %v2118 = vld [vmem:[%s2116 + $0x8] sm:$0xff]
        %v2119 = vld [vmem:[%s2116 + $0x10] sm:$0xff]
        %v2120 = vld [vmem:[%s2116 + $0x18] sm:$0xff]
        %v2122 = vsel %vm1771, %v2114, 0
        %v2125 = vsel %vm1771, %v2115, 0
        %2127 = vmatpush.msra.mxu0 0.0
        %2128 = vmatpush.msra.mxu0 0.0
        %2129 = vmatpush.msra.mxu0 0.0
        %2130 = vmatpush.msra.mxu0 0.0
        %2131 = vmatpush.msra.mxu0 0.0
        %2132 = vmatpush.msra.mxu0 0.0
        %2133 = vmatpush.msra.mxu0 0.0
        %2134 = vmatpush.msra.mxu0 0.0
        %2135 = vmatpush.msra.mxu0 0.0
        %2136 = vmatpush.msra.mxu0 0.0
        %2137 = vmatpush.msra.mxu0 0.0
        %2138 = vmatpush.msra.mxu0 0.0
        %2139 = vmatpush.msra.mxu0 %v2120
        %2140 = vmatpush.msra.mxu0 %v2119
        %2141 = vmatpush.msra.mxu0 %v2118
        %2142 = vmatpush.msra.mxu0 %v2117
        %2143 = vmatmul.f32.gmra.mxu0 %v2122
        %v2144 = vpop.f32.mrf.mxu0
        %v2145 = vadd.f32 0.0, %v2144
        %2146 = vmatmul.f32.gmra.mxu0 %v2125
        %v2147 = vpop.f32.mrf.mxu0
        %v2148 = vadd.f32 0.0, %v2147
        %2149 = vdwg.mxu0
        %v2150 = vadd.f32 %v2087, %v2145
        %v2151 = vadd.f32 %v2088, %v2148
        %2152 = vmatpush.msra.mxu0 0.0
        %2153 = vmatpush.msra.mxu0 0.0
        %2154 = vmatpush.msra.mxu0 0.0
        %2155 = vmatpush.msra.mxu0 0.0
        %2156 = vmatpush.msra.mxu0 0.0
        %2157 = vmatpush.msra.mxu0 0.0
        %2158 = vmatpush.msra.mxu0 0.0
        %2159 = vmatpush.msra.mxu0 0.0
        %2160 = vmatpush.msra.mxu0 0.0
        %2161 = vmatpush.msra.mxu0 0.0
        %2162 = vmatpush.msra.mxu0 0.0
        %2163 = vmatpush.msra.mxu0 0.0
        %2164 = vmatpush.msra.mxu0 0.0
        %2165 = vmatpush.msra.mxu0 0.0
        %2166 = vmatpush.msra.mxu0 %v2115
        %2167 = vmatpush.msra.mxu0 %v2114
        %2168 = vmatmul.f32.gmra.mxu0 %v1809
        %v2169 = vpop.f32.mrf.mxu0
        %v2170 = vadd.f32 0.0, %v2169
        %2171 = vmatmul.f32.gmra.mxu0 %v1812
        %v2172 = vpop.f32.mrf.mxu0
        %v2173 = vadd.f32 0.0, %v2172
        %2174 = vdwg.mxu0
        %v2175 = vmul.f32 %v2170, 2.0
        %v2176 = vmul.f32 %v2173, 2.0
        %v2177 = vsub.f32 %v2175, %v2051
        %v2178 = vsub.f32 %v2176, %v2052
        %s2179 = scalar_lea.vmem %s5, 192
        %v2180 = vld [vmem:[%s2179] sm:$0xff]
        %v2181 = vld [vmem:[%s2179 + $0x8] sm:$0xff]
        %v2182 = vld [vmem:[%s2179 + $0x10] sm:$0xff]
        %v2183 = vld [vmem:[%s2179 + $0x18] sm:$0xff]
        %v2185 = vsel %vm1771, %v2177, 0
        %v2188 = vsel %vm1771, %v2178, 0
        %2190 = vmatpush.msra.mxu0 0.0
        %2191 = vmatpush.msra.mxu0 0.0
        %2192 = vmatpush.msra.mxu0 0.0
        %2193 = vmatpush.msra.mxu0 0.0
        %2194 = vmatpush.msra.mxu0 0.0
        %2195 = vmatpush.msra.mxu0 0.0
        %2196 = vmatpush.msra.mxu0 0.0
        %2197 = vmatpush.msra.mxu0 0.0
        %2198 = vmatpush.msra.mxu0 0.0
        %2199 = vmatpush.msra.mxu0 0.0
        %2200 = vmatpush.msra.mxu0 0.0
        %2201 = vmatpush.msra.mxu0 0.0
        %2202 = vmatpush.msra.mxu0 %v2183
        %2203 = vmatpush.msra.mxu0 %v2182
        %2204 = vmatpush.msra.mxu0 %v2181
        %2205 = vmatpush.msra.mxu0 %v2180
        %2206 = vmatmul.f32.gmra.mxu0 %v2185
        %v2207 = vpop.f32.mrf.mxu0
        %v2208 = vadd.f32 0.0, %v2207
        %2209 = vmatmul.f32.gmra.mxu0 %v2188
        %v2210 = vpop.f32.mrf.mxu0
        %v2211 = vadd.f32 0.0, %v2210
        %2212 = vdwg.mxu0
        %v2213 = vadd.f32 %v2150, %v2208
        %v2214 = vadd.f32 %v2151, %v2211
        %2215 = vmatpush.msra.mxu0 0.0
        %2216 = vmatpush.msra.mxu0 0.0
        %2217 = vmatpush.msra.mxu0 0.0
        %2218 = vmatpush.msra.mxu0 0.0
        %2219 = vmatpush.msra.mxu0 0.0
        %2220 = vmatpush.msra.mxu0 0.0
        %2221 = vmatpush.msra.mxu0 0.0
        %2222 = vmatpush.msra.mxu0 0.0
        %2223 = vmatpush.msra.mxu0 0.0
        %2224 = vmatpush.msra.mxu0 0.0
        %2225 = vmatpush.msra.mxu0 0.0
        %2226 = vmatpush.msra.mxu0 0.0
        %2227 = vmatpush.msra.mxu0 0.0
        %2228 = vmatpush.msra.mxu0 0.0
        %2229 = vmatpush.msra.mxu0 %v2178
        %2230 = vmatpush.msra.mxu0 %v2177
        %2231 = vmatmul.f32.gmra.mxu0 %v1809
        %v2232 = vpop.f32.mrf.mxu0
        %v2233 = vadd.f32 0.0, %v2232
        %2234 = vmatmul.f32.gmra.mxu0 %v1812
        %v2235 = vpop.f32.mrf.mxu0
        %v2236 = vadd.f32 0.0, %v2235
        %2237 = vdwg.mxu0
        %v2238 = vmul.f32 %v2233, 2.0
        %v2239 = vmul.f32 %v2236, 2.0
        %v2240 = vsub.f32 %v2238, %v2114
        %v2241 = vsub.f32 %v2239, %v2115
        %s2242 = scalar_lea.vmem %s5, 224
        %v2243 = vld [vmem:[%s2242] sm:$0xff]
        %v2244 = vld [vmem:[%s2242 + $0x8] sm:$0xff]
        %v2245 = vld [vmem:[%s2242 + $0x10] sm:$0xff]
        %v2246 = vld [vmem:[%s2242 + $0x18] sm:$0xff]
        %v2248 = vsel %vm1771, %v2240, 0
        %v2251 = vsel %vm1771, %v2241, 0
        %2253 = vmatpush.msra.mxu0 0.0
        %2254 = vmatpush.msra.mxu0 0.0
        %2255 = vmatpush.msra.mxu0 0.0
        %2256 = vmatpush.msra.mxu0 0.0
        %2257 = vmatpush.msra.mxu0 0.0
        %2258 = vmatpush.msra.mxu0 0.0
        %2259 = vmatpush.msra.mxu0 0.0
        %2260 = vmatpush.msra.mxu0 0.0
        %2261 = vmatpush.msra.mxu0 0.0
        %2262 = vmatpush.msra.mxu0 0.0
        %2263 = vmatpush.msra.mxu0 0.0
        %2264 = vmatpush.msra.mxu0 0.0
        %2265 = vmatpush.msra.mxu0 %v2246
        %2266 = vmatpush.msra.mxu0 %v2245
        %2267 = vmatpush.msra.mxu0 %v2244
        %2268 = vmatpush.msra.mxu0 %v2243
        %2269 = vmatmul.f32.gmra.mxu0 %v2248
        %v2270 = vpop.f32.mrf.mxu0
        %v2271 = vadd.f32 0.0, %v2270
        %2272 = vmatmul.f32.gmra.mxu0 %v2251
        %v2273 = vpop.f32.mrf.mxu0
        %v2274 = vadd.f32 0.0, %v2273
        %2275 = vdwg.mxu0
        %v2276 = vadd.f32 %v2213, %v2271
        %v2277 = vadd.f32 %v2214, %v2274
        %2278 = vmatpush.msra.mxu0 0.0
        %2279 = vmatpush.msra.mxu0 0.0
        %2280 = vmatpush.msra.mxu0 0.0
        %2281 = vmatpush.msra.mxu0 0.0
        %2282 = vmatpush.msra.mxu0 0.0
        %2283 = vmatpush.msra.mxu0 0.0
        %2284 = vmatpush.msra.mxu0 0.0
        %2285 = vmatpush.msra.mxu0 0.0
        %2286 = vmatpush.msra.mxu0 0.0
        %2287 = vmatpush.msra.mxu0 0.0
        %2288 = vmatpush.msra.mxu0 0.0
        %2289 = vmatpush.msra.mxu0 0.0
        %2290 = vmatpush.msra.mxu0 0.0
        %2291 = vmatpush.msra.mxu0 0.0
        %2292 = vmatpush.msra.mxu0 %v2241
        %2293 = vmatpush.msra.mxu0 %v2240
        %2294 = vmatmul.f32.gmra.mxu0 %v1809
        %v2295 = vpop.f32.mrf.mxu0
        %v2296 = vadd.f32 0.0, %v2295
        %2297 = vmatmul.f32.gmra.mxu0 %v1812
        %v2298 = vpop.f32.mrf.mxu0
        %v2299 = vadd.f32 0.0, %v2298
        %2300 = vdwg.mxu0
        %v2301 = vmul.f32 %v2296, 2.0
        %v2302 = vmul.f32 %v2299, 2.0
        %v2303 = vsub.f32 %v2301, %v2177
        %v2304 = vsub.f32 %v2302, %v2178
        %s2305 = scalar_lea.vmem %s5, 256
        %v2306 = vld [vmem:[%s2305] sm:$0xff]
        %v2307 = vld [vmem:[%s2305 + $0x8] sm:$0xff]
        %v2308 = vld [vmem:[%s2305 + $0x10] sm:$0xff]
        %v2309 = vld [vmem:[%s2305 + $0x18] sm:$0xff]
        %v2311 = vsel %vm1771, %v2303, 0
        %v2314 = vsel %vm1771, %v2304, 0
        %2316 = vmatpush.msra.mxu0 0.0
        %2317 = vmatpush.msra.mxu0 0.0
        %2318 = vmatpush.msra.mxu0 0.0
        %2319 = vmatpush.msra.mxu0 0.0
        %2320 = vmatpush.msra.mxu0 0.0
        %2321 = vmatpush.msra.mxu0 0.0
        %2322 = vmatpush.msra.mxu0 0.0
        %2323 = vmatpush.msra.mxu0 0.0
        %2324 = vmatpush.msra.mxu0 0.0
        %2325 = vmatpush.msra.mxu0 0.0
        %2326 = vmatpush.msra.mxu0 0.0
        %2327 = vmatpush.msra.mxu0 0.0
        %2328 = vmatpush.msra.mxu0 %v2309
        %2329 = vmatpush.msra.mxu0 %v2308
        %2330 = vmatpush.msra.mxu0 %v2307
        %2331 = vmatpush.msra.mxu0 %v2306
        %2332 = vmatmul.f32.gmra.mxu0 %v2311
        %v2333 = vpop.f32.mrf.mxu0
        %v2334 = vadd.f32 0.0, %v2333
        %2335 = vmatmul.f32.gmra.mxu0 %v2314
        %v2336 = vpop.f32.mrf.mxu0
        %v2337 = vadd.f32 0.0, %v2336
        %2338 = vdwg.mxu0
        %v2339 = vadd.f32 %v2276, %v2334
        %v2340 = vadd.f32 %v2277, %v2337
        %2341 = vmatpush.msra.mxu0 0.0
        %2342 = vmatpush.msra.mxu0 0.0
        %2343 = vmatpush.msra.mxu0 0.0
        %2344 = vmatpush.msra.mxu0 0.0
        %2345 = vmatpush.msra.mxu0 0.0
        %2346 = vmatpush.msra.mxu0 0.0
        %2347 = vmatpush.msra.mxu0 0.0
        %2348 = vmatpush.msra.mxu0 0.0
        %2349 = vmatpush.msra.mxu0 0.0
        %2350 = vmatpush.msra.mxu0 0.0
        %2351 = vmatpush.msra.mxu0 0.0
        %2352 = vmatpush.msra.mxu0 0.0
        %2353 = vmatpush.msra.mxu0 0.0
        %2354 = vmatpush.msra.mxu0 0.0
        %2355 = vmatpush.msra.mxu0 %v2304
        %2356 = vmatpush.msra.mxu0 %v2303
        %2357 = vmatmul.f32.gmra.mxu0 %v1809
        %v2358 = vpop.f32.mrf.mxu0
        %v2359 = vadd.f32 0.0, %v2358
        %2360 = vmatmul.f32.gmra.mxu0 %v1812
        %v2361 = vpop.f32.mrf.mxu0
        %v2362 = vadd.f32 0.0, %v2361
        %2363 = vdwg.mxu0
        %v2364 = vmul.f32 %v2359, 2.0
        %v2365 = vmul.f32 %v2362, 2.0
        %v2366 = vsub.f32 %v2364, %v2240
        %v2367 = vsub.f32 %v2365, %v2241
        %s2368 = scalar_lea.vmem %s5, 288
        %v2369 = vld [vmem:[%s2368] sm:$0xff]
        %v2370 = vld [vmem:[%s2368 + $0x8] sm:$0xff]
        %v2371 = vld [vmem:[%s2368 + $0x10] sm:$0xff]
        %v2372 = vld [vmem:[%s2368 + $0x18] sm:$0xff]
        %v2374 = vsel %vm1771, %v2366, 0
        %v2377 = vsel %vm1771, %v2367, 0
        %2379 = vmatpush.msra.mxu0 0.0
        %2380 = vmatpush.msra.mxu0 0.0
        %2381 = vmatpush.msra.mxu0 0.0
        %2382 = vmatpush.msra.mxu0 0.0
        %2383 = vmatpush.msra.mxu0 0.0
        %2384 = vmatpush.msra.mxu0 0.0
        %2385 = vmatpush.msra.mxu0 0.0
        %2386 = vmatpush.msra.mxu0 0.0
        %2387 = vmatpush.msra.mxu0 0.0
        %2388 = vmatpush.msra.mxu0 0.0
        %2389 = vmatpush.msra.mxu0 0.0
        %2390 = vmatpush.msra.mxu0 0.0
        %2391 = vmatpush.msra.mxu0 %v2372
        %2392 = vmatpush.msra.mxu0 %v2371
        %2393 = vmatpush.msra.mxu0 %v2370
        %2394 = vmatpush.msra.mxu0 %v2369
        %2395 = vmatmul.f32.gmra.mxu0 %v2374
        %v2396 = vpop.f32.mrf.mxu0
        %v2397 = vadd.f32 0.0, %v2396
        %2398 = vmatmul.f32.gmra.mxu0 %v2377
        %v2399 = vpop.f32.mrf.mxu0
        %v2400 = vadd.f32 0.0, %v2399
        %2401 = vdwg.mxu0
        %v2402 = vadd.f32 %v2339, %v2397
        %v2403 = vadd.f32 %v2340, %v2400
        %v2404 = vld [vmem:[%s6] sm:$0x1]
        %v2406 = vperm.slane %v2404, 0
        %v2408 = vadd.f32 %v2402, %v2406
        %v2409 = vadd.f32 %v2403, %v2406
        %v2410 = vmax.f32 %v2408, 0.0
        %v2411 = vmax.f32 %v2409, 0.0
        %2412 = vst.msk [vmem:[#allocation3] sm:$0xff] %vm456, %v2410
        %2413 = vst.msk [vmem:[#allocation3 + $0x8] sm:$0xff] %vm456, %v2411
        %v2414 = vld [vmem:[#allocation3] ss:$4 sm:$0xf]
        %s2415 = scalar_lea.vmem [#allocation3], 1
        %v2416 = vld [vmem:[%s2415] ss:$4 sm:$0xf]
        %s2417 = scalar_lea.vmem [#allocation3], 2
        %v2418 = vld [vmem:[%s2417] ss:$4 sm:$0xf]
        %s2419 = scalar_lea.vmem [#allocation3], 3
        %v2420 = vld [vmem:[%s2419] ss:$4 sm:$0xf]
        %v2421 = vmax.f32 %v2414, %v2416
        %v2422 = vmax.f32 %v2418, %v2420
        %v2423 = vmax.f32 %v2421, %v2422
        %v2424 = vld [vmem:[%s8] sm:$0x3]
        %v2425 = vld [vmem:[%s7] sm:$0xff]
        %v2426 = vld [vmem:[%s7 + $0x8] sm:$0xff]
        %v2427 = vld [vmem:[%s7 + $0x10] sm:$0xff]
        %v2428 = vld [vmem:[%s7 + $0x18] sm:$0xff]
        %v2429 = vld [vmem:[%s7 + $0x20] sm:$0xff]
        %v2430 = vld [vmem:[%s7 + $0x28] sm:$0xff]
        %v2431 = vld [vmem:[%s7 + $0x30] sm:$0xff]
        %v2432 = vld [vmem:[%s7 + $0x38] sm:$0xff]
        %v2433 = vld [vmem:[%s7 + $0x40] sm:$0xff]
        %v2434 = vld [vmem:[%s7 + $0x48] sm:$0xff]
        %v2435 = vld [vmem:[%s7 + $0x50] sm:$0xff]
        %v2436 = vld [vmem:[%s7 + $0x58] sm:$0xff]
        %v2437 = vld [vmem:[%s7 + $0x60] sm:$0xff]
        %v2438 = vld [vmem:[%s7 + $0x68] sm:$0xff]
        %v2439 = vld [vmem:[%s7 + $0x70] sm:$0xff]
        %v2440 = vld [vmem:[%s7 + $0x78] sm:$0xff]
        %v2442 = vsel %vm456, %v2423, 0
        %2444 = vmatpush.msra.mxu0 0.0
        %2445 = vmatpush.msra.mxu0 0.0
        %2446 = vmatpush.msra.mxu0 0.0
        %2447 = vmatpush.msra.mxu0 0.0
        %2448 = vmatpush.msra.mxu0 0.0
        %2449 = vmatpush.msra.mxu0 0.0
        %2450 = vmatpush.msra.mxu0 0.0
        %2451 = vmatpush.msra.mxu0 0.0
        %2452 = vmatpush.msra.mxu0 %v2439
        %2453 = vmatpush.msra.mxu0 %v2437
        %2454 = vmatpush.msra.mxu0 %v2435
        %2455 = vmatpush.msra.mxu0 %v2433
        %2456 = vmatpush.msra.mxu0 %v2431
        %2457 = vmatpush.msra.mxu0 %v2429
        %2458 = vmatpush.msra.mxu0 %v2427
        %2459 = vmatpush.msra.mxu0 %v2425
        %2460 = vmatmul.f32.gmra.mxu0 %v2442
        %v2461 = vpop.f32.mrf.mxu0
        %v2462 = vadd.f32 0.0, %v2461
        %2463 = vdwg.mxu0
        %2464 = vmatpush.msra.mxu0 0.0
        %2465 = vmatpush.msra.mxu0 0.0
        %2466 = vmatpush.msra.mxu0 0.0
        %2467 = vmatpush.msra.mxu0 0.0
        %2468 = vmatpush.msra.mxu0 0.0
        %2469 = vmatpush.msra.mxu0 0.0
        %2470 = vmatpush.msra.mxu0 0.0
        %2471 = vmatpush.msra.mxu0 0.0
        %2472 = vmatpush.msra.mxu0 %v2440
        %2473 = vmatpush.msra.mxu0 %v2438
        %2474 = vmatpush.msra.mxu0 %v2436
        %2475 = vmatpush.msra.mxu0 %v2434
        %2476 = vmatpush.msra.mxu0 %v2432
        %2477 = vmatpush.msra.mxu0 %v2430
        %2478 = vmatpush.msra.mxu0 %v2428
        %2479 = vmatpush.msra.mxu0 %v2426
        %2480 = vmatmul.f32.gmra.mxu0 %v2442
        %v2481 = vpop.f32.mrf.mxu0
        %v2482 = vadd.f32 0.0, %v2481
        %2483 = vdwg.mxu0
        %v2486 = vrot.slane %v2482, 7
        %vm2487 = vcmask 1040384
        %v2488 = vsel %vm2487, %v2462, %v2486
        %v2490 = vadd.f32 %v2424, %v2488
        %s2491 = scalar_lea.vmem %s7, 128
        %v2492 = vld [vmem:[%s2491] sm:$0xff]
        %v2493 = vld [vmem:[%s2491 + $0x8] sm:$0xff]
        %v2494 = vld [vmem:[%s2491 + $0x10] sm:$0xff]
        %v2495 = vld [vmem:[%s2491 + $0x18] sm:$0xff]
        %v2496 = vld [vmem:[%s2491 + $0x20] sm:$0xff]
        %v2497 = vld [vmem:[%s2491 + $0x28] sm:$0xff]
        %v2498 = vld [vmem:[%s2491 + $0x30] sm:$0xff]
        %v2499 = vld [vmem:[%s2491 + $0x38] sm:$0xff]
        %v2500 = vld [vmem:[%s2491 + $0x40] sm:$0xff]
        %v2501 = vld [vmem:[%s2491 + $0x48] sm:$0xff]
        %v2502 = vld [vmem:[%s2491 + $0x50] sm:$0xff]
        %v2503 = vld [vmem:[%s2491 + $0x58] sm:$0xff]
        %v2504 = vld [vmem:[%s2491 + $0x60] sm:$0xff]
        %v2505 = vld [vmem:[%s2491 + $0x68] sm:$0xff]
        %v2506 = vld [vmem:[%s2491 + $0x70] sm:$0xff]
        %v2507 = vld [vmem:[%s2491 + $0x78] sm:$0xff]
        %v2508 = vrot.slane %v2423, 1
        %v2509 = vsel %vm456, %v2508, 0
        %2511 = vmatpush.msra.mxu0 0.0
        %2512 = vmatpush.msra.mxu0 0.0
        %2513 = vmatpush.msra.mxu0 0.0
        %2514 = vmatpush.msra.mxu0 0.0
        %2515 = vmatpush.msra.mxu0 0.0
        %2516 = vmatpush.msra.mxu0 0.0
        %2517 = vmatpush.msra.mxu0 0.0
        %2518 = vmatpush.msra.mxu0 0.0
        %2519 = vmatpush.msra.mxu0 %v2506
        %2520 = vmatpush.msra.mxu0 %v2504
        %2521 = vmatpush.msra.mxu0 %v2502
        %2522 = vmatpush.msra.mxu0 %v2500
        %2523 = vmatpush.msra.mxu0 %v2498
        %2524 = vmatpush.msra.mxu0 %v2496
        %2525 = vmatpush.msra.mxu0 %v2494
        %2526 = vmatpush.msra.mxu0 %v2492
        %2527 = vmatmul.f32.gmra.mxu0 %v2509
        %v2528 = vpop.f32.mrf.mxu0
        %v2529 = vadd.f32 0.0, %v2528
        %2530 = vdwg.mxu0
        %2531 = vmatpush.msra.mxu0 0.0
        %2532 = vmatpush.msra.mxu0 0.0
        %2533 = vmatpush.msra.mxu0 0.0
        %2534 = vmatpush.msra.mxu0 0.0
        %2535 = vmatpush.msra.mxu0 0.0
        %2536 = vmatpush.msra.mxu0 0.0
        %2537 = vmatpush.msra.mxu0 0.0
        %2538 = vmatpush.msra.mxu0 0.0
        %2539 = vmatpush.msra.mxu0 %v2507
        %2540 = vmatpush.msra.mxu0 %v2505
        %2541 = vmatpush.msra.mxu0 %v2503
        %2542 = vmatpush.msra.mxu0 %v2501
        %2543 = vmatpush.msra.mxu0 %v2499
        %2544 = vmatpush.msra.mxu0 %v2497
        %2545 = vmatpush.msra.mxu0 %v2495
        %2546 = vmatpush.msra.mxu0 %v2493
        %2547 = vmatmul.f32.gmra.mxu0 %v2509
        %v2548 = vpop.f32.mrf.mxu0
        %v2549 = vadd.f32 0.0, %v2548
        %2550 = vdwg.mxu0
        %v2553 = vrot.slane %v2549, 7
        %v2554 = vsel %vm2487, %v2529, %v2553
        %v2556 = vadd.f32 %v2490, %v2554
        %s2557 = scalar_lea.vmem %s7, 256
        %v2558 = vld [vmem:[%s2557] sm:$0xff]
        %v2559 = vld [vmem:[%s2557 + $0x8] sm:$0xff]
        %v2560 = vld [vmem:[%s2557 + $0x10] sm:$0xff]
        %v2561 = vld [vmem:[%s2557 + $0x18] sm:$0xff]
        %v2562 = vld [vmem:[%s2557 + $0x20] sm:$0xff]
        %v2563 = vld [vmem:[%s2557 + $0x28] sm:$0xff]
        %v2564 = vld [vmem:[%s2557 + $0x30] sm:$0xff]
        %v2565 = vld [vmem:[%s2557 + $0x38] sm:$0xff]
        %v2566 = vld [vmem:[%s2557 + $0x40] sm:$0xff]
        %v2567 = vld [vmem:[%s2557 + $0x48] sm:$0xff]
        %v2568 = vld [vmem:[%s2557 + $0x50] sm:$0xff]
        %v2569 = vld [vmem:[%s2557 + $0x58] sm:$0xff]
        %v2570 = vld [vmem:[%s2557 + $0x60] sm:$0xff]
        %v2571 = vld [vmem:[%s2557 + $0x68] sm:$0xff]
        %v2572 = vld [vmem:[%s2557 + $0x70] sm:$0xff]
        %v2573 = vld [vmem:[%s2557 + $0x78] sm:$0xff]
        %v2574 = vrot.slane %v2423, 2
        %v2575 = vsel %vm456, %v2574, 0
        %2577 = vmatpush.msra.mxu0 0.0
        %2578 = vmatpush.msra.mxu0 0.0
        %2579 = vmatpush.msra.mxu0 0.0
        %2580 = vmatpush.msra.mxu0 0.0
        %2581 = vmatpush.msra.mxu0 0.0
        %2582 = vmatpush.msra.mxu0 0.0
        %2583 = vmatpush.msra.mxu0 0.0
        %2584 = vmatpush.msra.mxu0 0.0
        %2585 = vmatpush.msra.mxu0 %v2572
        %2586 = vmatpush.msra.mxu0 %v2570
        %2587 = vmatpush.msra.mxu0 %v2568
        %2588 = vmatpush.msra.mxu0 %v2566
        %2589 = vmatpush.msra.mxu0 %v2564
        %2590 = vmatpush.msra.mxu0 %v2562
        %2591 = vmatpush.msra.mxu0 %v2560
        %2592 = vmatpush.msra.mxu0 %v2558
        %2593 = vmatmul.f32.gmra.mxu0 %v2575
        %v2594 = vpop.f32.mrf.mxu0
        %v2595 = vadd.f32 0.0, %v2594
        %2596 = vdwg.mxu0
        %2597 = vmatpush.msra.mxu0 0.0
        %2598 = vmatpush.msra.mxu0 0.0
        %2599 = vmatpush.msra.mxu0 0.0
        %2600 = vmatpush.msra.mxu0 0.0
        %2601 = vmatpush.msra.mxu0 0.0
        %2602 = vmatpush.msra.mxu0 0.0
        %2603 = vmatpush.msra.mxu0 0.0
        %2604 = vmatpush.msra.mxu0 0.0
        %2605 = vmatpush.msra.mxu0 %v2573
        %2606 = vmatpush.msra.mxu0 %v2571
        %2607 = vmatpush.msra.mxu0 %v2569
        %2608 = vmatpush.msra.mxu0 %v2567
        %2609 = vmatpush.msra.mxu0 %v2565
        %2610 = vmatpush.msra.mxu0 %v2563
        %2611 = vmatpush.msra.mxu0 %v2561
        %2612 = vmatpush.msra.mxu0 %v2559
        %2613 = vmatmul.f32.gmra.mxu0 %v2575
        %v2614 = vpop.f32.mrf.mxu0
        %v2615 = vadd.f32 0.0, %v2614
        %2616 = vdwg.mxu0
        %v2619 = vrot.slane %v2615, 7
        %v2620 = vsel %vm2487, %v2595, %v2619
        %v2622 = vadd.f32 %v2556, %v2620
        %s2623 = scalar_lea.vmem %s7, 384
        %v2624 = vld [vmem:[%s2623] sm:$0xff]
        %v2625 = vld [vmem:[%s2623 + $0x8] sm:$0xff]
        %v2626 = vld [vmem:[%s2623 + $0x10] sm:$0xff]
        %v2627 = vld [vmem:[%s2623 + $0x18] sm:$0xff]
        %v2628 = vld [vmem:[%s2623 + $0x20] sm:$0xff]
        %v2629 = vld [vmem:[%s2623 + $0x28] sm:$0xff]
        %v2630 = vld [vmem:[%s2623 + $0x30] sm:$0xff]
        %v2631 = vld [vmem:[%s2623 + $0x38] sm:$0xff]
        %v2632 = vld [vmem:[%s2623 + $0x40] sm:$0xff]
        %v2633 = vld [vmem:[%s2623 + $0x48] sm:$0xff]
        %v2634 = vld [vmem:[%s2623 + $0x50] sm:$0xff]
        %v2635 = vld [vmem:[%s2623 + $0x58] sm:$0xff]
        %v2636 = vld [vmem:[%s2623 + $0x60] sm:$0xff]
        %v2637 = vld [vmem:[%s2623 + $0x68] sm:$0xff]
        %v2638 = vld [vmem:[%s2623 + $0x70] sm:$0xff]
        %v2639 = vld [vmem:[%s2623 + $0x78] sm:$0xff]
        %v2640 = vrot.slane %v2423, 3
        %v2641 = vsel %vm456, %v2640, 0
        %2643 = vmatpush.msra.mxu0 0.0
        %2644 = vmatpush.msra.mxu0 0.0
        %2645 = vmatpush.msra.mxu0 0.0
        %2646 = vmatpush.msra.mxu0 0.0
        %2647 = vmatpush.msra.mxu0 0.0
        %2648 = vmatpush.msra.mxu0 0.0
        %2649 = vmatpush.msra.mxu0 0.0
        %2650 = vmatpush.msra.mxu0 0.0
        %2651 = vmatpush.msra.mxu0 %v2638
        %2652 = vmatpush.msra.mxu0 %v2636
        %2653 = vmatpush.msra.mxu0 %v2634
        %2654 = vmatpush.msra.mxu0 %v2632
        %2655 = vmatpush.msra.mxu0 %v2630
        %2656 = vmatpush.msra.mxu0 %v2628
        %2657 = vmatpush.msra.mxu0 %v2626
        %2658 = vmatpush.msra.mxu0 %v2624
        %2659 = vmatmul.f32.gmra.mxu0 %v2641
        %v2660 = vpop.f32.mrf.mxu0
        %v2661 = vadd.f32 0.0, %v2660
        %2662 = vdwg.mxu0
        %2663 = vmatpush.msra.mxu0 0.0
        %2664 = vmatpush.msra.mxu0 0.0
        %2665 = vmatpush.msra.mxu0 0.0
        %2666 = vmatpush.msra.mxu0 0.0
        %2667 = vmatpush.msra.mxu0 0.0
        %2668 = vmatpush.msra.mxu0 0.0
        %2669 = vmatpush.msra.mxu0 0.0
        %2670 = vmatpush.msra.mxu0 0.0
        %2671 = vmatpush.msra.mxu0 %v2639
        %2672 = vmatpush.msra.mxu0 %v2637
        %2673 = vmatpush.msra.mxu0 %v2635
        %2674 = vmatpush.msra.mxu0 %v2633
        %2675 = vmatpush.msra.mxu0 %v2631
        %2676 = vmatpush.msra.mxu0 %v2629
        %2677 = vmatpush.msra.mxu0 %v2627
        %2678 = vmatpush.msra.mxu0 %v2625
        %2679 = vmatmul.f32.gmra.mxu0 %v2641
        %v2680 = vpop.f32.mrf.mxu0
        %v2681 = vadd.f32 0.0, %v2680
        %2682 = vdwg.mxu0
        %v2685 = vrot.slane %v2681, 7
        %v2686 = vsel %vm2487, %v2661, %v2685
        %v2688 = vadd.f32 %v2622, %v2686
        %v2689 = vld [vmem:[%s9] sm:$0x3]
        %v2690 = vmul.f32 %v2688, %v2689
        %v2691 = vld [vmem:[%s10] sm:$0x3]
        %v2692 = vadd.f32 %v2690, %v2691
        %v2693 = vmax.f32 %v2692, 0.0
        %v2694 = vld [vmem:[%s11] sm:$0xff]
        %v2695 = vld [vmem:[%s11 + $0x8] sm:$0xff]
        %v2696 = vld [vmem:[%s11 + $0x10] sm:$0xff]
        %v2697 = vld [vmem:[%s11 + $0x18] sm:$0xff]
        %v2698 = vld [vmem:[%s11 + $0x20] sm:$0xff]
        %v2699 = vld [vmem:[%s11 + $0x28] sm:$0xff]
        %v2700 = vld [vmem:[%s11 + $0x30] sm:$0xff]
        %v2701 = vld [vmem:[%s11 + $0x38] sm:$0xff]
        %v2702 = vld [vmem:[%s11 + $0x40] sm:$0xff]
        %v2703 = vld [vmem:[%s11 + $0x48] sm:$0xff]
        %v2704 = vld [vmem:[%s11 + $0x50] sm:$0xff]
        %v2705 = vld [vmem:[%s11 + $0x58] sm:$0xff]
        %v2706 = vld [vmem:[%s11 + $0x60] sm:$0xff]
        %v2707 = vld [vmem:[%s11 + $0x68] sm:$0xff]
        %v2708 = vld [vmem:[%s11 + $0x70] sm:$0xff]
        %v2709 = vld [vmem:[%s11 + $0x78] sm:$0xff]
        %v2710 = vld [vmem:[%s11 + $0x80] sm:$0xff]
        %v2711 = vld [vmem:[%s11 + $0x88] sm:$0xff]
        %v2712 = vld [vmem:[%s11 + $0x90] sm:$0xff]
        %v2713 = vld [vmem:[%s11 + $0x98] sm:$0xff]
        %v2714 = vld [vmem:[%s11 + $0xa0] sm:$0xff]
        %v2715 = vld [vmem:[%s11 + $0xa8] sm:$0xff]
        %v2716 = vld [vmem:[%s11 + $0xb0] sm:$0xff]
        %v2717 = vld [vmem:[%s11 + $0xb8] sm:$0xff]
        %v2718 = vld [vmem:[%s11 + $0xc0] sm:$0xff]
        %v2719 = vld [vmem:[%s12] sm:$0x1]
        %v2721 = vperm.slane %v2693, 0
        %v2722 = vperm.slane %v2693, 1
        %vm2724 = vcmask 588800
        %v2725 = vsel %vm2724, %v2722, 0
        %2727 = vmatpush.msra.mxu0 %v2709
        %2728 = vmatpush.msra.mxu0 %v2708
        %2729 = vmatpush.msra.mxu0 %v2707
        %2730 = vmatpush.msra.mxu0 %v2706
        %2731 = vmatpush.msra.mxu0 %v2705
        %2732 = vmatpush.msra.mxu0 %v2704
        %2733 = vmatpush.msra.mxu0 %v2703
        %2734 = vmatpush.msra.mxu0 %v2702
        %2735 = vmatpush.msra.mxu0 %v2701
        %2736 = vmatpush.msra.mxu0 %v2700
        %2737 = vmatpush.msra.mxu0 %v2699
        %2738 = vmatpush.msra.mxu0 %v2698
        %2739 = vmatpush.msra.mxu0 %v2697
        %2740 = vmatpush.msra.mxu0 %v2696
        %2741 = vmatpush.msra.mxu0 %v2695
        %2742 = vmatpush.msra.mxu0 %v2694
        %2743 = vmatmul.f32.gmra.mxu0 %v2721
        %v2744 = vpop.f32.mrf.mxu0
        %v2745 = vadd.f32 %v2719, %v2744
        %2746 = vdwg.mxu0
        %2747 = vmatpush.msra.mxu0 0.0
        %2748 = vmatpush.msra.mxu0 0.0
        %2749 = vmatpush.msra.mxu0 0.0
        %2750 = vmatpush.msra.mxu0 0.0
        %2751 = vmatpush.msra.mxu0 0.0
        %2752 = vmatpush.msra.mxu0 0.0
        %2753 = vmatpush.msra.mxu0 0.0
        %2754 = vmatpush.msra.mxu0 %v2718
        %2755 = vmatpush.msra.mxu0 %v2717
        %2756 = vmatpush.msra.mxu0 %v2716
        %2757 = vmatpush.msra.mxu0 %v2715
        %2758 = vmatpush.msra.mxu0 %v2714
        %2759 = vmatpush.msra.mxu0 %v2713
        %2760 = vmatpush.msra.mxu0 %v2712
        %2761 = vmatpush.msra.mxu0 %v2711
        %2762 = vmatpush.msra.mxu0 %v2710
        %2763 = vmatmul.f32.gmra.mxu0 %v2725
        %v2764 = vpop.f32.mrf.mxu0
        %v2765 = vadd.f32 %v2745, %v2764
        %2766 = vdwg.mxu0
        %vm2767 = vcmask 40960
        %v2768 = vsel %vm2767, %v2765, -inf
        %2769 = vmax.xlane.f32.xlu0 %v2768
        %v2770 = vpop.xlane.xlu0 %2769
        %v2771 = vsub.f32 %v2765, %v2770
        %v2772 = vmul.f32 %v2771, 1.442695
        %v2773 = vpow.pop %v2772
        %v2774 = vsel %vm2767, %v2773, 0.0
        %2775 = vadd.xlane.f32.xlu0 %v2774
        %v2776 = vpop.xlane.xlu0 %2775
        %v2777 = vlog2.pop %v2776
        %v2778 = vmul.f32 %v2777, 0.6931472
        %v2779 = vsub.f32 %v2771, %v2778
        %2780 = vst.msk [vmem:[%s432] sm:$0x1] %vm2767, %v2779
        %s2781 = sand.u32 %s313, 1
        %s2782 = scalar_lea.sflag [#allocation5], %s2781
        %s2783 = sand.u32 %s313, 1
        %s2784 = scalar_lea.vmem [#allocation4], %s2783
        // Predicated region
        $region73: #{net_tgcn_forward.1} parent=71 // pred_check
          %p2785 = pneg %p323
        $region74: #{net_tgcn_forward.1} parent=71 // pred_check_branch
          %2787 = sbr.rel (%p2785) target = $region76
        $region75: #{net_tgcn_forward.1} parent=71 // pred_region
          %2789 = vsyncadd %s2782, 0
          %s2790 = scalar_lea.hbm %s13, %s27
          %s2792 = sshll.u32 %s2784, 4
          %s2793 = int_to_ptr.vmem [resolvable:$true] %s2792
          %s2794 = sshll.u32 %s2790, 4
          %s2795 = int_to_ptr.hbm [resolvable:$true] %s2794
          %2797 = dma.vmem_to_hbm [thread:$0]  %s2793, 16, %s2795, %s2782
        $region76: #{net_tgcn_forward.1} parent=71 // pred_fallthru
          _
      $region72: #{net_tgcn_forward.1} parent=5 // pred_fallthru
        _
      %p2798 = scmp.le.s32.totalorder 2, %s22
      // Predicated region
      $region77: #{net_tgcn_forward.1} parent=5 // pred_check
        %p2799 = pneg %p2798
      $region78: #{net_tgcn_forward.1} parent=5 // pred_check_branch
        %2801 = sbr.rel (%p2799) target = $region80
      $region79: #{net_tgcn_forward.1} parent=5 // pred_region
        %s2802 = ssub.s32 %s22, 2
        // Predicated region
        $region81: #{net_tgcn_forward.1} parent=79 // pred_check
          %p2803 = pneg %p329
        $region82: #{net_tgcn_forward.1} parent=79 // pred_check_branch
          %2805 = sbr.rel (%p2803) target = $region84
        $region83: #{net_tgcn_forward.1} parent=79 // pred_region
          %s2806 = sand.u32 %s314, 1
          %s2807 = scalar_lea.sflag [#allocation5], %s2806
          %s2808 = sand.u32 %s314, 1
          %s2809 = scalar_lea.vmem [#allocation4], %s2808
          %2811 = dma.done %s2807, 16
        $region84: #{net_tgcn_forward.1} parent=79 // pred_fallthru
          _
      $region80: #{net_tgcn_forward.1} parent=5 // pred_fallthru
        _
    $region6: #{net_tgcn_forward.1} parent=1 // loop_footer
      %s26 = sadd.s32 1, %s22
    $region7: #{net_tgcn_forward.1} parent=1 // loop_footer_branch
      %21 = sbr.rel target = $region3
    $region8: #{net_tgcn_forward.1} parent=1 // loop_exit
      _
    %2812 = vsyncpa [#allocation5], 1
    %s2813 = scalar_lea.sflag [#allocation5], 1
    %2814 = vsyncpa %s2813, 1

</llo_original>
